<compile_context>
chip_gen: v7x
topology: tpu7x:2x2x1
jax: 0.10.0
libtpu: 0.0.40
codegen_flags: <defaults>
</compile_context>

<pallas_src>
import jax
import jax.numpy as jnp
from jax.experimental import pallas as pl
from jax.experimental.pallas import tpu as pltpu

EPS = 1e-5
HIDDEN = (128, 256, 256, 64)
LANE = 128


def _round_up(n, m):
    return (n + m - 1) // m * m


def _bn_train_fused(h, gamma, beta, inv_n):
    """torch BatchNorm1d (training): batch mean, biased variance, eps=1e-5.
    Single pass over h: stats from sum / sum-of-squares, gamma/beta folded into
    one scale/shift FMA.  All f32."""
    s1 = jnp.sum(h, axis=0, keepdims=True)
    s2 = jnp.sum(h * h, axis=0, keepdims=True)
    mean = s1 * inv_n
    var = jnp.maximum(s2 * inv_n - mean * mean, 0.0)   # guard tiny negative rounding
    scale = jax.lax.rsqrt(var + EPS) * gamma            # rsqrt -> EUP slot
    shift = beta - mean * scale
    return h * scale + shift


def nn5_kernel(x_ref,
               w1_ref, b1_ref, g1_ref, be1_ref,
               w2_ref, b2_ref, g2_ref, be2_ref,
               w3_ref, b3_ref, g3_ref, be3_ref,
               w4_ref, b4_ref, g4_ref, be4_ref,
               w5_ref, b5_ref,
               o_ref):
    inv_n = jnp.float32(1.0 / x_ref.shape[0])

    def layer(h_f32, w_ref, b_ref, g_ref, be_ref):
        # bf16 MXU operands, f32 accumulate; bias/ReLU/BN in f32.
        h = jnp.dot(h_f32.astype(jnp.bfloat16), w_ref[...],
                    preferred_element_type=jnp.float32) + b_ref[...]
        h = jnp.maximum(h, 0.0)
        return _bn_train_fused(h, g_ref[...], be_ref[...], inv_n)

    h = layer(x_ref[...], w1_ref, b1_ref, g1_ref, be1_ref)   # fc1 -> relu -> bn1
    h = layer(h, w2_ref, b2_ref, g2_ref, be2_ref)             # fc2 -> relu -> bn2
    h = layer(h, w3_ref, b3_ref, g3_ref, be3_ref)             # fc3 -> relu -> bn3
    h = layer(h, w4_ref, b4_ref, g4_ref, be4_ref)             # fc4 -> relu -> bn4 (padded to 128)

    # fc5 (no activation / bn) -- lane-dense (padded) output
    out = jnp.dot(h.astype(jnp.bfloat16), w5_ref[...],
                  preferred_element_type=jnp.float32) + b5_ref[...]
    o_ref[...] = out.astype(o_ref.dtype)


def init_params(key, d_in, d_out):
    """Deterministic init. Linear weights ~ U(-1/sqrt(fan_in), 1/sqrt(fan_in)),
    BatchNorm gamma=1, beta=0 (fresh torch module). All f32."""
    dims = (d_in,) + HIDDEN + (d_out,)
    params = []
    for i in range(5):
        fan_in, fan_out = dims[i], dims[i + 1]
        key, kw, kb = jax.random.split(key, 3)
        bound = 1.0 / jnp.sqrt(jnp.float32(fan_in))
        w = jax.random.uniform(kw, (fan_in, fan_out), jnp.float32, -bound, bound)
        b = jax.random.uniform(kb, (1, fan_out), jnp.float32, -bound, bound)
        params.append((w, b))
    bns = []
    for h in HIDDEN:
        gamma = jnp.ones((1, h), jnp.float32)
        beta = jnp.zeros((1, h), jnp.float32)
        bns.append((gamma, beta))
    return params, bns


def prepare_params(params, bns):
    """One-time padding + bf16 weight cast, hoisted out of the per-call path.

    Returns (flat_args, d_out, d_out_padded):
      * hidden4 zero-padded 64 -> 128 (w4 cols, b4, gamma4, beta4; w5 rows),
      * output dim zero-padded to a multiple of 128 lanes (w5 cols, b5),
      * matmul weights cast to bf16; biases / gamma / beta kept f32.
    """
    (w1, b1), (w2, b2), (w3, b3), (w4, b4), (w5, b5) = params
    (g1, be1), (g2, be2), (g3, be3), (g4, be4) = bns

    d_out = w5.shape[1]
    d_out_p = _round_up(d_out, LANE)
    h4 = w4.shape[1]
    h4_p = _round_up(h4, LANE)

    # Pad the 64-wide hidden layer to 128 lanes. Padded gamma/beta are 0 and padded
    # w5 rows are 0, so padded columns are exactly 0 after ReLU+BN and do not leak.
    if h4_p != h4:
        w4 = jnp.pad(w4, ((0, 0), (0, h4_p - h4)))
        b4 = jnp.pad(b4, ((0, 0), (0, h4_p - h4)))
        g4 = jnp.pad(g4, ((0, 0), (0, h4_p - h4)))
        be4 = jnp.pad(be4, ((0, 0), (0, h4_p - h4)))
        w5 = jnp.pad(w5, ((0, h4_p - h4), (0, 0)))
    # Lane-dense output: unmasked stores inside the kernel, slice afterwards.
    if d_out_p != d_out:
        w5 = jnp.pad(w5, ((0, 0), (0, d_out_p - d_out)))
        b5 = jnp.pad(b5, ((0, 0), (0, d_out_p - d_out)))

    bf16 = jnp.bfloat16
    flat = (w1.astype(bf16), b1, g1, be1,
            w2.astype(bf16), b2, g2, be2,
            w3.astype(bf16), b3, g3, be3,
            w4.astype(bf16), b4, g4, be4,
            w5.astype(bf16), b5)
    return flat, d_out, d_out_p


def nn5_forward(x, prepared):
    """Forward pass.

    x: (B, d_in)      -> equivalent to one torch forward (grid of 1), or
       (G, B, d_in)   -> G independent micro-batches (BN stats per micro-batch),
                         pipelined and megacore-parallel over G.
    """
    flat, d_out, d_out_p = prepared
    squeeze = (x.ndim == 2)
    if squeeze:
        x = x[None]
    G, B, d_in = x.shape

    x_spec = pl.BlockSpec((None, B, d_in), lambda g: (g, 0, 0))
    # Constant index_map => each weight/bias block is DMA'd once and stays VMEM-resident
    # across the grid while x/out blocks are auto-pipelined.
    w_specs = [pl.BlockSpec(a.shape, lambda g: (0, 0)) for a in flat]
    out_spec = pl.BlockSpec((None, B, d_out_p), lambda g: (g, 0, 0))

    out = pl.pallas_call(
        nn5_kernel,
        grid=(G,),
        in_specs=[x_spec] + w_specs,
        out_specs=out_spec,
        out_shape=jax.ShapeDtypeStruct((G, B, d_out_p), jnp.float32),
        compiler_params=pltpu.CompilerParams(
            dimension_semantics=("parallel",)),
    )(x, *flat)

    out = out[..., :d_out]
    return out[0] if squeeze else out


def nn5_reference(x, params, bns):
    """Pure-JAX f32 reference (two-pass BN) for a sanity check."""
    def bn(h, gamma, beta):
        mean = jnp.mean(h, axis=0, keepdims=True)
        var = jnp.mean((h - mean) ** 2, axis=0, keepdims=True)
        return (h - mean) * jax.lax.rsqrt(var + EPS) * gamma + beta

    (w1, b1), (w2, b2), (w3, b3), (w4, b4), (w5, b5) = params
    (g1, be1), (g2, be2), (g3, be3), (g4, be4) = bns
    h = bn(jnp.maximum(x @ w1 + b1, 0.0), g1, be1)
    h = bn(jnp.maximum(h @ w2 + b2, 0.0), g2, be2)
    h = bn(jnp.maximum(h @ w3 + b3, 0.0), g3, be3)
    h = bn(jnp.maximum(h @ w4 + b4, 0.0), g4, be4)
    return h @ w5 + b5


if __name__ == "__main__":
    key = jax.random.PRNGKey(0)
    k_x, k_p = jax.random.split(key)

    # d_in/d_out match typical train_x/train_y last dims; B=256 fills the MXU M dim
    # on all generations while the whole problem still easily fits VMEM.
    B, D_IN, D_OUT = 256, 16, 4
    x = jax.random.normal(k_x, (B, D_IN), jnp.float32)
    params, bns = init_params(k_p, D_IN, D_OUT)
    prepared = prepare_params(params, bns)   # one-time pad + bf16 cast (hoisted)

    out = jax.block_until_ready(nn5_forward(x, prepared))

    ref = nn5_reference(x, params, bns)      # f32 reference
    assert out.shape == (B, D_OUT)
    # bf16 MXU operands vs f32 reference -> tolerance loosened deliberately.
    assert jnp.allclose(out, ref, atol=5e-2, rtol=5e-2), (
        "mismatch vs JAX reference: max abs diff "
        f"{float(jnp.max(jnp.abs(out - ref)))}")

    print("KERNEL_OK")
</pallas_src>

<mosaic_0001>
module attributes {stable_mosaic.version = 11 : i64} {
  func.func @nn5_kernel(%arg0: i32, %arg1: memref<1x256x16xf32, #tpu.memory_space<vmem>>, %arg2: memref<16x128xbf16, #tpu.memory_space<vmem>>, %arg3: memref<1x128xf32, #tpu.memory_space<vmem>>, %arg4: memref<1x128xf32, #tpu.memory_space<vmem>>, %arg5: memref<1x128xf32, #tpu.memory_space<vmem>>, %arg6: memref<128x256xbf16, #tpu.memory_space<vmem>>, %arg7: memref<1x256xf32, #tpu.memory_space<vmem>>, %arg8: memref<1x256xf32, #tpu.memory_space<vmem>>, %arg9: memref<1x256xf32, #tpu.memory_space<vmem>>, %arg10: memref<256x256xbf16, #tpu.memory_space<vmem>>, %arg11: memref<1x256xf32, #tpu.memory_space<vmem>>, %arg12: memref<1x256xf32, #tpu.memory_space<vmem>>, %arg13: memref<1x256xf32, #tpu.memory_space<vmem>>, %arg14: memref<256x128xbf16, #tpu.memory_space<vmem>>, %arg15: memref<1x128xf32, #tpu.memory_space<vmem>>, %arg16: memref<1x128xf32, #tpu.memory_space<vmem>>, %arg17: memref<1x128xf32, #tpu.memory_space<vmem>>, %arg18: memref<128x128xbf16, #tpu.memory_space<vmem>>, %arg19: memref<1x128xf32, #tpu.memory_space<vmem>>, %arg20: memref<1x256x128xf32, #tpu.memory_space<vmem>>) attributes {dimension_semantics = [#tpu.dimension_semantics<parallel>], iteration_bounds = array<i64: 1>, scalar_prefetch = 0 : i64, scratch_operands = 0 : i64, tpu.core_type = #tpu.core_type<tc>, window_params = [{transform_indices = @transform_0, window_bounds = array<i64: 1, 256, 16>}, {pipeline_mode = #tpu.pipeline_mode<synchronous>, transform_indices = @transform_1, window_bounds = array<i64: 16, 128>}, {pipeline_mode = #tpu.pipeline_mode<synchronous>, transform_indices = @transform_2, window_bounds = array<i64: 1, 128>}, {pipeline_mode = #tpu.pipeline_mode<synchronous>, transform_indices = @transform_3, window_bounds = array<i64: 1, 128>}, {pipeline_mode = #tpu.pipeline_mode<synchronous>, transform_indices = @transform_4, window_bounds = array<i64: 1, 128>}, {pipeline_mode = #tpu.pipeline_mode<synchronous>, transform_indices = @transform_5, window_bounds = array<i64: 128, 256>}, {pipeline_mode = #tpu.pipeline_mode<synchronous>, transform_indices = @transform_6, window_bounds = array<i64: 1, 256>}, {pipeline_mode = #tpu.pipeline_mode<synchronous>, transform_indices = @transform_7, window_bounds = array<i64: 1, 256>}, {pipeline_mode = #tpu.pipeline_mode<synchronous>, transform_indices = @transform_8, window_bounds = array<i64: 1, 256>}, {pipeline_mode = #tpu.pipeline_mode<synchronous>, transform_indices = @transform_9, window_bounds = array<i64: 256, 256>}, {pipeline_mode = #tpu.pipeline_mode<synchronous>, transform_indices = @transform_10, window_bounds = array<i64: 1, 256>}, {pipeline_mode = #tpu.pipeline_mode<synchronous>, transform_indices = @transform_11, window_bounds = array<i64: 1, 256>}, {pipeline_mode = #tpu.pipeline_mode<synchronous>, transform_indices = @transform_12, window_bounds = array<i64: 1, 256>}, {pipeline_mode = #tpu.pipeline_mode<synchronous>, transform_indices = @transform_13, window_bounds = array<i64: 256, 128>}, {pipeline_mode = #tpu.pipeline_mode<synchronous>, transform_indices = @transform_14, window_bounds = array<i64: 1, 128>}, {pipeline_mode = #tpu.pipeline_mode<synchronous>, transform_indices = @transform_15, window_bounds = array<i64: 1, 128>}, {pipeline_mode = #tpu.pipeline_mode<synchronous>, transform_indices = @transform_16, window_bounds = array<i64: 1, 128>}, {pipeline_mode = #tpu.pipeline_mode<synchronous>, transform_indices = @transform_17, window_bounds = array<i64: 128, 128>}, {pipeline_mode = #tpu.pipeline_mode<synchronous>, transform_indices = @transform_18, window_bounds = array<i64: 1, 128>}, {transform_indices = @transform_19, window_bounds = array<i64: 1, 256, 128>}]} {
    %c0 = arith.constant 0 : index
    %c0_0 = arith.constant 0 : index
    %c0_1 = arith.constant 0 : index
    %0 = vector.load %arg1[%c0, %c0_0, %c0_1] : memref<1x256x16xf32, #tpu.memory_space<vmem>>, vector<1x256x16xf32>
    %1 = vector.shape_cast %0 : vector<1x256x16xf32> to vector<256x16xf32>
    %2 = arith.truncf %1 : vector<256x16xf32> to vector<256x16xbf16>
    %c0_2 = arith.constant 0 : index
    %c0_3 = arith.constant 0 : index
    %3 = vector.load %arg2[%c0_2, %c0_3] : memref<16x128xbf16, #tpu.memory_space<vmem>>, vector<16x128xbf16>
    %cst = arith.constant dense<0.000000e+00> : vector<256x128xf32>
    %4 = tpu.matmul %2, %3, %cst {dimension_numbers = #tpu.dot_dimension_numbers<[1], [0], [0], [1], [0, 0, 1, 1], [], []>} : vector<256x16xbf16>, vector<16x128xbf16>, vector<256x128xf32> -> vector<256x128xf32>
    %c0_4 = arith.constant 0 : index
    %c0_5 = arith.constant 0 : index
    %5 = vector.load %arg3[%c0_4, %c0_5] : memref<1x128xf32, #tpu.memory_space<vmem>>, vector<1x128xf32>
    %6 = vector.broadcast %5 : vector<1x128xf32> to vector<256x128xf32>
    %7 = arith.addf %4, %6 : vector<256x128xf32>
    %cst_6 = arith.constant 0.000000e+00 : f32
    %8 = vector.broadcast %cst_6 : f32 to vector<256x128xf32>
    %9 = arith.maximumf %7, %8 : vector<256x128xf32>
    %c0_7 = arith.constant 0 : index
    %c0_8 = arith.constant 0 : index
    %10 = vector.load %arg4[%c0_7, %c0_8] : memref<1x128xf32, #tpu.memory_space<vmem>>, vector<1x128xf32>
    %c0_9 = arith.constant 0 : index
    %c0_10 = arith.constant 0 : index
    %11 = vector.load %arg5[%c0_9, %c0_10] : memref<1x128xf32, #tpu.memory_space<vmem>>, vector<1x128xf32>
    %cst_11 = arith.constant dense<0.000000e+00> : vector<128xf32>
    %12 = vector.multi_reduction <add>, %9, %cst_11 [0] : vector<256x128xf32> to vector<128xf32>
    %13 = vector.shape_cast %12 : vector<128xf32> to vector<1x128xf32>
    %14 = arith.mulf %9, %9 : vector<256x128xf32>
    %cst_12 = arith.constant dense<0.000000e+00> : vector<128xf32>
    %15 = vector.multi_reduction <add>, %14, %cst_12 [0] : vector<256x128xf32> to vector<128xf32>
    %16 = vector.shape_cast %15 : vector<128xf32> to vector<1x128xf32>
    %cst_13 = arith.constant 3.906250e-03 : f32
    %17 = vector.broadcast %cst_13 : f32 to vector<1x128xf32>
    %18 = arith.mulf %13, %17 : vector<1x128xf32>
    %cst_14 = arith.constant 3.906250e-03 : f32
    %19 = vector.broadcast %cst_14 : f32 to vector<1x128xf32>
    %20 = arith.mulf %16, %19 : vector<1x128xf32>
    %21 = arith.mulf %18, %18 : vector<1x128xf32>
    %22 = arith.subf %20, %21 : vector<1x128xf32>
    %cst_15 = arith.constant 0.000000e+00 : f32
    %23 = vector.broadcast %cst_15 : f32 to vector<1x128xf32>
    %24 = arith.maximumf %22, %23 : vector<1x128xf32>
    %cst_16 = arith.constant 9.99999974E-6 : f32
    %25 = vector.broadcast %cst_16 : f32 to vector<1x128xf32>
    %26 = arith.addf %24, %25 : vector<1x128xf32>
    %27 = math.rsqrt %26 : vector<1x128xf32>
    %28 = arith.mulf %27, %10 : vector<1x128xf32>
    %29 = arith.mulf %18, %28 : vector<1x128xf32>
    %30 = arith.subf %11, %29 : vector<1x128xf32>
    %31 = vector.broadcast %28 : vector<1x128xf32> to vector<256x128xf32>
    %32 = arith.mulf %9, %31 : vector<256x128xf32>
    %33 = vector.broadcast %30 : vector<1x128xf32> to vector<256x128xf32>
    %34 = arith.addf %32, %33 : vector<256x128xf32>
    %35 = arith.truncf %34 : vector<256x128xf32> to vector<256x128xbf16>
    %c0_17 = arith.constant 0 : index
    %c0_18 = arith.constant 0 : index
    %36 = vector.load %arg6[%c0_17, %c0_18] : memref<128x256xbf16, #tpu.memory_space<vmem>>, vector<128x256xbf16>
    %cst_19 = arith.constant dense<0.000000e+00> : vector<256x256xf32>
    %37 = tpu.matmul %35, %36, %cst_19 {dimension_numbers = #tpu.dot_dimension_numbers<[1], [0], [0], [1], [0, 0, 1, 1], [], []>} : vector<256x128xbf16>, vector<128x256xbf16>, vector<256x256xf32> -> vector<256x256xf32>
    %c0_20 = arith.constant 0 : index
    %c0_21 = arith.constant 0 : index
    %38 = vector.load %arg7[%c0_20, %c0_21] : memref<1x256xf32, #tpu.memory_space<vmem>>, vector<1x256xf32>
    %39 = vector.broadcast %38 : vector<1x256xf32> to vector<256x256xf32>
    %40 = arith.addf %37, %39 : vector<256x256xf32>
    %cst_22 = arith.constant 0.000000e+00 : f32
    %41 = vector.broadcast %cst_22 : f32 to vector<256x256xf32>
    %42 = arith.maximumf %40, %41 : vector<256x256xf32>
    %c0_23 = arith.constant 0 : index
    %c0_24 = arith.constant 0 : index
    %43 = vector.load %arg8[%c0_23, %c0_24] : memref<1x256xf32, #tpu.memory_space<vmem>>, vector<1x256xf32>
    %c0_25 = arith.constant 0 : index
    %c0_26 = arith.constant 0 : index
    %44 = vector.load %arg9[%c0_25, %c0_26] : memref<1x256xf32, #tpu.memory_space<vmem>>, vector<1x256xf32>
    %cst_27 = arith.constant dense<0.000000e+00> : vector<256xf32>
    %45 = vector.multi_reduction <add>, %42, %cst_27 [0] : vector<256x256xf32> to vector<256xf32>
    %46 = vector.shape_cast %45 : vector<256xf32> to vector<1x256xf32>
    %47 = arith.mulf %42, %42 : vector<256x256xf32>
    %cst_28 = arith.constant dense<0.000000e+00> : vector<256xf32>
    %48 = vector.multi_reduction <add>, %47, %cst_28 [0] : vector<256x256xf32> to vector<256xf32>
    %49 = vector.shape_cast %48 : vector<256xf32> to vector<1x256xf32>
    %cst_29 = arith.constant 3.906250e-03 : f32
    %50 = vector.broadcast %cst_29 : f32 to vector<1x256xf32>
    %51 = arith.mulf %46, %50 : vector<1x256xf32>
    %cst_30 = arith.constant 3.906250e-03 : f32
    %52 = vector.broadcast %cst_30 : f32 to vector<1x256xf32>
    %53 = arith.mulf %49, %52 : vector<1x256xf32>
    %54 = arith.mulf %51, %51 : vector<1x256xf32>
    %55 = arith.subf %53, %54 : vector<1x256xf32>
    %cst_31 = arith.constant 0.000000e+00 : f32
    %56 = vector.broadcast %cst_31 : f32 to vector<1x256xf32>
    %57 = arith.maximumf %55, %56 : vector<1x256xf32>
    %cst_32 = arith.constant 9.99999974E-6 : f32
    %58 = vector.broadcast %cst_32 : f32 to vector<1x256xf32>
    %59 = arith.addf %57, %58 : vector<1x256xf32>
    %60 = math.rsqrt %59 : vector<1x256xf32>
    %61 = arith.mulf %60, %43 : vector<1x256xf32>
    %62 = arith.mulf %51, %61 : vector<1x256xf32>
    %63 = arith.subf %44, %62 : vector<1x256xf32>
    %64 = vector.broadcast %61 : vector<1x256xf32> to vector<256x256xf32>
    %65 = arith.mulf %42, %64 : vector<256x256xf32>
    %66 = vector.broadcast %63 : vector<1x256xf32> to vector<256x256xf32>
    %67 = arith.addf %65, %66 : vector<256x256xf32>
    %68 = arith.truncf %67 : vector<256x256xf32> to vector<256x256xbf16>
    %c0_33 = arith.constant 0 : index
    %c0_34 = arith.constant 0 : index
    %69 = vector.load %arg10[%c0_33, %c0_34] : memref<256x256xbf16, #tpu.memory_space<vmem>>, vector<256x256xbf16>
    %cst_35 = arith.constant dense<0.000000e+00> : vector<256x256xf32>
    %70 = tpu.matmul %68, %69, %cst_35 {dimension_numbers = #tpu.dot_dimension_numbers<[1], [0], [0], [1], [0, 0, 1, 1], [], []>} : vector<256x256xbf16>, vector<256x256xbf16>, vector<256x256xf32> -> vector<256x256xf32>
    %c0_36 = arith.constant 0 : index
    %c0_37 = arith.constant 0 : index
    %71 = vector.load %arg11[%c0_36, %c0_37] : memref<1x256xf32, #tpu.memory_space<vmem>>, vector<1x256xf32>
    %72 = vector.broadcast %71 : vector<1x256xf32> to vector<256x256xf32>
    %73 = arith.addf %70, %72 : vector<256x256xf32>
    %cst_38 = arith.constant 0.000000e+00 : f32
    %74 = vector.broadcast %cst_38 : f32 to vector<256x256xf32>
    %75 = arith.maximumf %73, %74 : vector<256x256xf32>
    %c0_39 = arith.constant 0 : index
    %c0_40 = arith.constant 0 : index
    %76 = vector.load %arg12[%c0_39, %c0_40] : memref<1x256xf32, #tpu.memory_space<vmem>>, vector<1x256xf32>
    %c0_41 = arith.constant 0 : index
    %c0_42 = arith.constant 0 : index
    %77 = vector.load %arg13[%c0_41, %c0_42] : memref<1x256xf32, #tpu.memory_space<vmem>>, vector<1x256xf32>
    %cst_43 = arith.constant dense<0.000000e+00> : vector<256xf32>
    %78 = vector.multi_reduction <add>, %75, %cst_43 [0] : vector<256x256xf32> to vector<256xf32>
    %79 = vector.shape_cast %78 : vector<256xf32> to vector<1x256xf32>
    %80 = arith.mulf %75, %75 : vector<256x256xf32>
    %cst_44 = arith.constant dense<0.000000e+00> : vector<256xf32>
    %81 = vector.multi_reduction <add>, %80, %cst_44 [0] : vector<256x256xf32> to vector<256xf32>
    %82 = vector.shape_cast %81 : vector<256xf32> to vector<1x256xf32>
    %cst_45 = arith.constant 3.906250e-03 : f32
    %83 = vector.broadcast %cst_45 : f32 to vector<1x256xf32>
    %84 = arith.mulf %79, %83 : vector<1x256xf32>
    %cst_46 = arith.constant 3.906250e-03 : f32
    %85 = vector.broadcast %cst_46 : f32 to vector<1x256xf32>
    %86 = arith.mulf %82, %85 : vector<1x256xf32>
    %87 = arith.mulf %84, %84 : vector<1x256xf32>
    %88 = arith.subf %86, %87 : vector<1x256xf32>
    %cst_47 = arith.constant 0.000000e+00 : f32
    %89 = vector.broadcast %cst_47 : f32 to vector<1x256xf32>
    %90 = arith.maximumf %88, %89 : vector<1x256xf32>
    %cst_48 = arith.constant 9.99999974E-6 : f32
    %91 = vector.broadcast %cst_48 : f32 to vector<1x256xf32>
    %92 = arith.addf %90, %91 : vector<1x256xf32>
    %93 = math.rsqrt %92 : vector<1x256xf32>
    %94 = arith.mulf %93, %76 : vector<1x256xf32>
    %95 = arith.mulf %84, %94 : vector<1x256xf32>
    %96 = arith.subf %77, %95 : vector<1x256xf32>
    %97 = vector.broadcast %94 : vector<1x256xf32> to vector<256x256xf32>
    %98 = arith.mulf %75, %97 : vector<256x256xf32>
    %99 = vector.broadcast %96 : vector<1x256xf32> to vector<256x256xf32>
    %100 = arith.addf %98, %99 : vector<256x256xf32>
    %101 = arith.truncf %100 : vector<256x256xf32> to vector<256x256xbf16>
    %c0_49 = arith.constant 0 : index
    %c0_50 = arith.constant 0 : index
    %102 = vector.load %arg14[%c0_49, %c0_50] : memref<256x128xbf16, #tpu.memory_space<vmem>>, vector<256x128xbf16>
    %cst_51 = arith.constant dense<0.000000e+00> : vector<256x128xf32>
    %103 = tpu.matmul %101, %102, %cst_51 {dimension_numbers = #tpu.dot_dimension_numbers<[1], [0], [0], [1], [0, 0, 1, 1], [], []>} : vector<256x256xbf16>, vector<256x128xbf16>, vector<256x128xf32> -> vector<256x128xf32>
    %c0_52 = arith.constant 0 : index
    %c0_53 = arith.constant 0 : index
    %104 = vector.load %arg15[%c0_52, %c0_53] : memref<1x128xf32, #tpu.memory_space<vmem>>, vector<1x128xf32>
    %105 = vector.broadcast %104 : vector<1x128xf32> to vector<256x128xf32>
    %106 = arith.addf %103, %105 : vector<256x128xf32>
    %cst_54 = arith.constant 0.000000e+00 : f32
    %107 = vector.broadcast %cst_54 : f32 to vector<256x128xf32>
    %108 = arith.maximumf %106, %107 : vector<256x128xf32>
    %c0_55 = arith.constant 0 : index
    %c0_56 = arith.constant 0 : index
    %109 = vector.load %arg16[%c0_55, %c0_56] : memref<1x128xf32, #tpu.memory_space<vmem>>, vector<1x128xf32>
    %c0_57 = arith.constant 0 : index
    %c0_58 = arith.constant 0 : index
    %110 = vector.load %arg17[%c0_57, %c0_58] : memref<1x128xf32, #tpu.memory_space<vmem>>, vector<1x128xf32>
    %cst_59 = arith.constant dense<0.000000e+00> : vector<128xf32>
    %111 = vector.multi_reduction <add>, %108, %cst_59 [0] : vector<256x128xf32> to vector<128xf32>
    %112 = vector.shape_cast %111 : vector<128xf32> to vector<1x128xf32>
    %113 = arith.mulf %108, %108 : vector<256x128xf32>
    %cst_60 = arith.constant dense<0.000000e+00> : vector<128xf32>
    %114 = vector.multi_reduction <add>, %113, %cst_60 [0] : vector<256x128xf32> to vector<128xf32>
    %115 = vector.shape_cast %114 : vector<128xf32> to vector<1x128xf32>
    %cst_61 = arith.constant 3.906250e-03 : f32
    %116 = vector.broadcast %cst_61 : f32 to vector<1x128xf32>
    %117 = arith.mulf %112, %116 : vector<1x128xf32>
    %cst_62 = arith.constant 3.906250e-03 : f32
    %118 = vector.broadcast %cst_62 : f32 to vector<1x128xf32>
    %119 = arith.mulf %115, %118 : vector<1x128xf32>
    %120 = arith.mulf %117, %117 : vector<1x128xf32>
    %121 = arith.subf %119, %120 : vector<1x128xf32>
    %cst_63 = arith.constant 0.000000e+00 : f32
    %122 = vector.broadcast %cst_63 : f32 to vector<1x128xf32>
    %123 = arith.maximumf %121, %122 : vector<1x128xf32>
    %cst_64 = arith.constant 9.99999974E-6 : f32
    %124 = vector.broadcast %cst_64 : f32 to vector<1x128xf32>
    %125 = arith.addf %123, %124 : vector<1x128xf32>
    %126 = math.rsqrt %125 : vector<1x128xf32>
    %127 = arith.mulf %126, %109 : vector<1x128xf32>
    %128 = arith.mulf %117, %127 : vector<1x128xf32>
    %129 = arith.subf %110, %128 : vector<1x128xf32>
    %130 = vector.broadcast %127 : vector<1x128xf32> to vector<256x128xf32>
    %131 = arith.mulf %108, %130 : vector<256x128xf32>
    %132 = vector.broadcast %129 : vector<1x128xf32> to vector<256x128xf32>
    %133 = arith.addf %131, %132 : vector<256x128xf32>
    %134 = arith.truncf %133 : vector<256x128xf32> to vector<256x128xbf16>
    %c0_65 = arith.constant 0 : index
    %c0_66 = arith.constant 0 : index
    %135 = vector.load %arg18[%c0_65, %c0_66] : memref<128x128xbf16, #tpu.memory_space<vmem>>, vector<128x128xbf16>
    %cst_67 = arith.constant dense<0.000000e+00> : vector<256x128xf32>
    %136 = tpu.matmul %134, %135, %cst_67 {dimension_numbers = #tpu.dot_dimension_numbers<[1], [0], [0], [1], [0, 0, 1, 1], [], []>} : vector<256x128xbf16>, vector<128x128xbf16>, vector<256x128xf32> -> vector<256x128xf32>
    %c0_68 = arith.constant 0 : index
    %c0_69 = arith.constant 0 : index
    %137 = vector.load %arg19[%c0_68, %c0_69] : memref<1x128xf32, #tpu.memory_space<vmem>>, vector<1x128xf32>
    %138 = vector.broadcast %137 : vector<1x128xf32> to vector<256x128xf32>
    %139 = arith.addf %136, %138 : vector<256x128xf32>
    %c0_70 = arith.constant 0 : index
    %c0_71 = arith.constant 0 : index
    %c0_72 = arith.constant 0 : index
    %140 = vector.load %arg20[%c0_70, %c0_71, %c0_72] : memref<1x256x128xf32, #tpu.memory_space<vmem>>, vector<1x256x128xf32>
    %141 = vector.shape_cast %140 : vector<1x256x128xf32> to vector<256x128xf32>
    %142 = vector.shape_cast %139 : vector<256x128xf32> to vector<1x256x128xf32>
    tpu.vector_store %arg20[%c0_70, %c0_71, %c0_72], %142 {strides = array<i32>} : memref<1x256x128xf32, #tpu.memory_space<vmem>>, vector<1x256x128xf32>,
    return
  }
  func.func @transform_0(%arg0: i32) -> (i32, i32, i32) {
    %c0_i32 = arith.constant 0 : i32
    %c0_i32_0 = arith.constant 0 : i32
    %c0_i32_1 = arith.constant 0 : i32
    return %arg0, %c0_i32, %c0_i32_0 : i32, i32, i32
  }
  func.func @transform_1(%arg0: i32) -> (i32, i32) {
    %c0_i32 = arith.constant 0 : i32
    %c0_i32_0 = arith.constant 0 : i32
    %c0_i32_1 = arith.constant 0 : i32
    return %c0_i32, %c0_i32_0 : i32, i32
  }
  func.func @transform_2(%arg0: i32) -> (i32, i32) {
    %c0_i32 = arith.constant 0 : i32
    %c0_i32_0 = arith.constant 0 : i32
    %c0_i32_1 = arith.constant 0 : i32
    return %c0_i32, %c0_i32_0 : i32, i32
  }
  func.func @transform_3(%arg0: i32) -> (i32, i32) {
    %c0_i32 = arith.constant 0 : i32
    %c0_i32_0 = arith.constant 0 : i32
    %c0_i32_1 = arith.constant 0 : i32
    return %c0_i32, %c0_i32_0 : i32, i32
  }
  func.func @transform_4(%arg0: i32) -> (i32, i32) {
    %c0_i32 = arith.constant 0 : i32
    %c0_i32_0 = arith.constant 0 : i32
    %c0_i32_1 = arith.constant 0 : i32
    return %c0_i32, %c0_i32_0 : i32, i32
  }
  func.func @transform_5(%arg0: i32) -> (i32, i32) {
    %c0_i32 = arith.constant 0 : i32
    %c0_i32_0 = arith.constant 0 : i32
    %c0_i32_1 = arith.constant 0 : i32
    return %c0_i32, %c0_i32_0 : i32, i32
  }
  func.func @transform_6(%arg0: i32) -> (i32, i32) {
    %c0_i32 = arith.constant 0 : i32
    %c0_i32_0 = arith.constant 0 : i32
    %c0_i32_1 = arith.constant 0 : i32
    return %c0_i32, %c0_i32_0 : i32, i32
  }
  func.func @transform_7(%arg0: i32) -> (i32, i32) {
    %c0_i32 = arith.constant 0 : i32
    %c0_i32_0 = arith.constant 0 : i32
    %c0_i32_1 = arith.constant 0 : i32
    return %c0_i32, %c0_i32_0 : i32, i32
  }
  func.func @transform_8(%arg0: i32) -> (i32, i32) {
    %c0_i32 = arith.constant 0 : i32
    %c0_i32_0 = arith.constant 0 : i32
    %c0_i32_1 = arith.constant 0 : i32
    return %c0_i32, %c0_i32_0 : i32, i32
  }
  func.func @transform_9(%arg0: i32) -> (i32, i32) {
    %c0_i32 = arith.constant 0 : i32
    %c0_i32_0 = arith.constant 0 : i32
    %c0_i32_1 = arith.constant 0 : i32
    return %c0_i32, %c0_i32_0 : i32, i32
  }
  func.func @transform_10(%arg0: i32) -> (i32, i32) {
    %c0_i32 = arith.constant 0 : i32
    %c0_i32_0 = arith.constant 0 : i32
    %c0_i32_1 = arith.constant 0 : i32
    return %c0_i32, %c0_i32_0 : i32, i32
  }
  func.func @transform_11(%arg0: i32) -> (i32, i32) {
    %c0_i32 = arith.constant 0 : i32
    %c0_i32_0 = arith.constant 0 : i32
    %c0_i32_1 = arith.constant 0 : i32
    return %c0_i32, %c0_i32_0 : i32, i32
  }
  func.func @transform_12(%arg0: i32) -> (i32, i32) {
    %c0_i32 = arith.constant 0 : i32
    %c0_i32_0 = arith.constant 0 : i32
    %c0_i32_1 = arith.constant 0 : i32
    return %c0_i32, %c0_i32_0 : i32, i32
  }
  func.func @transform_13(%arg0: i32) -> (i32, i32) {
    %c0_i32 = arith.constant 0 : i32
    %c0_i32_0 = arith.constant 0 : i32
    %c0_i32_1 = arith.constant 0 : i32
    return %c0_i32, %c0_i32_0 : i32, i32
  }
  func.func @transform_14(%arg0: i32) -> (i32, i32) {
    %c0_i32 = arith.constant 0 : i32
    %c0_i32_0 = arith.constant 0 : i32
    %c0_i32_1 = arith.constant 0 : i32
    return %c0_i32, %c0_i32_0 : i32, i32
  }
  func.func @transform_15(%arg0: i32) -> (i32, i32) {
    %c0_i32 = arith.constant 0 : i32
    %c0_i32_0 = arith.constant 0 : i32
    %c0_i32_1 = arith.constant 0 : i32
    return %c0_i32, %c0_i32_0 : i32, i32
  }
  func.func @transform_16(%arg0: i32) -> (i32, i32) {
    %c0_i32 = arith.constant 0 : i32
    %c0_i32_0 = arith.constant 0 : i32
    %c0_i32_1 = arith.constant 0 : i32
    return %c0_i32, %c0_i32_0 : i32, i32
  }
  func.func @transform_17(%arg0: i32) -> (i32, i32) {
    %c0_i32 = arith.constant 0 : i32
    %c0_i32_0 = arith.constant 0 : i32
    %c0_i32_1 = arith.constant 0 : i32
    return %c0_i32, %c0_i32_0 : i32, i32
  }
  func.func @transform_18(%arg0: i32) -> (i32, i32) {
    %c0_i32 = arith.constant 0 : i32
    %c0_i32_0 = arith.constant 0 : i32
    %c0_i32_1 = arith.constant 0 : i32
    return %c0_i32, %c0_i32_0 : i32, i32
  }
  func.func @transform_19(%arg0: i32) -> (i32, i32, i32) {
    %c0_i32 = arith.constant 0 : i32
    %c0_i32_0 = arith.constant 0 : i32
    %c0_i32_1 = arith.constant 0 : i32
    return %arg0, %c0_i32, %c0_i32_0 : i32, i32, i32
  }
}

</mosaic_0001>

<llo_original>
// kernel: tpu_custom_call.1
$region0: #{tpu_custom_call.1}
  #allocation0 [shape = 'u32[]', space=smem, size = 0x4, offset = 0x4, fixed_abs, tag = 'smem constant byte address 0x4 - core index']
  #allocation1 [shape = 'u32[144,128]{1,0:T(1,128)}', space=vmem, size = 0x12000, scoped, tag = 'internal scratch']
  %s0 = inlined_call_operand.vmem [shape: f32[1,256,16], index: 0, kind: input, shape index: {}]
  %s1 = inlined_call_operand.hbm [shape: bf16[16,128], index: 1, kind: input, shape index: {}]
  %s2 = inlined_call_operand.hbm [shape: f32[1,128], index: 2, kind: input, shape index: {}]
  %s3 = inlined_call_operand.hbm [shape: f32[1,128], index: 3, kind: input, shape index: {}]
  %s4 = inlined_call_operand.hbm [shape: f32[1,128], index: 4, kind: input, shape index: {}]
  %s5 = inlined_call_operand.hbm [shape: bf16[128,256], index: 5, kind: input, shape index: {}]
  %s6 = inlined_call_operand.vmem [shape: f32[1,256], index: 6, kind: input, shape index: {}]
  %s7 = inlined_call_operand.hbm [shape: f32[1,256], index: 7, kind: input, shape index: {}]
  %s8 = inlined_call_operand.hbm [shape: f32[1,256], index: 8, kind: input, shape index: {}]
  %s9 = inlined_call_operand.vmem [shape: bf16[256,256], index: 9, kind: input, shape index: {}]
  %s10 = inlined_call_operand.vmem [shape: f32[1,256], index: 10, kind: input, shape index: {}]
  %s11 = inlined_call_operand.vmem [shape: f32[1,256], index: 11, kind: input, shape index: {}]
  %s12 = inlined_call_operand.vmem [shape: f32[1,256], index: 12, kind: input, shape index: {}]
  %s13 = inlined_call_operand.hbm [shape: bf16[256,128], index: 13, kind: input, shape index: {}]
  %s14 = inlined_call_operand.vmem [shape: f32[1,128], index: 14, kind: input, shape index: {}]
  %s15 = inlined_call_operand.vmem [shape: f32[1,128], index: 15, kind: input, shape index: {}]
  %s16 = inlined_call_operand.vmem [shape: f32[1,128], index: 16, kind: input, shape index: {}]
  %s17 = inlined_call_operand.vmem [shape: bf16[128,128], index: 17, kind: input, shape index: {}]
  %s18 = inlined_call_operand.vmem [shape: f32[1,128], index: 18, kind: input, shape index: {}]
  %s19 = inlined_call_operand.hbm [shape: f32[1,256,128], index: 19, kind: output, shape index: {}]
  %s20 = sld [smem:[#allocation0]]
  $region118: #{tpu_custom_call.1} parent=0
    _
  %s22 = ssub.s32 1, %s20
  %s23 = scalar_select 0, %s22, %s20
  $region1: #{tpu_custom_call.1} parent=0
    #allocation2 [shape = 'u8[4096]{0}', space=vmem, size = 0x1000, scoped, tag = 'input window, operand 1, single buffered']
    #allocation3 [shape = 's32[1]{0}', space=sflag, size = 0x4, scoped, tag = 'scoped memory for tpu_custom_call.1']
    #allocation4 [shape = 's32[1]{0}', space=sflag, size = 0x4, scoped, tag = 'scoped memory for tpu_custom_call.1']
    #allocation5 [shape = 'u8[512]{0}', space=vmem, size = 0x400, scoped, tag = 'input window, operand 2, single buffered']
    #allocation6 [shape = 's32[1]{0}', space=sflag, size = 0x4, scoped, tag = 'scoped memory for tpu_custom_call.1']
    #allocation7 [shape = 'u8[512]{0}', space=vmem, size = 0x400, scoped, tag = 'input window, operand 3, single buffered']
    #allocation8 [shape = 'u8[512]{0}', space=vmem, size = 0x400, scoped, tag = 'input window, operand 4, single buffered']
    #allocation9 [shape = 's32[1]{0}', space=sflag, size = 0x4, scoped, tag = 'scoped memory for tpu_custom_call.1']
    #allocation10 [shape = 'u8[65536]{0}', space=vmem, size = 0x10000, scoped, tag = 'input window, operand 5, single buffered']
    #allocation11 [shape = 'u8[1024]{0}', space=vmem, size = 0x400, scoped, tag = 'input window, operand 7, single buffered']
    #allocation12 [shape = 's32[1]{0}', space=sflag, size = 0x4, scoped, tag = 'scoped memory for tpu_custom_call.1']
    #allocation13 [shape = 'u8[1024]{0}', space=vmem, size = 0x400, scoped, tag = 'input window, operand 8, single buffered']
    #allocation14 [shape = 'u8[65536]{0}', space=vmem, size = 0x10000, scoped, tag = 'input window, operand 13, single buffered']
    #allocation15 [shape = 's32[1]{0}', space=sflag, size = 0x4, scoped, tag = 'scoped memory for tpu_custom_call.1']
    #allocation16 [shape = 'u8[131072]{0}', space=vmem, size = 0x20000, scoped, tag = 'output window, operand 0, single buffered']
    %24 = vsyncpa [#allocation3], 0
    %25 = vsyncpa [#allocation6], 0
    %26 = vsyncpa [#allocation9], 0
    %27 = vsyncpa [#allocation12], 0
    %28 = vsyncpa [#allocation15], 0
    %29 = vsyncpa [#allocation4], 0
    // Predicated region
    $region2: #{tpu_custom_call.1} parent=1 // pred_check
      _
    $region3: #{tpu_custom_call.1} parent=1 // pred_check_branch
      %31 = sbr.rel (0) target = $region5
    $region4: #{tpu_custom_call.1} parent=1 // pred_region
      _
    $region5: #{tpu_custom_call.1} parent=1 // pred_fallthru
      _
    // Predicated region
    $region6: #{tpu_custom_call.1} parent=1 // pred_check
      _
    $region7: #{tpu_custom_call.1} parent=1 // pred_check_branch
      %33 = sbr.rel (0) target = $region9
    $region8: #{tpu_custom_call.1} parent=1 // pred_region
      %s35 = ssub.s32 128, 128
      %36 = vsyncadd [#allocation3], %s35
      %s37 = sshll.u32 [#allocation2], 4
      %s38 = int_to_ptr.vmem [resolvable:$true] %s37
      %43 = dma.hbm_to_vmem [thread:$0]  %s1, 128, %s38, [#allocation3], 64, 64, 4
    $region9: #{tpu_custom_call.1} parent=1 // pred_fallthru
      _
    // Predicated region
    $region10: #{tpu_custom_call.1} parent=1 // pred_check
      _
    $region11: #{tpu_custom_call.1} parent=1 // pred_check_branch
      %45 = sbr.rel (0) target = $region13
    $region12: #{tpu_custom_call.1} parent=1 // pred_region
      %s47 = ssub.s32 16, 16
      %48 = vsyncadd [#allocation6], %s47
      %s50 = sshll.u32 [#allocation5], 4
      %s51 = int_to_ptr.vmem [resolvable:$true] %s50
      %53 = dma.hbm_to_vmem [thread:$0]  %s2, 16, %s51, [#allocation6]
    $region13: #{tpu_custom_call.1} parent=1 // pred_fallthru
      _
    // Predicated region
    $region14: #{tpu_custom_call.1} parent=1 // pred_check
      _
    $region15: #{tpu_custom_call.1} parent=1 // pred_check_branch
      %55 = sbr.rel (0) target = $region17
    $region16: #{tpu_custom_call.1} parent=1 // pred_region
      %s57 = ssub.s32 16, 16
      %58 = vsyncadd [#allocation6], %s57
      %s60 = sshll.u32 [#allocation7], 4
      %s61 = int_to_ptr.vmem [resolvable:$true] %s60
      %63 = dma.hbm_to_vmem [thread:$0]  %s3, 16, %s61, [#allocation6]
    $region17: #{tpu_custom_call.1} parent=1 // pred_fallthru
      _
    // Predicated region
    $region18: #{tpu_custom_call.1} parent=1 // pred_check
      _
    $region19: #{tpu_custom_call.1} parent=1 // pred_check_branch
      %65 = sbr.rel (0) target = $region21
    $region20: #{tpu_custom_call.1} parent=1 // pred_region
      %s67 = ssub.s32 16, 16
      %68 = vsyncadd [#allocation9], %s67
      %s70 = sshll.u32 [#allocation8], 4
      %s71 = int_to_ptr.vmem [resolvable:$true] %s70
      %73 = dma.hbm_to_vmem [thread:$0]  %s4, 16, %s71, [#allocation9]
    $region21: #{tpu_custom_call.1} parent=1 // pred_fallthru
      _
    // Predicated region
    $region22: #{tpu_custom_call.1} parent=1 // pred_check
      _
    $region23: #{tpu_custom_call.1} parent=1 // pred_check_branch
      %75 = sbr.rel (0) target = $region25
    $region24: #{tpu_custom_call.1} parent=1 // pred_region
      %s77 = ssub.s32 2048, 2048
      %78 = vsyncadd [#allocation9], %s77
      %s79 = sshll.u32 [#allocation10], 4
      %s80 = int_to_ptr.vmem [resolvable:$true] %s79
      %85 = dma.hbm_to_vmem [thread:$0]  %s5, 2048, %s80, [#allocation9], 128, 128, 8
    $region25: #{tpu_custom_call.1} parent=1 // pred_fallthru
      _
    // Predicated region
    $region26: #{tpu_custom_call.1} parent=1 // pred_check
      _
    $region27: #{tpu_custom_call.1} parent=1 // pred_check_branch
      %87 = sbr.rel (0) target = $region29
    $region28: #{tpu_custom_call.1} parent=1 // pred_region
      _
    $region29: #{tpu_custom_call.1} parent=1 // pred_fallthru
      _
    // Predicated region
    $region30: #{tpu_custom_call.1} parent=1 // pred_check
      _
    $region31: #{tpu_custom_call.1} parent=1 // pred_check_branch
      %89 = sbr.rel (0) target = $region33
    $region32: #{tpu_custom_call.1} parent=1 // pred_region
      %s91 = ssub.s32 32, 32
      %92 = vsyncadd [#allocation12], %s91
      %s94 = sshll.u32 [#allocation11], 4
      %s95 = int_to_ptr.vmem [resolvable:$true] %s94
      %97 = dma.hbm_to_vmem [thread:$0]  %s7, 32, %s95, [#allocation12]
    $region33: #{tpu_custom_call.1} parent=1 // pred_fallthru
      _
    // Predicated region
    $region34: #{tpu_custom_call.1} parent=1 // pred_check
      _
    $region35: #{tpu_custom_call.1} parent=1 // pred_check_branch
      %99 = sbr.rel (0) target = $region37
    $region36: #{tpu_custom_call.1} parent=1 // pred_region
      %s101 = ssub.s32 32, 32
      %102 = vsyncadd [#allocation12], %s101
      %s104 = sshll.u32 [#allocation13], 4
      %s105 = int_to_ptr.vmem [resolvable:$true] %s104
      %107 = dma.hbm_to_vmem [thread:$0]  %s8, 32, %s105, [#allocation12]
    $region37: #{tpu_custom_call.1} parent=1 // pred_fallthru
      _
    // Predicated region
    $region38: #{tpu_custom_call.1} parent=1 // pred_check
      _
    $region39: #{tpu_custom_call.1} parent=1 // pred_check_branch
      %109 = sbr.rel (0) target = $region41
    $region40: #{tpu_custom_call.1} parent=1 // pred_region
      _
    $region41: #{tpu_custom_call.1} parent=1 // pred_fallthru
      _
    // Predicated region
    $region42: #{tpu_custom_call.1} parent=1 // pred_check
      _
    $region43: #{tpu_custom_call.1} parent=1 // pred_check_branch
      %111 = sbr.rel (0) target = $region45
    $region44: #{tpu_custom_call.1} parent=1 // pred_region
      _
    $region45: #{tpu_custom_call.1} parent=1 // pred_fallthru
      _
    // Predicated region
    $region46: #{tpu_custom_call.1} parent=1 // pred_check
      _
    $region47: #{tpu_custom_call.1} parent=1 // pred_check_branch
      %113 = sbr.rel (0) target = $region49
    $region48: #{tpu_custom_call.1} parent=1 // pred_region
      _
    $region49: #{tpu_custom_call.1} parent=1 // pred_fallthru
      _
    // Predicated region
    $region50: #{tpu_custom_call.1} parent=1 // pred_check
      _
    $region51: #{tpu_custom_call.1} parent=1 // pred_check_branch
      %115 = sbr.rel (0) target = $region53
    $region52: #{tpu_custom_call.1} parent=1 // pred_region
      _
    $region53: #{tpu_custom_call.1} parent=1 // pred_fallthru
      _
    // Predicated region
    $region54: #{tpu_custom_call.1} parent=1 // pred_check
      _
    $region55: #{tpu_custom_call.1} parent=1 // pred_check_branch
      %117 = sbr.rel (0) target = $region57
    $region56: #{tpu_custom_call.1} parent=1 // pred_region
      %s119 = ssub.s32 2048, 2048
      %120 = vsyncadd [#allocation15], %s119
      %s121 = sshll.u32 [#allocation14], 4
      %s122 = int_to_ptr.vmem [resolvable:$true] %s121
      %127 = dma.hbm_to_vmem [thread:$0]  %s13, 2048, %s122, [#allocation15], 64, 64, 4
    $region57: #{tpu_custom_call.1} parent=1 // pred_fallthru
      _
    // Predicated region
    $region58: #{tpu_custom_call.1} parent=1 // pred_check
      _
    $region59: #{tpu_custom_call.1} parent=1 // pred_check_branch
      %129 = sbr.rel (0) target = $region61
    $region60: #{tpu_custom_call.1} parent=1 // pred_region
      _
    $region61: #{tpu_custom_call.1} parent=1 // pred_fallthru
      _
    // Predicated region
    $region62: #{tpu_custom_call.1} parent=1 // pred_check
      _
    $region63: #{tpu_custom_call.1} parent=1 // pred_check_branch
      %131 = sbr.rel (0) target = $region65
    $region64: #{tpu_custom_call.1} parent=1 // pred_region
      _
    $region65: #{tpu_custom_call.1} parent=1 // pred_fallthru
      _
    // Predicated region
    $region66: #{tpu_custom_call.1} parent=1 // pred_check
      _
    $region67: #{tpu_custom_call.1} parent=1 // pred_check_branch
      %133 = sbr.rel (0) target = $region69
    $region68: #{tpu_custom_call.1} parent=1 // pred_region
      _
    $region69: #{tpu_custom_call.1} parent=1 // pred_fallthru
      _
    // Predicated region
    $region70: #{tpu_custom_call.1} parent=1 // pred_check
      _
    $region71: #{tpu_custom_call.1} parent=1 // pred_check_branch
      %135 = sbr.rel (0) target = $region73
    $region72: #{tpu_custom_call.1} parent=1 // pred_region
      _
    $region73: #{tpu_custom_call.1} parent=1 // pred_fallthru
      _
    // Predicated region
    $region74: #{tpu_custom_call.1} parent=1 // pred_check
      _
    $region75: #{tpu_custom_call.1} parent=1 // pred_check_branch
      %137 = sbr.rel (0) target = $region77
    $region76: #{tpu_custom_call.1} parent=1 // pred_region
      _
    $region77: #{tpu_custom_call.1} parent=1 // pred_fallthru
      _
    // Predicated region
    $region78: #{tpu_custom_call.1} parent=1 // pred_check
      _
    $region79: #{tpu_custom_call.1} parent=1 // pred_check_branch
      %139 = sbr.rel (0) target = $region81
    $region80: #{tpu_custom_call.1} parent=1 // pred_region
      %140 = dma.done [#allocation3], 128
    $region81: #{tpu_custom_call.1} parent=1 // pred_fallthru
      _
    // Predicated region
    $region82: #{tpu_custom_call.1} parent=1 // pred_check
      _
    $region83: #{tpu_custom_call.1} parent=1 // pred_check_branch
      %142 = sbr.rel (0) target = $region85
    $region84: #{tpu_custom_call.1} parent=1 // pred_region
      %143 = dma.done [#allocation6], 16
    $region85: #{tpu_custom_call.1} parent=1 // pred_fallthru
      _
    // Predicated region
    $region86: #{tpu_custom_call.1} parent=1 // pred_check
      _
    $region87: #{tpu_custom_call.1} parent=1 // pred_check_branch
      %145 = sbr.rel (0) target = $region89
    $region88: #{tpu_custom_call.1} parent=1 // pred_region
      %146 = dma.done [#allocation6], 16
    $region89: #{tpu_custom_call.1} parent=1 // pred_fallthru
      _
    // Predicated region
    $region90: #{tpu_custom_call.1} parent=1 // pred_check
      _
    $region91: #{tpu_custom_call.1} parent=1 // pred_check_branch
      %148 = sbr.rel (0) target = $region93
    $region92: #{tpu_custom_call.1} parent=1 // pred_region
      %149 = dma.done [#allocation9], 16
    $region93: #{tpu_custom_call.1} parent=1 // pred_fallthru
      _
    // Predicated region
    $region94: #{tpu_custom_call.1} parent=1 // pred_check
      _
    $region95: #{tpu_custom_call.1} parent=1 // pred_check_branch
      %151 = sbr.rel (0) target = $region97
    $region96: #{tpu_custom_call.1} parent=1 // pred_region
      %152 = dma.done [#allocation9], 2048
    $region97: #{tpu_custom_call.1} parent=1 // pred_fallthru
      _
    // Predicated region
    $region98: #{tpu_custom_call.1} parent=1 // pred_check
      _
    $region99: #{tpu_custom_call.1} parent=1 // pred_check_branch
      %154 = sbr.rel (0) target = $region101
    $region100: #{tpu_custom_call.1} parent=1 // pred_region
      %155 = dma.done [#allocation12], 32
    $region101: #{tpu_custom_call.1} parent=1 // pred_fallthru
      _
    // Predicated region
    $region102: #{tpu_custom_call.1} parent=1 // pred_check
      _
    $region103: #{tpu_custom_call.1} parent=1 // pred_check_branch
      %157 = sbr.rel (0) target = $region105
    $region104: #{tpu_custom_call.1} parent=1 // pred_region
      %158 = dma.done [#allocation12], 32
    $region105: #{tpu_custom_call.1} parent=1 // pred_fallthru
      _
    // Predicated region
    $region106: #{tpu_custom_call.1} parent=1 // pred_check
      _
    $region107: #{tpu_custom_call.1} parent=1 // pred_check_branch
      %160 = sbr.rel (0) target = $region109
    $region108: #{tpu_custom_call.1} parent=1 // pred_region
      %161 = dma.done [#allocation15], 2048
    $region109: #{tpu_custom_call.1} parent=1 // pred_fallthru
      _
    %v163 = vld [vmem:[%s0] sm:$0xff]
    %v164 = vld [vmem:[%s0 + $0x8] sm:$0xff]
    %v165 = vld [vmem:[%s0 + $0x10] sm:$0xff]
    %v166 = vld [vmem:[%s0 + $0x18] sm:$0xff]
    %v167 = vld [vmem:[%s0 + $0x20] sm:$0xff]
    %v168 = vld [vmem:[%s0 + $0x28] sm:$0xff]
    %v169 = vld [vmem:[%s0 + $0x30] sm:$0xff]
    %v170 = vld [vmem:[%s0 + $0x38] sm:$0xff]
    %v171 = vld [vmem:[%s0 + $0x40] sm:$0xff]
    %v172 = vld [vmem:[%s0 + $0x48] sm:$0xff]
    %v173 = vld [vmem:[%s0 + $0x50] sm:$0xff]
    %v174 = vld [vmem:[%s0 + $0x58] sm:$0xff]
    %v175 = vld [vmem:[%s0 + $0x60] sm:$0xff]
    %v176 = vld [vmem:[%s0 + $0x68] sm:$0xff]
    %v177 = vld [vmem:[%s0 + $0x70] sm:$0xff]
    %v178 = vld [vmem:[%s0 + $0x78] sm:$0xff]
    %v179 = vld [vmem:[%s0 + $0x80] sm:$0xff]
    %v180 = vld [vmem:[%s0 + $0x88] sm:$0xff]
    %v181 = vld [vmem:[%s0 + $0x90] sm:$0xff]
    %v182 = vld [vmem:[%s0 + $0x98] sm:$0xff]
    %v183 = vld [vmem:[%s0 + $0xa0] sm:$0xff]
    %v184 = vld [vmem:[%s0 + $0xa8] sm:$0xff]
    %v185 = vld [vmem:[%s0 + $0xb0] sm:$0xff]
    %v186 = vld [vmem:[%s0 + $0xb8] sm:$0xff]
    %v187 = vld [vmem:[%s0 + $0xc0] sm:$0xff]
    %v188 = vld [vmem:[%s0 + $0xc8] sm:$0xff]
    %v189 = vld [vmem:[%s0 + $0xd0] sm:$0xff]
    %v190 = vld [vmem:[%s0 + $0xd8] sm:$0xff]
    %v191 = vld [vmem:[%s0 + $0xe0] sm:$0xff]
    %v192 = vld [vmem:[%s0 + $0xe8] sm:$0xff]
    %v193 = vld [vmem:[%s0 + $0xf0] sm:$0xff]
    %v194 = vld [vmem:[%s0 + $0xf8] sm:$0xff]
    %v195 = vpack.c.bf16 %v164, %v163
    %v196 = vpack.c.bf16 %v166, %v165
    %v197 = vpack.c.bf16 %v168, %v167
    %v198 = vpack.c.bf16 %v170, %v169
    %v199 = vpack.c.bf16 %v172, %v171
    %v200 = vpack.c.bf16 %v174, %v173
    %v201 = vpack.c.bf16 %v176, %v175
    %v202 = vpack.c.bf16 %v178, %v177
    %v203 = vpack.c.bf16 %v180, %v179
    %v204 = vpack.c.bf16 %v182, %v181
    %v205 = vpack.c.bf16 %v184, %v183
    %v206 = vpack.c.bf16 %v186, %v185
    %v207 = vpack.c.bf16 %v188, %v187
    %v208 = vpack.c.bf16 %v190, %v189
    %v209 = vpack.c.bf16 %v192, %v191
    %v210 = vpack.c.bf16 %v194, %v193
    %v211 = vld [vmem:[#allocation2] sm:$0xf]
    %v212 = vld [vmem:[#allocation2 + $0x4] sm:$0xf]
    %v213 = vld [vmem:[#allocation5] sm:$0x1]
    %v215 = vlaneseq
    %v216 = vshrl.u32 %v215, 7
    %v217 = vsub.s32 0, %v216
    %v218 = vrot.slane %v213, %v217
    %v222 = vunpack.c.l.b16 %v211
    %v223 = vunpack.c.l.b16 %v212
    %v224 = vpack.c.b16 %v223, %v222
    %vm226 = vcmask 130048
    %v228 = vsel %vm226, %v195, 0
    %v231 = vsel %vm226, %v196, 0
    %v234 = vsel %vm226, %v197, 0
    %v237 = vsel %vm226, %v198, 0
    %v240 = vsel %vm226, %v199, 0
    %v243 = vsel %vm226, %v200, 0
    %v246 = vsel %vm226, %v201, 0
    %v249 = vsel %vm226, %v202, 0
    %v252 = vsel %vm226, %v203, 0
    %v255 = vsel %vm226, %v204, 0
    %v258 = vsel %vm226, %v205, 0
    %v261 = vsel %vm226, %v206, 0
    %v264 = vsel %vm226, %v207, 0
    %v267 = vsel %vm226, %v208, 0
    %v270 = vsel %vm226, %v209, 0
    %v273 = vsel %vm226, %v210, 0
    %275 = vmatprep.subr.bf16.mxu0 0
    %276 = vmatpush1.bf16.msra.mxu0 %v224
    %277 = vmatprep.subr.bf16.mxu0 0
    %278 = vmatpush1.bf16.msra.mxu0 0
    %279 = vmatprep.subr.bf16.mxu0 0
    %280 = vmatpush1.bf16.msra.mxu0 0
    %281 = vmatprep.subr.bf16.mxu0 0
    %282 = vmatpush1.bf16.msra.mxu0 0
    %283 = vmatprep.subr.bf16.mxu0 0
    %284 = vmatpush1.bf16.msra.mxu0 0
    %285 = vmatprep.subr.bf16.mxu0 0
    %286 = vmatpush1.bf16.msra.mxu0 0
    %287 = vmatprep.subr.bf16.mxu0 0
    %288 = vmatpush1.bf16.msra.mxu0 0
    %289 = vmatprep.subr.bf16.mxu0 0
    %290 = vmatpush1.bf16.msra.mxu0 0
    %291 = vmatprep.subr.bf16.mxu0 0
    %292 = vmatpush1.bf16.msra.mxu0 0
    %293 = vmatprep.subr.bf16.mxu0 0
    %294 = vmatpush1.bf16.msra.mxu0 0
    %295 = vmatprep.subr.bf16.mxu0 0
    %296 = vmatpush1.bf16.msra.mxu0 0
    %297 = vmatprep.subr.bf16.mxu0 0
    %298 = vmatpush1.bf16.msra.mxu0 0
    %299 = vmatprep.subr.bf16.mxu0 0
    %300 = vmatpush1.bf16.msra.mxu0 0
    %301 = vmatprep.subr.bf16.mxu0 0
    %302 = vmatpush1.bf16.msra.mxu0 0
    %303 = vmatprep.subr.bf16.mxu0 0
    %304 = vmatpush1.bf16.msra.mxu0 0
    %305 = vmatprep.subr.bf16.mxu0 0
    %306 = vmatpush1.bf16.msra.mxu0 0
    %307 = vmatprep.mubr.bf16.mxu0 0
    %308 = vmatmul.mubr.bf16.gmra.mrb[0].mxu0 %v228
    %v309 = vpop.f32.mrb[0].mxu0
    %v310 = vadd.f32 %v218, %v309
    %v311 = vpop.f32.mrb[0].mxu0
    %v312 = vpop.f32.mrb[0].mxu0
    %v313 = vadd.f32 %v218, %v312
    %v314 = vpop.f32.mrb[0].mxu0
    %315 = vmatprep.mubr.bf16.mxu0 0
    %316 = vmatmul.mubr.bf16.gmra.mrb[0].mxu0 %v231
    %v317 = vpop.f32.mrb[0].mxu0
    %v318 = vadd.f32 %v218, %v317
    %v319 = vpop.f32.mrb[0].mxu0
    %v320 = vpop.f32.mrb[0].mxu0
    %v321 = vadd.f32 %v218, %v320
    %v322 = vpop.f32.mrb[0].mxu0
    %323 = vmatprep.mubr.bf16.mxu0 0
    %324 = vmatmul.mubr.bf16.gmra.mrb[0].mxu0 %v234
    %v325 = vpop.f32.mrb[0].mxu0
    %v326 = vadd.f32 %v218, %v325
    %v327 = vpop.f32.mrb[0].mxu0
    %v328 = vpop.f32.mrb[0].mxu0
    %v329 = vadd.f32 %v218, %v328
    %v330 = vpop.f32.mrb[0].mxu0
    %331 = vmatprep.mubr.bf16.mxu0 0
    %332 = vmatmul.mubr.bf16.gmra.mrb[0].mxu0 %v237
    %v333 = vpop.f32.mrb[0].mxu0
    %v334 = vadd.f32 %v218, %v333
    %v335 = vpop.f32.mrb[0].mxu0
    %v336 = vpop.f32.mrb[0].mxu0
    %v337 = vadd.f32 %v218, %v336
    %v338 = vpop.f32.mrb[0].mxu0
    %339 = vmatprep.mubr.bf16.mxu0 0
    %340 = vmatmul.mubr.bf16.gmra.mrb[0].mxu0 %v240
    %v341 = vpop.f32.mrb[0].mxu0
    %v342 = vadd.f32 %v218, %v341
    %v343 = vpop.f32.mrb[0].mxu0
    %v344 = vpop.f32.mrb[0].mxu0
    %v345 = vadd.f32 %v218, %v344
    %v346 = vpop.f32.mrb[0].mxu0
    %347 = vmatprep.mubr.bf16.mxu0 0
    %348 = vmatmul.mubr.bf16.gmra.mrb[0].mxu0 %v243
    %v349 = vpop.f32.mrb[0].mxu0
    %v350 = vadd.f32 %v218, %v349
    %v351 = vpop.f32.mrb[0].mxu0
    %v352 = vpop.f32.mrb[0].mxu0
    %v353 = vadd.f32 %v218, %v352
    %v354 = vpop.f32.mrb[0].mxu0
    %355 = vmatprep.mubr.bf16.mxu0 0
    %356 = vmatmul.mubr.bf16.gmra.mrb[0].mxu0 %v246
    %v357 = vpop.f32.mrb[0].mxu0
    %v358 = vadd.f32 %v218, %v357
    %v359 = vpop.f32.mrb[0].mxu0
    %v360 = vpop.f32.mrb[0].mxu0
    %v361 = vadd.f32 %v218, %v360
    %v362 = vpop.f32.mrb[0].mxu0
    %363 = vmatprep.mubr.bf16.mxu0 0
    %364 = vmatmul.mubr.bf16.gmra.mrb[0].mxu0 %v249
    %v365 = vpop.f32.mrb[0].mxu0
    %v366 = vadd.f32 %v218, %v365
    %v367 = vpop.f32.mrb[0].mxu0
    %v368 = vpop.f32.mrb[0].mxu0
    %v369 = vadd.f32 %v218, %v368
    %v370 = vpop.f32.mrb[0].mxu0
    %371 = vmatprep.mubr.bf16.mxu0 0
    %372 = vmatmul.mubr.bf16.gmra.mrb[0].mxu0 %v252
    %v373 = vpop.f32.mrb[0].mxu0
    %v374 = vadd.f32 %v218, %v373
    %v375 = vpop.f32.mrb[0].mxu0
    %v376 = vpop.f32.mrb[0].mxu0
    %v377 = vadd.f32 %v218, %v376
    %v378 = vpop.f32.mrb[0].mxu0
    %379 = vmatprep.mubr.bf16.mxu0 0
    %380 = vmatmul.mubr.bf16.gmra.mrb[0].mxu0 %v255
    %v381 = vpop.f32.mrb[0].mxu0
    %v382 = vadd.f32 %v218, %v381
    %v383 = vpop.f32.mrb[0].mxu0
    %v384 = vpop.f32.mrb[0].mxu0
    %v385 = vadd.f32 %v218, %v384
    %v386 = vpop.f32.mrb[0].mxu0
    %387 = vmatprep.mubr.bf16.mxu0 0
    %388 = vmatmul.mubr.bf16.gmra.mrb[0].mxu0 %v258
    %v389 = vpop.f32.mrb[0].mxu0
    %v390 = vadd.f32 %v218, %v389
    %v391 = vpop.f32.mrb[0].mxu0
    %v392 = vpop.f32.mrb[0].mxu0
    %v393 = vadd.f32 %v218, %v392
    %v394 = vpop.f32.mrb[0].mxu0
    %395 = vmatprep.mubr.bf16.mxu0 0
    %396 = vmatmul.mubr.bf16.gmra.mrb[0].mxu0 %v261
    %v397 = vpop.f32.mrb[0].mxu0
    %v398 = vadd.f32 %v218, %v397
    %v399 = vpop.f32.mrb[0].mxu0
    %v400 = vpop.f32.mrb[0].mxu0
    %v401 = vadd.f32 %v218, %v400
    %v402 = vpop.f32.mrb[0].mxu0
    %403 = vmatprep.mubr.bf16.mxu0 0
    %404 = vmatmul.mubr.bf16.gmra.mrb[0].mxu0 %v264
    %v405 = vpop.f32.mrb[0].mxu0
    %v406 = vadd.f32 %v218, %v405
    %v407 = vpop.f32.mrb[0].mxu0
    %v408 = vpop.f32.mrb[0].mxu0
    %v409 = vadd.f32 %v218, %v408
    %v410 = vpop.f32.mrb[0].mxu0
    %411 = vmatprep.mubr.bf16.mxu0 0
    %412 = vmatmul.mubr.bf16.gmra.mrb[0].mxu0 %v267
    %v413 = vpop.f32.mrb[0].mxu0
    %v414 = vadd.f32 %v218, %v413
    %v415 = vpop.f32.mrb[0].mxu0
    %v416 = vpop.f32.mrb[0].mxu0
    %v417 = vadd.f32 %v218, %v416
    %v418 = vpop.f32.mrb[0].mxu0
    %419 = vmatprep.mubr.bf16.mxu0 0
    %420 = vmatmul.mubr.bf16.gmra.mrb[0].mxu0 %v270
    %v421 = vpop.f32.mrb[0].mxu0
    %v422 = vadd.f32 %v218, %v421
    %v423 = vpop.f32.mrb[0].mxu0
    %v424 = vpop.f32.mrb[0].mxu0
    %v425 = vadd.f32 %v218, %v424
    %v426 = vpop.f32.mrb[0].mxu0
    %427 = vmatprep.mubr.bf16.mxu0 0
    %428 = vmatmul.mubr.bf16.gmra.mrb[0].mxu0 %v273
    %v429 = vpop.f32.mrb[0].mxu0
    %v430 = vadd.f32 %v218, %v429
    %v431 = vpop.f32.mrb[0].mxu0
    %v432 = vpop.f32.mrb[0].mxu0
    %v433 = vadd.f32 %v218, %v432
    %v434 = vpop.f32.mrb[0].mxu0
    %435 = vdwg.mxu0
    %v436 = vmax.f32 %v310, 0.0
    %v437 = vmax.f32 %v313, 0.0
    %v438 = vmax.f32 %v318, 0.0
    %v439 = vmax.f32 %v321, 0.0
    %v440 = vmax.f32 %v326, 0.0
    %v441 = vmax.f32 %v329, 0.0
    %v442 = vmax.f32 %v334, 0.0
    %v443 = vmax.f32 %v337, 0.0
    %v444 = vmax.f32 %v342, 0.0
    %v445 = vmax.f32 %v345, 0.0
    %v446 = vmax.f32 %v350, 0.0
    %v447 = vmax.f32 %v353, 0.0
    %v448 = vmax.f32 %v358, 0.0
    %v449 = vmax.f32 %v361, 0.0
    %v450 = vmax.f32 %v366, 0.0
    %v451 = vmax.f32 %v369, 0.0
    %v452 = vmax.f32 %v374, 0.0
    %v453 = vmax.f32 %v377, 0.0
    %v454 = vmax.f32 %v382, 0.0
    %v455 = vmax.f32 %v385, 0.0
    %v456 = vmax.f32 %v390, 0.0
    %v457 = vmax.f32 %v393, 0.0
    %v458 = vmax.f32 %v398, 0.0
    %v459 = vmax.f32 %v401, 0.0
    %v460 = vmax.f32 %v406, 0.0
    %v461 = vmax.f32 %v409, 0.0
    %v462 = vmax.f32 %v414, 0.0
    %v463 = vmax.f32 %v417, 0.0
    %v464 = vmax.f32 %v422, 0.0
    %v465 = vmax.f32 %v425, 0.0
    %v466 = vmax.f32 %v430, 0.0
    %v467 = vmax.f32 %v433, 0.0
    %v468 = vld [vmem:[#allocation7] sm:$0x1]
    %v469 = vld [vmem:[#allocation8] sm:$0x1]
    %v470 = vadd.f32 %v436, %v437
    %v471 = vadd.f32 %v470, %v438
    %v472 = vadd.f32 %v471, %v439
    %v473 = vadd.f32 %v472, %v440
    %v474 = vadd.f32 %v473, %v441
    %v475 = vadd.f32 %v474, %v442
    %v476 = vadd.f32 %v475, %v443
    %v477 = vadd.f32 %v476, %v444
    %v478 = vadd.f32 %v477, %v445
    %v479 = vadd.f32 %v478, %v446
    %v480 = vadd.f32 %v479, %v447
    %v481 = vadd.f32 %v480, %v448
    %v482 = vadd.f32 %v481, %v449
    %v483 = vadd.f32 %v482, %v450
    %v484 = vadd.f32 %v483, %v451
    %v485 = vadd.f32 %v484, %v452
    %v486 = vadd.f32 %v485, %v453
    %v487 = vadd.f32 %v486, %v454
    %v488 = vadd.f32 %v487, %v455
    %v489 = vadd.f32 %v488, %v456
    %v490 = vadd.f32 %v489, %v457
    %v491 = vadd.f32 %v490, %v458
    %v492 = vadd.f32 %v491, %v459
    %v493 = vadd.f32 %v492, %v460
    %v494 = vadd.f32 %v493, %v461
    %v495 = vadd.f32 %v494, %v462
    %v496 = vadd.f32 %v495, %v463
    %v497 = vadd.f32 %v496, %v464
    %v498 = vadd.f32 %v497, %v465
    %v499 = vadd.f32 %v498, %v466
    %v500 = vadd.f32 %v499, %v467
    %v501 = vrot.slane %v500, 4
    %v502 = vadd.f32 %v500, %v501
    %v503 = vrot.slane %v502, 2
    %v504 = vadd.f32 %v502, %v503
    %v505 = vrot.slane %v504, 1
    %v506 = vadd.f32 %v504, %v505
    %v507 = vmul.f32 %v436, %v436
    %v508 = vmul.f32 %v437, %v437
    %v509 = vmul.f32 %v438, %v438
    %v510 = vmul.f32 %v439, %v439
    %v511 = vmul.f32 %v440, %v440
    %v512 = vmul.f32 %v441, %v441
    %v513 = vmul.f32 %v442, %v442
    %v514 = vmul.f32 %v443, %v443
    %v515 = vmul.f32 %v444, %v444
    %v516 = vmul.f32 %v445, %v445
    %v517 = vmul.f32 %v446, %v446
    %v518 = vmul.f32 %v447, %v447
    %v519 = vmul.f32 %v448, %v448
    %v520 = vmul.f32 %v449, %v449
    %v521 = vmul.f32 %v450, %v450
    %v522 = vmul.f32 %v451, %v451
    %v523 = vmul.f32 %v452, %v452
    %v524 = vmul.f32 %v453, %v453
    %v525 = vmul.f32 %v454, %v454
    %v526 = vmul.f32 %v455, %v455
    %v527 = vmul.f32 %v456, %v456
    %v528 = vmul.f32 %v457, %v457
    %v529 = vmul.f32 %v458, %v458
    %v530 = vmul.f32 %v459, %v459
    %v531 = vmul.f32 %v460, %v460
    %v532 = vmul.f32 %v461, %v461
    %v533 = vmul.f32 %v462, %v462
    %v534 = vmul.f32 %v463, %v463
    %v535 = vmul.f32 %v464, %v464
    %v536 = vmul.f32 %v465, %v465
    %v537 = vmul.f32 %v466, %v466
    %v538 = vmul.f32 %v467, %v467
    %v539 = vadd.f32 %v507, %v508
    %v540 = vadd.f32 %v539, %v509
    %v541 = vadd.f32 %v540, %v510
    %v542 = vadd.f32 %v541, %v511
    %v543 = vadd.f32 %v542, %v512
    %v544 = vadd.f32 %v543, %v513
    %v545 = vadd.f32 %v544, %v514
    %v546 = vadd.f32 %v545, %v515
    %v547 = vadd.f32 %v546, %v516
    %v548 = vadd.f32 %v547, %v517
    %v549 = vadd.f32 %v548, %v518
    %v550 = vadd.f32 %v549, %v519
    %v551 = vadd.f32 %v550, %v520
    %v552 = vadd.f32 %v551, %v521
    %v553 = vadd.f32 %v552, %v522
    %v554 = vadd.f32 %v553, %v523
    %v555 = vadd.f32 %v554, %v524
    %v556 = vadd.f32 %v555, %v525
    %v557 = vadd.f32 %v556, %v526
    %v558 = vadd.f32 %v557, %v527
    %v559 = vadd.f32 %v558, %v528
    %v560 = vadd.f32 %v559, %v529
    %v561 = vadd.f32 %v560, %v530
    %v562 = vadd.f32 %v561, %v531
    %v563 = vadd.f32 %v562, %v532
    %v564 = vadd.f32 %v563, %v533
    %v565 = vadd.f32 %v564, %v534
    %v566 = vadd.f32 %v565, %v535
    %v567 = vadd.f32 %v566, %v536
    %v568 = vadd.f32 %v567, %v537
    %v569 = vadd.f32 %v568, %v538
    %v570 = vrot.slane %v569, 4
    %v571 = vadd.f32 %v569, %v570
    %v572 = vrot.slane %v571, 2
    %v573 = vadd.f32 %v571, %v572
    %v574 = vrot.slane %v573, 1
    %v575 = vadd.f32 %v573, %v574
    %v576 = vmul.f32 %v506, 0.00390625
    %v577 = vmul.f32 %v575, 0.00390625
    %v578 = vmul.f32 %v576, %v576
    %v579 = vsub.f32 %v577, %v578
    %v580 = vmax.f32 %v579, 0.0
    %v581 = vadd.f32 %v580, 1e-05
    %v582 = vrsqrt.pop %v581
    %v583 = vmul.f32 %v582, %v468
    %v584 = vmul.f32 %v576, %v583
    %v585 = vsub.f32 %v469, %v584
    %v586 = vlaneseq
    %v587 = vshrl.u32 %v586, 7
    %v588 = vsub.s32 0, %v587
    %v589 = vrot.slane %v583, %v588
    %v590 = vmul.f32 %v436, %v589
    %v591 = vmul.f32 %v437, %v589
    %v592 = vmul.f32 %v438, %v589
    %v593 = vmul.f32 %v439, %v589
    %v594 = vmul.f32 %v440, %v589
    %v595 = vmul.f32 %v441, %v589
    %v596 = vmul.f32 %v442, %v589
    %v597 = vmul.f32 %v443, %v589
    %v598 = vmul.f32 %v444, %v589
    %v599 = vmul.f32 %v445, %v589
    %v600 = vmul.f32 %v446, %v589
    %v601 = vmul.f32 %v447, %v589
    %v602 = vmul.f32 %v448, %v589
    %v603 = vmul.f32 %v449, %v589
    %v604 = vmul.f32 %v450, %v589
    %v605 = vmul.f32 %v451, %v589
    %v606 = vmul.f32 %v452, %v589
    %v607 = vmul.f32 %v453, %v589
    %v608 = vmul.f32 %v454, %v589
    %v609 = vmul.f32 %v455, %v589
    %v610 = vmul.f32 %v456, %v589
    %v611 = vmul.f32 %v457, %v589
    %v612 = vmul.f32 %v458, %v589
    %v613 = vmul.f32 %v459, %v589
    %v614 = vmul.f32 %v460, %v589
    %v615 = vmul.f32 %v461, %v589
    %v616 = vmul.f32 %v462, %v589
    %v617 = vmul.f32 %v463, %v589
    %v618 = vmul.f32 %v464, %v589
    %v619 = vmul.f32 %v465, %v589
    %v620 = vmul.f32 %v466, %v589
    %v621 = vmul.f32 %v467, %v589
    %v623 = vlaneseq
    %v624 = vshrl.u32 %v623, 7
    %v625 = vsub.s32 0, %v624
    %v626 = vrot.slane %v585, %v625
    %v628 = vadd.f32 %v590, %v626
    %v629 = vadd.f32 %v591, %v626
    %v630 = vadd.f32 %v592, %v626
    %v631 = vadd.f32 %v593, %v626
    %v632 = vadd.f32 %v594, %v626
    %v633 = vadd.f32 %v595, %v626
    %v634 = vadd.f32 %v596, %v626
    %v635 = vadd.f32 %v597, %v626
    %v636 = vadd.f32 %v598, %v626
    %v637 = vadd.f32 %v599, %v626
    %v638 = vadd.f32 %v600, %v626
    %v639 = vadd.f32 %v601, %v626
    %v640 = vadd.f32 %v602, %v626
    %v641 = vadd.f32 %v603, %v626
    %v642 = vadd.f32 %v604, %v626
    %v643 = vadd.f32 %v605, %v626
    %v644 = vadd.f32 %v606, %v626
    %v645 = vadd.f32 %v607, %v626
    %v646 = vadd.f32 %v608, %v626
    %v647 = vadd.f32 %v609, %v626
    %v648 = vadd.f32 %v610, %v626
    %v649 = vadd.f32 %v611, %v626
    %v650 = vadd.f32 %v612, %v626
    %v651 = vadd.f32 %v613, %v626
    %v652 = vadd.f32 %v614, %v626
    %v653 = vadd.f32 %v615, %v626
    %v654 = vadd.f32 %v616, %v626
    %v655 = vadd.f32 %v617, %v626
    %v656 = vadd.f32 %v618, %v626
    %v657 = vadd.f32 %v619, %v626
    %v658 = vadd.f32 %v620, %v626
    %v659 = vadd.f32 %v621, %v626
    %v660 = vpack.c.bf16 %v629, %v628
    %v661 = vpack.c.bf16 %v631, %v630
    %v662 = vpack.c.bf16 %v633, %v632
    %v663 = vpack.c.bf16 %v635, %v634
    %v664 = vpack.c.bf16 %v637, %v636
    %v665 = vpack.c.bf16 %v639, %v638
    %v666 = vpack.c.bf16 %v641, %v640
    %v667 = vpack.c.bf16 %v643, %v642
    %v668 = vpack.c.bf16 %v645, %v644
    %v669 = vpack.c.bf16 %v647, %v646
    %v670 = vpack.c.bf16 %v649, %v648
    %v671 = vpack.c.bf16 %v651, %v650
    %v672 = vpack.c.bf16 %v653, %v652
    %v673 = vpack.c.bf16 %v655, %v654
    %v674 = vpack.c.bf16 %v657, %v656
    %v675 = vpack.c.bf16 %v659, %v658
    %v676 = vld [vmem:[#allocation10] sm:$0xff]
    %v677 = vld [vmem:[#allocation10 + $0x8] sm:$0xff]
    %v678 = vld [vmem:[#allocation10 + $0x10] sm:$0xff]
    %v679 = vld [vmem:[#allocation10 + $0x18] sm:$0xff]
    %v680 = vld [vmem:[#allocation10 + $0x20] sm:$0xff]
    %v681 = vld [vmem:[#allocation10 + $0x28] sm:$0xff]
    %v682 = vld [vmem:[#allocation10 + $0x30] sm:$0xff]
    %v683 = vld [vmem:[#allocation10 + $0x38] sm:$0xff]
    %v684 = vld [vmem:[#allocation10 + $0x40] sm:$0xff]
    %v685 = vld [vmem:[#allocation10 + $0x48] sm:$0xff]
    %v686 = vld [vmem:[#allocation10 + $0x50] sm:$0xff]
    %v687 = vld [vmem:[#allocation10 + $0x58] sm:$0xff]
    %v688 = vld [vmem:[#allocation10 + $0x60] sm:$0xff]
    %v689 = vld [vmem:[#allocation10 + $0x68] sm:$0xff]
    %v690 = vld [vmem:[#allocation10 + $0x70] sm:$0xff]
    %v691 = vld [vmem:[#allocation10 + $0x78] sm:$0xff]
    %v692 = vld [vmem:[%s6] sm:$0x3]
    %v694 = vlaneseq
    %v695 = vshrl.u32 %v694, 7
    %v696 = vsub.s32 0, %v695
    %v697 = vrot.slane %v692, %v696
    %v698 = vlaneseq
    %v699 = vshrl.u32 %v698, 7
    %v700 = vsub.s32 1, %v699
    %v701 = vrot.slane %v692, %v700
    %v720 = vunpack.c.l.b16 %v676
    %v721 = vunpack.c.h.b16 %v676
    %v722 = vunpack.c.l.b16 %v677
    %v723 = vunpack.c.h.b16 %v677
    %v724 = vunpack.c.l.b16 %v678
    %v725 = vunpack.c.h.b16 %v678
    %v726 = vunpack.c.l.b16 %v679
    %v727 = vunpack.c.h.b16 %v679
    %v728 = vunpack.c.l.b16 %v680
    %v729 = vunpack.c.h.b16 %v680
    %v730 = vunpack.c.l.b16 %v681
    %v731 = vunpack.c.h.b16 %v681
    %v732 = vunpack.c.l.b16 %v682
    %v733 = vunpack.c.h.b16 %v682
    %v734 = vunpack.c.l.b16 %v683
    %v735 = vunpack.c.h.b16 %v683
    %v736 = vunpack.c.l.b16 %v684
    %v737 = vunpack.c.h.b16 %v684
    %v738 = vunpack.c.l.b16 %v685
    %v739 = vunpack.c.h.b16 %v685
    %v740 = vunpack.c.l.b16 %v686
    %v741 = vunpack.c.h.b16 %v686
    %v742 = vunpack.c.l.b16 %v687
    %v743 = vunpack.c.h.b16 %v687
    %v744 = vunpack.c.l.b16 %v688
    %v745 = vunpack.c.h.b16 %v688
    %v746 = vunpack.c.l.b16 %v689
    %v747 = vunpack.c.h.b16 %v689
    %v748 = vunpack.c.l.b16 %v690
    %v749 = vunpack.c.h.b16 %v690
    %v750 = vunpack.c.l.b16 %v691
    %v751 = vunpack.c.h.b16 %v691
    %v752 = vpack.c.b16 %v722, %v720
    %v753 = vpack.c.b16 %v723, %v721
    %v754 = vpack.c.b16 %v726, %v724
    %v755 = vpack.c.b16 %v727, %v725
    %v756 = vpack.c.b16 %v730, %v728
    %v757 = vpack.c.b16 %v731, %v729
    %v758 = vpack.c.b16 %v734, %v732
    %v759 = vpack.c.b16 %v735, %v733
    %v760 = vpack.c.b16 %v738, %v736
    %v761 = vpack.c.b16 %v739, %v737
    %v762 = vpack.c.b16 %v742, %v740
    %v763 = vpack.c.b16 %v743, %v741
    %v764 = vpack.c.b16 %v746, %v744
    %v765 = vpack.c.b16 %v747, %v745
    %v766 = vpack.c.b16 %v750, %v748
    %v767 = vpack.c.b16 %v751, %v749
    %784 = vmatprep.subr.bf16.mxu0 %v753
    %785 = vmatpush1.bf16.msra.mxu0 %v752
    %786 = vmatprep.subr.bf16.mxu0 %v755
    %787 = vmatpush1.bf16.msra.mxu0 %v754
    %788 = vmatprep.subr.bf16.mxu0 %v757
    %789 = vmatpush1.bf16.msra.mxu0 %v756
    %790 = vmatprep.subr.bf16.mxu0 %v759
    %791 = vmatpush1.bf16.msra.mxu0 %v758
    %792 = vmatprep.subr.bf16.mxu0 %v761
    %793 = vmatpush1.bf16.msra.mxu0 %v760
    %794 = vmatprep.subr.bf16.mxu0 %v763
    %795 = vmatpush1.bf16.msra.mxu0 %v762
    %796 = vmatprep.subr.bf16.mxu0 %v765
    %797 = vmatpush1.bf16.msra.mxu0 %v764
    %798 = vmatprep.subr.bf16.mxu0 %v767
    %799 = vmatpush1.bf16.msra.mxu0 %v766
    %800 = vmatprep.subr.bf16.mxu0 0
    %801 = vmatpush1.bf16.msra.mxu0 0
    %802 = vmatprep.subr.bf16.mxu0 0
    %803 = vmatpush1.bf16.msra.mxu0 0
    %804 = vmatprep.subr.bf16.mxu0 0
    %805 = vmatpush1.bf16.msra.mxu0 0
    %806 = vmatprep.subr.bf16.mxu0 0
    %807 = vmatpush1.bf16.msra.mxu0 0
    %808 = vmatprep.subr.bf16.mxu0 0
    %809 = vmatpush1.bf16.msra.mxu0 0
    %810 = vmatprep.subr.bf16.mxu0 0
    %811 = vmatpush1.bf16.msra.mxu0 0
    %812 = vmatprep.subr.bf16.mxu0 0
    %813 = vmatpush1.bf16.msra.mxu0 0
    %814 = vmatprep.subr.bf16.mxu0 0
    %815 = vmatpush1.bf16.msra.mxu0 0
    %816 = vmatprep.mubr.bf16.mxu0 0
    %817 = vmatmul.mubr.bf16.gmra.mrb[0].mxu0 %v660
    %v818 = vpop.f32.mrb[0].mxu0
    %v819 = vadd.f32 %v697, %v818
    %v820 = vpop.f32.mrb[0].mxu0
    %v821 = vadd.f32 %v701, %v820
    %v822 = vpop.f32.mrb[0].mxu0
    %v823 = vadd.f32 %v697, %v822
    %v824 = vpop.f32.mrb[0].mxu0
    %v825 = vadd.f32 %v701, %v824
    %826 = vmatprep.mubr.bf16.mxu0 0
    %827 = vmatmul.mubr.bf16.gmra.mrb[0].mxu0 %v661
    %v828 = vpop.f32.mrb[0].mxu0
    %v829 = vadd.f32 %v697, %v828
    %v830 = vpop.f32.mrb[0].mxu0
    %v831 = vadd.f32 %v701, %v830
    %v832 = vpop.f32.mrb[0].mxu0
    %v833 = vadd.f32 %v697, %v832
    %v834 = vpop.f32.mrb[0].mxu0
    %v835 = vadd.f32 %v701, %v834
    %836 = vmatprep.mubr.bf16.mxu0 0
    %837 = vmatmul.mubr.bf16.gmra.mrb[0].mxu0 %v662
    %v838 = vpop.f32.mrb[0].mxu0
    %v839 = vadd.f32 %v697, %v838
    %v840 = vpop.f32.mrb[0].mxu0
    %v841 = vadd.f32 %v701, %v840
    %v842 = vpop.f32.mrb[0].mxu0
    %v843 = vadd.f32 %v697, %v842
    %v844 = vpop.f32.mrb[0].mxu0
    %v845 = vadd.f32 %v701, %v844
    %846 = vmatprep.mubr.bf16.mxu0 0
    %847 = vmatmul.mubr.bf16.gmra.mrb[0].mxu0 %v663
    %v848 = vpop.f32.mrb[0].mxu0
    %v849 = vadd.f32 %v697, %v848
    %v850 = vpop.f32.mrb[0].mxu0
    %v851 = vadd.f32 %v701, %v850
    %v852 = vpop.f32.mrb[0].mxu0
    %v853 = vadd.f32 %v697, %v852
    %v854 = vpop.f32.mrb[0].mxu0
    %v855 = vadd.f32 %v701, %v854
    %856 = vmatprep.mubr.bf16.mxu0 0
    %857 = vmatmul.mubr.bf16.gmra.mrb[0].mxu0 %v664
    %v858 = vpop.f32.mrb[0].mxu0
    %v859 = vadd.f32 %v697, %v858
    %v860 = vpop.f32.mrb[0].mxu0
    %v861 = vadd.f32 %v701, %v860
    %v862 = vpop.f32.mrb[0].mxu0
    %v863 = vadd.f32 %v697, %v862
    %v864 = vpop.f32.mrb[0].mxu0
    %v865 = vadd.f32 %v701, %v864
    %866 = vmatprep.mubr.bf16.mxu0 0
    %867 = vmatmul.mubr.bf16.gmra.mrb[0].mxu0 %v665
    %v868 = vpop.f32.mrb[0].mxu0
    %v869 = vadd.f32 %v697, %v868
    %v870 = vpop.f32.mrb[0].mxu0
    %v871 = vadd.f32 %v701, %v870
    %v872 = vpop.f32.mrb[0].mxu0
    %v873 = vadd.f32 %v697, %v872
    %v874 = vpop.f32.mrb[0].mxu0
    %v875 = vadd.f32 %v701, %v874
    %876 = vmatprep.mubr.bf16.mxu0 0
    %877 = vmatmul.mubr.bf16.gmra.mrb[0].mxu0 %v666
    %v878 = vpop.f32.mrb[0].mxu0
    %v879 = vadd.f32 %v697, %v878
    %v880 = vpop.f32.mrb[0].mxu0
    %v881 = vadd.f32 %v701, %v880
    %v882 = vpop.f32.mrb[0].mxu0
    %v883 = vadd.f32 %v697, %v882
    %v884 = vpop.f32.mrb[0].mxu0
    %v885 = vadd.f32 %v701, %v884
    %886 = vmatprep.mubr.bf16.mxu0 0
    %887 = vmatmul.mubr.bf16.gmra.mrb[0].mxu0 %v667
    %v888 = vpop.f32.mrb[0].mxu0
    %v889 = vadd.f32 %v697, %v888
    %v890 = vpop.f32.mrb[0].mxu0
    %v891 = vadd.f32 %v701, %v890
    %v892 = vpop.f32.mrb[0].mxu0
    %v893 = vadd.f32 %v697, %v892
    %v894 = vpop.f32.mrb[0].mxu0
    %v895 = vadd.f32 %v701, %v894
    %896 = vmatprep.mubr.bf16.mxu0 0
    %897 = vmatmul.mubr.bf16.gmra.mrb[0].mxu0 %v668
    %v898 = vpop.f32.mrb[0].mxu0
    %v899 = vadd.f32 %v697, %v898
    %v900 = vpop.f32.mrb[0].mxu0
    %v901 = vadd.f32 %v701, %v900
    %v902 = vpop.f32.mrb[0].mxu0
    %v903 = vadd.f32 %v697, %v902
    %v904 = vpop.f32.mrb[0].mxu0
    %v905 = vadd.f32 %v701, %v904
    %906 = vmatprep.mubr.bf16.mxu0 0
    %907 = vmatmul.mubr.bf16.gmra.mrb[0].mxu0 %v669
    %v908 = vpop.f32.mrb[0].mxu0
    %v909 = vadd.f32 %v697, %v908
    %v910 = vpop.f32.mrb[0].mxu0
    %v911 = vadd.f32 %v701, %v910
    %v912 = vpop.f32.mrb[0].mxu0
    %v913 = vadd.f32 %v697, %v912
    %v914 = vpop.f32.mrb[0].mxu0
    %v915 = vadd.f32 %v701, %v914
    %916 = vmatprep.mubr.bf16.mxu0 0
    %917 = vmatmul.mubr.bf16.gmra.mrb[0].mxu0 %v670
    %v918 = vpop.f32.mrb[0].mxu0
    %v919 = vadd.f32 %v697, %v918
    %v920 = vpop.f32.mrb[0].mxu0
    %v921 = vadd.f32 %v701, %v920
    %v922 = vpop.f32.mrb[0].mxu0
    %v923 = vadd.f32 %v697, %v922
    %v924 = vpop.f32.mrb[0].mxu0
    %v925 = vadd.f32 %v701, %v924
    %926 = vmatprep.mubr.bf16.mxu0 0
    %927 = vmatmul.mubr.bf16.gmra.mrb[0].mxu0 %v671
    %v928 = vpop.f32.mrb[0].mxu0
    %v929 = vadd.f32 %v697, %v928
    %v930 = vpop.f32.mrb[0].mxu0
    %v931 = vadd.f32 %v701, %v930
    %v932 = vpop.f32.mrb[0].mxu0
    %v933 = vadd.f32 %v697, %v932
    %v934 = vpop.f32.mrb[0].mxu0
    %v935 = vadd.f32 %v701, %v934
    %936 = vmatprep.mubr.bf16.mxu0 0
    %937 = vmatmul.mubr.bf16.gmra.mrb[0].mxu0 %v672
    %v938 = vpop.f32.mrb[0].mxu0
    %v939 = vadd.f32 %v697, %v938
    %v940 = vpop.f32.mrb[0].mxu0
    %v941 = vadd.f32 %v701, %v940
    %v942 = vpop.f32.mrb[0].mxu0
    %v943 = vadd.f32 %v697, %v942
    %v944 = vpop.f32.mrb[0].mxu0
    %v945 = vadd.f32 %v701, %v944
    %946 = vmatprep.mubr.bf16.mxu0 0
    %947 = vmatmul.mubr.bf16.gmra.mrb[0].mxu0 %v673
    %v948 = vpop.f32.mrb[0].mxu0
    %v949 = vadd.f32 %v697, %v948
    %v950 = vpop.f32.mrb[0].mxu0
    %v951 = vadd.f32 %v701, %v950
    %v952 = vpop.f32.mrb[0].mxu0
    %v953 = vadd.f32 %v697, %v952
    %v954 = vpop.f32.mrb[0].mxu0
    %v955 = vadd.f32 %v701, %v954
    %956 = vmatprep.mubr.bf16.mxu0 0
    %957 = vmatmul.mubr.bf16.gmra.mrb[0].mxu0 %v674
    %v958 = vpop.f32.mrb[0].mxu0
    %v959 = vadd.f32 %v697, %v958
    %v960 = vpop.f32.mrb[0].mxu0
    %v961 = vadd.f32 %v701, %v960
    %v962 = vpop.f32.mrb[0].mxu0
    %v963 = vadd.f32 %v697, %v962
    %v964 = vpop.f32.mrb[0].mxu0
    %v965 = vadd.f32 %v701, %v964
    %966 = vmatprep.mubr.bf16.mxu0 0
    %967 = vmatmul.mubr.bf16.gmra.mrb[0].mxu0 %v675
    %v968 = vpop.f32.mrb[0].mxu0
    %v969 = vadd.f32 %v697, %v968
    %v970 = vpop.f32.mrb[0].mxu0
    %v971 = vadd.f32 %v701, %v970
    %v972 = vpop.f32.mrb[0].mxu0
    %v973 = vadd.f32 %v697, %v972
    %v974 = vpop.f32.mrb[0].mxu0
    %v975 = vadd.f32 %v701, %v974
    %976 = vdwg.mxu0
    %v977 = vmax.f32 %v819, 0.0
    %v978 = vmax.f32 %v821, 0.0
    %v979 = vmax.f32 %v823, 0.0
    %v980 = vmax.f32 %v825, 0.0
    %v981 = vmax.f32 %v829, 0.0
    %v982 = vmax.f32 %v831, 0.0
    %v983 = vmax.f32 %v833, 0.0
    %v984 = vmax.f32 %v835, 0.0
    %v985 = vmax.f32 %v839, 0.0
    %v986 = vmax.f32 %v841, 0.0
    %v987 = vmax.f32 %v843, 0.0
    %v988 = vmax.f32 %v845, 0.0
    %v989 = vmax.f32 %v849, 0.0
    %v990 = vmax.f32 %v851, 0.0
    %v991 = vmax.f32 %v853, 0.0
    %v992 = vmax.f32 %v855, 0.0
    %v993 = vmax.f32 %v859, 0.0
    %v994 = vmax.f32 %v861, 0.0
    %v995 = vmax.f32 %v863, 0.0
    %v996 = vmax.f32 %v865, 0.0
    %v997 = vmax.f32 %v869, 0.0
    %v998 = vmax.f32 %v871, 0.0
    %v999 = vmax.f32 %v873, 0.0
    %v1000 = vmax.f32 %v875, 0.0
    %v1001 = vmax.f32 %v879, 0.0
    %v1002 = vmax.f32 %v881, 0.0
    %v1003 = vmax.f32 %v883, 0.0
    %v1004 = vmax.f32 %v885, 0.0
    %v1005 = vmax.f32 %v889, 0.0
    %v1006 = vmax.f32 %v891, 0.0
    %v1007 = vmax.f32 %v893, 0.0
    %v1008 = vmax.f32 %v895, 0.0
    %v1009 = vmax.f32 %v899, 0.0
    %v1010 = vmax.f32 %v901, 0.0
    %v1011 = vmax.f32 %v903, 0.0
    %v1012 = vmax.f32 %v905, 0.0
    %v1013 = vmax.f32 %v909, 0.0
    %v1014 = vmax.f32 %v911, 0.0
    %v1015 = vmax.f32 %v913, 0.0
    %v1016 = vmax.f32 %v915, 0.0
    %v1017 = vmax.f32 %v919, 0.0
    %v1018 = vmax.f32 %v921, 0.0
    %v1019 = vmax.f32 %v923, 0.0
    %v1020 = vmax.f32 %v925, 0.0
    %v1021 = vmax.f32 %v929, 0.0
    %v1022 = vmax.f32 %v931, 0.0
    %v1023 = vmax.f32 %v933, 0.0
    %v1024 = vmax.f32 %v935, 0.0
    %v1025 = vmax.f32 %v939, 0.0
    %v1026 = vmax.f32 %v941, 0.0
    %v1027 = vmax.f32 %v943, 0.0
    %v1028 = vmax.f32 %v945, 0.0
    %v1029 = vmax.f32 %v949, 0.0
    %v1030 = vmax.f32 %v951, 0.0
    %v1031 = vmax.f32 %v953, 0.0
    %v1032 = vmax.f32 %v955, 0.0
    %v1033 = vmax.f32 %v959, 0.0
    %v1034 = vmax.f32 %v961, 0.0
    %v1035 = vmax.f32 %v963, 0.0
    %v1036 = vmax.f32 %v965, 0.0
    %v1037 = vmax.f32 %v969, 0.0
    %v1038 = vmax.f32 %v971, 0.0
    %v1039 = vmax.f32 %v973, 0.0
    %v1040 = vmax.f32 %v975, 0.0
    %v1041 = vld [vmem:[#allocation11] sm:$0x3]
    %v1042 = vld [vmem:[#allocation13] sm:$0x3]
    %v1043 = vadd.f32 %v977, %v979
    %v1044 = vadd.f32 %v1043, %v981
    %v1045 = vadd.f32 %v1044, %v983
    %v1046 = vadd.f32 %v1045, %v985
    %v1047 = vadd.f32 %v1046, %v987
    %v1048 = vadd.f32 %v1047, %v989
    %v1049 = vadd.f32 %v1048, %v991
    %v1050 = vadd.f32 %v1049, %v993
    %v1051 = vadd.f32 %v1050, %v995
    %v1052 = vadd.f32 %v1051, %v997
    %v1053 = vadd.f32 %v1052, %v999
    %v1054 = vadd.f32 %v1053, %v1001
    %v1055 = vadd.f32 %v1054, %v1003
    %v1056 = vadd.f32 %v1055, %v1005
    %v1057 = vadd.f32 %v1056, %v1007
    %v1058 = vadd.f32 %v1057, %v1009
    %v1059 = vadd.f32 %v1058, %v1011
    %v1060 = vadd.f32 %v1059, %v1013
    %v1061 = vadd.f32 %v1060, %v1015
    %v1062 = vadd.f32 %v1061, %v1017
    %v1063 = vadd.f32 %v1062, %v1019
    %v1064 = vadd.f32 %v1063, %v1021
    %v1065 = vadd.f32 %v1064, %v1023
    %v1066 = vadd.f32 %v1065, %v1025
    %v1067 = vadd.f32 %v1066, %v1027
    %v1068 = vadd.f32 %v1067, %v1029
    %v1069 = vadd.f32 %v1068, %v1031
    %v1070 = vadd.f32 %v1069, %v1033
    %v1071 = vadd.f32 %v1070, %v1035
    %v1072 = vadd.f32 %v1071, %v1037
    %v1073 = vadd.f32 %v1072, %v1039
    %v1074 = vrot.slane %v1073, 4
    %v1075 = vadd.f32 %v1073, %v1074
    %v1076 = vrot.slane %v1075, 2
    %v1077 = vadd.f32 %v1075, %v1076
    %v1078 = vrot.slane %v1077, 1
    %v1079 = vadd.f32 %v1077, %v1078
    %v1080 = vadd.f32 %v978, %v980
    %v1081 = vadd.f32 %v1080, %v982
    %v1082 = vadd.f32 %v1081, %v984
    %v1083 = vadd.f32 %v1082, %v986
    %v1084 = vadd.f32 %v1083, %v988
    %v1085 = vadd.f32 %v1084, %v990
    %v1086 = vadd.f32 %v1085, %v992
    %v1087 = vadd.f32 %v1086, %v994
    %v1088 = vadd.f32 %v1087, %v996
    %v1089 = vadd.f32 %v1088, %v998
    %v1090 = vadd.f32 %v1089, %v1000
    %v1091 = vadd.f32 %v1090, %v1002
    %v1092 = vadd.f32 %v1091, %v1004
    %v1093 = vadd.f32 %v1092, %v1006
    %v1094 = vadd.f32 %v1093, %v1008
    %v1095 = vadd.f32 %v1094, %v1010
    %v1096 = vadd.f32 %v1095, %v1012
    %v1097 = vadd.f32 %v1096, %v1014
    %v1098 = vadd.f32 %v1097, %v1016
    %v1099 = vadd.f32 %v1098, %v1018
    %v1100 = vadd.f32 %v1099, %v1020
    %v1101 = vadd.f32 %v1100, %v1022
    %v1102 = vadd.f32 %v1101, %v1024
    %v1103 = vadd.f32 %v1102, %v1026
    %v1104 = vadd.f32 %v1103, %v1028
    %v1105 = vadd.f32 %v1104, %v1030
    %v1106 = vadd.f32 %v1105, %v1032
    %v1107 = vadd.f32 %v1106, %v1034
    %v1108 = vadd.f32 %v1107, %v1036
    %v1109 = vadd.f32 %v1108, %v1038
    %v1110 = vadd.f32 %v1109, %v1040
    %v1111 = vrot.slane %v1110, 4
    %v1112 = vadd.f32 %v1110, %v1111
    %v1113 = vrot.slane %v1112, 2
    %v1114 = vadd.f32 %v1112, %v1113
    %v1115 = vrot.slane %v1114, 1
    %v1116 = vadd.f32 %v1114, %v1115
    %v1117 = vmul.f32 %v977, %v977
    %v1118 = vmul.f32 %v978, %v978
    %v1119 = vmul.f32 %v979, %v979
    %v1120 = vmul.f32 %v980, %v980
    %v1121 = vmul.f32 %v981, %v981
    %v1122 = vmul.f32 %v982, %v982
    %v1123 = vmul.f32 %v983, %v983
    %v1124 = vmul.f32 %v984, %v984
    %v1125 = vmul.f32 %v985, %v985
    %v1126 = vmul.f32 %v986, %v986
    %v1127 = vmul.f32 %v987, %v987
    %v1128 = vmul.f32 %v988, %v988
    %v1129 = vmul.f32 %v989, %v989
    %v1130 = vmul.f32 %v990, %v990
    %v1131 = vmul.f32 %v991, %v991
    %v1132 = vmul.f32 %v992, %v992
    %v1133 = vmul.f32 %v993, %v993
    %v1134 = vmul.f32 %v994, %v994
    %v1135 = vmul.f32 %v995, %v995
    %v1136 = vmul.f32 %v996, %v996
    %v1137 = vmul.f32 %v997, %v997
    %v1138 = vmul.f32 %v998, %v998
    %v1139 = vmul.f32 %v999, %v999
    %v1140 = vmul.f32 %v1000, %v1000
    %v1141 = vmul.f32 %v1001, %v1001
    %v1142 = vmul.f32 %v1002, %v1002
    %v1143 = vmul.f32 %v1003, %v1003
    %v1144 = vmul.f32 %v1004, %v1004
    %v1145 = vmul.f32 %v1005, %v1005
    %v1146 = vmul.f32 %v1006, %v1006
    %v1147 = vmul.f32 %v1007, %v1007
    %v1148 = vmul.f32 %v1008, %v1008
    %v1149 = vmul.f32 %v1009, %v1009
    %v1150 = vmul.f32 %v1010, %v1010
    %v1151 = vmul.f32 %v1011, %v1011
    %v1152 = vmul.f32 %v1012, %v1012
    %v1153 = vmul.f32 %v1013, %v1013
    %v1154 = vmul.f32 %v1014, %v1014
    %v1155 = vmul.f32 %v1015, %v1015
    %v1156 = vmul.f32 %v1016, %v1016
    %v1157 = vmul.f32 %v1017, %v1017
    %v1158 = vmul.f32 %v1018, %v1018
    %v1159 = vmul.f32 %v1019, %v1019
    %v1160 = vmul.f32 %v1020, %v1020
    %v1161 = vmul.f32 %v1021, %v1021
    %v1162 = vmul.f32 %v1022, %v1022
    %v1163 = vmul.f32 %v1023, %v1023
    %v1164 = vmul.f32 %v1024, %v1024
    %v1165 = vmul.f32 %v1025, %v1025
    %v1166 = vmul.f32 %v1026, %v1026
    %v1167 = vmul.f32 %v1027, %v1027
    %v1168 = vmul.f32 %v1028, %v1028
    %v1169 = vmul.f32 %v1029, %v1029
    %v1170 = vmul.f32 %v1030, %v1030
    %v1171 = vmul.f32 %v1031, %v1031
    %v1172 = vmul.f32 %v1032, %v1032
    %v1173 = vmul.f32 %v1033, %v1033
    %v1174 = vmul.f32 %v1034, %v1034
    %v1175 = vmul.f32 %v1035, %v1035
    %v1176 = vmul.f32 %v1036, %v1036
    %v1177 = vmul.f32 %v1037, %v1037
    %v1178 = vmul.f32 %v1038, %v1038
    %v1179 = vmul.f32 %v1039, %v1039
    %v1180 = vmul.f32 %v1040, %v1040
    %v1181 = vadd.f32 %v1117, %v1119
    %v1182 = vadd.f32 %v1181, %v1121
    %v1183 = vadd.f32 %v1182, %v1123
    %v1184 = vadd.f32 %v1183, %v1125
    %v1185 = vadd.f32 %v1184, %v1127
    %v1186 = vadd.f32 %v1185, %v1129
    %v1187 = vadd.f32 %v1186, %v1131
    %v1188 = vadd.f32 %v1187, %v1133
    %v1189 = vadd.f32 %v1188, %v1135
    %v1190 = vadd.f32 %v1189, %v1137
    %v1191 = vadd.f32 %v1190, %v1139
    %v1192 = vadd.f32 %v1191, %v1141
    %v1193 = vadd.f32 %v1192, %v1143
    %v1194 = vadd.f32 %v1193, %v1145
    %v1195 = vadd.f32 %v1194, %v1147
    %v1196 = vadd.f32 %v1195, %v1149
    %v1197 = vadd.f32 %v1196, %v1151
    %v1198 = vadd.f32 %v1197, %v1153
    %v1199 = vadd.f32 %v1198, %v1155
    %v1200 = vadd.f32 %v1199, %v1157
    %v1201 = vadd.f32 %v1200, %v1159
    %v1202 = vadd.f32 %v1201, %v1161
    %v1203 = vadd.f32 %v1202, %v1163
    %v1204 = vadd.f32 %v1203, %v1165
    %v1205 = vadd.f32 %v1204, %v1167
    %v1206 = vadd.f32 %v1205, %v1169
    %v1207 = vadd.f32 %v1206, %v1171
    %v1208 = vadd.f32 %v1207, %v1173
    %v1209 = vadd.f32 %v1208, %v1175
    %v1210 = vadd.f32 %v1209, %v1177
    %v1211 = vadd.f32 %v1210, %v1179
    %v1212 = vrot.slane %v1211, 4
    %v1213 = vadd.f32 %v1211, %v1212
    %v1214 = vrot.slane %v1213, 2
    %v1215 = vadd.f32 %v1213, %v1214
    %v1216 = vrot.slane %v1215, 1
    %v1217 = vadd.f32 %v1215, %v1216
    %v1218 = vadd.f32 %v1118, %v1120
    %v1219 = vadd.f32 %v1218, %v1122
    %v1220 = vadd.f32 %v1219, %v1124
    %v1221 = vadd.f32 %v1220, %v1126
    %v1222 = vadd.f32 %v1221, %v1128
    %v1223 = vadd.f32 %v1222, %v1130
    %v1224 = vadd.f32 %v1223, %v1132
    %v1225 = vadd.f32 %v1224, %v1134
    %v1226 = vadd.f32 %v1225, %v1136
    %v1227 = vadd.f32 %v1226, %v1138
    %v1228 = vadd.f32 %v1227, %v1140
    %v1229 = vadd.f32 %v1228, %v1142
    %v1230 = vadd.f32 %v1229, %v1144
    %v1231 = vadd.f32 %v1230, %v1146
    %v1232 = vadd.f32 %v1231, %v1148
    %v1233 = vadd.f32 %v1232, %v1150
    %v1234 = vadd.f32 %v1233, %v1152
    %v1235 = vadd.f32 %v1234, %v1154
    %v1236 = vadd.f32 %v1235, %v1156
    %v1237 = vadd.f32 %v1236, %v1158
    %v1238 = vadd.f32 %v1237, %v1160
    %v1239 = vadd.f32 %v1238, %v1162
    %v1240 = vadd.f32 %v1239, %v1164
    %v1241 = vadd.f32 %v1240, %v1166
    %v1242 = vadd.f32 %v1241, %v1168
    %v1243 = vadd.f32 %v1242, %v1170
    %v1244 = vadd.f32 %v1243, %v1172
    %v1245 = vadd.f32 %v1244, %v1174
    %v1246 = vadd.f32 %v1245, %v1176
    %v1247 = vadd.f32 %v1246, %v1178
    %v1248 = vadd.f32 %v1247, %v1180
    %v1249 = vrot.slane %v1248, 4
    %v1250 = vadd.f32 %v1248, %v1249
    %v1251 = vrot.slane %v1250, 2
    %v1252 = vadd.f32 %v1250, %v1251
    %v1253 = vrot.slane %v1252, 1
    %v1254 = vadd.f32 %v1252, %v1253
    %v1255 = vmul.f32 %v1079, 0.00390625
    %v1256 = vmul.f32 %v1116, 0.00390625
    %v1257 = vmul.f32 %v1217, 0.00390625
    %v1258 = vmul.f32 %v1254, 0.00390625
    %v1259 = vmul.f32 %v1255, %v1255
    %v1260 = vmul.f32 %v1256, %v1256
    %v1261 = vsub.f32 %v1257, %v1259
    %v1262 = vsub.f32 %v1258, %v1260
    %v1263 = vmax.f32 %v1261, 0.0
    %v1264 = vmax.f32 %v1262, 0.0
    %v1265 = vadd.f32 %v1263, 1e-05
    %v1266 = vadd.f32 %v1264, 1e-05
    %v1267 = vrsqrt.pop %v1265
    %v1268 = vrsqrt.pop %v1266
    %v1270 = vlaneseq
    %v1271 = vshrl.u32 %v1270, 7
    %v1272 = vsub.s32 0, %v1271
    %v1273 = vrot.slane %v1041, %v1272
    %v1274 = vlaneseq
    %v1275 = vshrl.u32 %v1274, 7
    %v1276 = vsub.s32 1, %v1275
    %v1277 = vrot.slane %v1041, %v1276
    %v1280 = vmul.f32 %v1267, %v1273
    %v1281 = vmul.f32 %v1268, %v1277
    %v1282 = vmul.f32 %v1255, %v1280
    %v1283 = vmul.f32 %v1256, %v1281
    %v1286 = vcombine.low %v1282, %v1283
    %v1288 = vunpack.c.l.s4 1966171168
    %v1289 = vunpack.c.0.s8 %v1288
    %v1290 = vlaneseq
    %v1291 = vshrl.u32 %v1290, 7
    %v1292 = vsub.s32 %v1289, %v1291
    %v1293 = vrot.slane %v1286, %v1292
    %v1295 = vunpack.c.l.s4 1966171168
    %v1296 = vunpack.c.0.s8 %v1295
    %v1297 = vlaneseq
    %v1298 = vshrl.u32 %v1297, 7
    %v1299 = vsub.s32 %v1296, %v1298
    %v1300 = vrot.slane %v1293, %v1299
    %v1302 = vsub.f32 %v1042, %v1300
    %v1303 = vlaneseq
    %v1304 = vshrl.u32 %v1303, 7
    %v1305 = vsub.s32 0, %v1304
    %v1306 = vrot.slane %v1280, %v1305
    %v1307 = vlaneseq
    %v1308 = vshrl.u32 %v1307, 7
    %v1309 = vsub.s32 0, %v1308
    %v1310 = vrot.slane %v1281, %v1309
    %v1311 = vmul.f32 %v977, %v1306
    %v1312 = vmul.f32 %v978, %v1310
    %v1313 = vmul.f32 %v979, %v1306
    %v1314 = vmul.f32 %v980, %v1310
    %v1315 = vmul.f32 %v981, %v1306
    %v1316 = vmul.f32 %v982, %v1310
    %v1317 = vmul.f32 %v983, %v1306
    %v1318 = vmul.f32 %v984, %v1310
    %v1319 = vmul.f32 %v985, %v1306
    %v1320 = vmul.f32 %v986, %v1310
    %v1321 = vmul.f32 %v987, %v1306
    %v1322 = vmul.f32 %v988, %v1310
    %v1323 = vmul.f32 %v989, %v1306
    %v1324 = vmul.f32 %v990, %v1310
    %v1325 = vmul.f32 %v991, %v1306
    %v1326 = vmul.f32 %v992, %v1310
    %v1327 = vmul.f32 %v993, %v1306
    %v1328 = vmul.f32 %v994, %v1310
    %v1329 = vmul.f32 %v995, %v1306
    %v1330 = vmul.f32 %v996, %v1310
    %v1331 = vmul.f32 %v997, %v1306
    %v1332 = vmul.f32 %v998, %v1310
    %v1333 = vmul.f32 %v999, %v1306
    %v1334 = vmul.f32 %v1000, %v1310
    %v1335 = vmul.f32 %v1001, %v1306
    %v1336 = vmul.f32 %v1002, %v1310
    %v1337 = vmul.f32 %v1003, %v1306
    %v1338 = vmul.f32 %v1004, %v1310
    %v1339 = vmul.f32 %v1005, %v1306
    %v1340 = vmul.f32 %v1006, %v1310
    %v1341 = vmul.f32 %v1007, %v1306
    %v1342 = vmul.f32 %v1008, %v1310
    %v1343 = vmul.f32 %v1009, %v1306
    %v1344 = vmul.f32 %v1010, %v1310
    %v1345 = vmul.f32 %v1011, %v1306
    %v1346 = vmul.f32 %v1012, %v1310
    %v1347 = vmul.f32 %v1013, %v1306
    %v1348 = vmul.f32 %v1014, %v1310
    %v1349 = vmul.f32 %v1015, %v1306
    %v1350 = vmul.f32 %v1016, %v1310
    %v1351 = vmul.f32 %v1017, %v1306
    %v1352 = vmul.f32 %v1018, %v1310
    %v1353 = vmul.f32 %v1019, %v1306
    %v1354 = vmul.f32 %v1020, %v1310
    %v1355 = vmul.f32 %v1021, %v1306
    %v1356 = vmul.f32 %v1022, %v1310
    %v1357 = vmul.f32 %v1023, %v1306
    %v1358 = vmul.f32 %v1024, %v1310
    %v1359 = vmul.f32 %v1025, %v1306
    %v1360 = vmul.f32 %v1026, %v1310
    %v1361 = vmul.f32 %v1027, %v1306
    %v1362 = vmul.f32 %v1028, %v1310
    %v1363 = vmul.f32 %v1029, %v1306
    %v1364 = vmul.f32 %v1030, %v1310
    %v1365 = vmul.f32 %v1031, %v1306
    %v1366 = vmul.f32 %v1032, %v1310
    %v1367 = vmul.f32 %v1033, %v1306
    %v1368 = vmul.f32 %v1034, %v1310
    %v1369 = vmul.f32 %v1035, %v1306
    %v1370 = vmul.f32 %v1036, %v1310
    %v1371 = vmul.f32 %v1037, %v1306
    %v1372 = vmul.f32 %v1038, %v1310
    %v1373 = vmul.f32 %v1039, %v1306
    %v1374 = vmul.f32 %v1040, %v1310
    %v1376 = vlaneseq
    %v1377 = vshrl.u32 %v1376, 7
    %v1378 = vsub.s32 0, %v1377
    %v1379 = vrot.slane %v1302, %v1378
    %v1380 = vlaneseq
    %v1381 = vshrl.u32 %v1380, 7
    %v1382 = vsub.s32 1, %v1381
    %v1383 = vrot.slane %v1302, %v1382
    %v1386 = vadd.f32 %v1311, %v1379
    %v1387 = vadd.f32 %v1312, %v1383
    %v1388 = vadd.f32 %v1313, %v1379
    %v1389 = vadd.f32 %v1314, %v1383
    %v1390 = vadd.f32 %v1315, %v1379
    %v1391 = vadd.f32 %v1316, %v1383
    %v1392 = vadd.f32 %v1317, %v1379
    %v1393 = vadd.f32 %v1318, %v1383
    %v1394 = vadd.f32 %v1319, %v1379
    %v1395 = vadd.f32 %v1320, %v1383
    %v1396 = vadd.f32 %v1321, %v1379
    %v1397 = vadd.f32 %v1322, %v1383
    %v1398 = vadd.f32 %v1323, %v1379
    %v1399 = vadd.f32 %v1324, %v1383
    %v1400 = vadd.f32 %v1325, %v1379
    %v1401 = vadd.f32 %v1326, %v1383
    %v1402 = vadd.f32 %v1327, %v1379
    %v1403 = vadd.f32 %v1328, %v1383
    %v1404 = vadd.f32 %v1329, %v1379
    %v1405 = vadd.f32 %v1330, %v1383
    %v1406 = vadd.f32 %v1331, %v1379
    %v1407 = vadd.f32 %v1332, %v1383
    %v1408 = vadd.f32 %v1333, %v1379
    %v1409 = vadd.f32 %v1334, %v1383
    %v1410 = vadd.f32 %v1335, %v1379
    %v1411 = vadd.f32 %v1336, %v1383
    %v1412 = vadd.f32 %v1337, %v1379
    %v1413 = vadd.f32 %v1338, %v1383
    %v1414 = vadd.f32 %v1339, %v1379
    %v1415 = vadd.f32 %v1340, %v1383
    %v1416 = vadd.f32 %v1341, %v1379
    %v1417 = vadd.f32 %v1342, %v1383
    %v1418 = vadd.f32 %v1343, %v1379
    %v1419 = vadd.f32 %v1344, %v1383
    %v1420 = vadd.f32 %v1345, %v1379
    %v1421 = vadd.f32 %v1346, %v1383
    %v1422 = vadd.f32 %v1347, %v1379
    %v1423 = vadd.f32 %v1348, %v1383
    %v1424 = vadd.f32 %v1349, %v1379
    %v1425 = vadd.f32 %v1350, %v1383
    %v1426 = vadd.f32 %v1351, %v1379
    %v1427 = vadd.f32 %v1352, %v1383
    %v1428 = vadd.f32 %v1353, %v1379
    %v1429 = vadd.f32 %v1354, %v1383
    %v1430 = vadd.f32 %v1355, %v1379
    %v1431 = vadd.f32 %v1356, %v1383
    %v1432 = vadd.f32 %v1357, %v1379
    %v1433 = vadd.f32 %v1358, %v1383
    %v1434 = vadd.f32 %v1359, %v1379
    %v1435 = vadd.f32 %v1360, %v1383
    %v1436 = vadd.f32 %v1361, %v1379
    %v1437 = vadd.f32 %v1362, %v1383
    %v1438 = vadd.f32 %v1363, %v1379
    %v1439 = vadd.f32 %v1364, %v1383
    %v1440 = vadd.f32 %v1365, %v1379
    %v1441 = vadd.f32 %v1366, %v1383
    %v1442 = vadd.f32 %v1367, %v1379
    %v1443 = vadd.f32 %v1368, %v1383
    %v1444 = vadd.f32 %v1369, %v1379
    %v1445 = vadd.f32 %v1370, %v1383
    %v1446 = vadd.f32 %v1371, %v1379
    %v1447 = vadd.f32 %v1372, %v1383
    %v1448 = vadd.f32 %v1373, %v1379
    %v1449 = vadd.f32 %v1374, %v1383
    %v1450 = vpack.c.bf16 %v1388, %v1386
    %v1451 = vpack.c.bf16 %v1389, %v1387
    %v1452 = vpack.c.bf16 %v1392, %v1390
    %v1453 = vpack.c.bf16 %v1393, %v1391
    %v1454 = vpack.c.bf16 %v1396, %v1394
    %v1455 = vpack.c.bf16 %v1397, %v1395
    %v1456 = vpack.c.bf16 %v1400, %v1398
    %v1457 = vpack.c.bf16 %v1401, %v1399
    %v1458 = vpack.c.bf16 %v1404, %v1402
    %v1459 = vpack.c.bf16 %v1405, %v1403
    %v1460 = vpack.c.bf16 %v1408, %v1406
    %v1461 = vpack.c.bf16 %v1409, %v1407
    %v1462 = vpack.c.bf16 %v1412, %v1410
    %v1463 = vpack.c.bf16 %v1413, %v1411
    %v1464 = vpack.c.bf16 %v1416, %v1414
    %v1465 = vpack.c.bf16 %v1417, %v1415
    %v1466 = vpack.c.bf16 %v1420, %v1418
    %v1467 = vpack.c.bf16 %v1421, %v1419
    %v1468 = vpack.c.bf16 %v1424, %v1422
    %v1469 = vpack.c.bf16 %v1425, %v1423
    %v1470 = vpack.c.bf16 %v1428, %v1426
    %v1471 = vpack.c.bf16 %v1429, %v1427
    %v1472 = vpack.c.bf16 %v1432, %v1430
    %v1473 = vpack.c.bf16 %v1433, %v1431
    %v1474 = vpack.c.bf16 %v1436, %v1434
    %v1475 = vpack.c.bf16 %v1437, %v1435
    %v1476 = vpack.c.bf16 %v1440, %v1438
    %v1477 = vpack.c.bf16 %v1441, %v1439
    %v1478 = vpack.c.bf16 %v1444, %v1442
    %v1479 = vpack.c.bf16 %v1445, %v1443
    %v1480 = vpack.c.bf16 %v1448, %v1446
    %v1481 = vpack.c.bf16 %v1449, %v1447
    %v1482 = vld [vmem:[%s9] sm:$0xff]
    %v1483 = vld [vmem:[%s9 + $0x8] sm:$0xff]
    %v1484 = vld [vmem:[%s9 + $0x10] sm:$0xff]
    %v1485 = vld [vmem:[%s9 + $0x18] sm:$0xff]
    %v1486 = vld [vmem:[%s9 + $0x20] sm:$0xff]
    %v1487 = vld [vmem:[%s9 + $0x28] sm:$0xff]
    %v1488 = vld [vmem:[%s9 + $0x30] sm:$0xff]
    %v1489 = vld [vmem:[%s9 + $0x38] sm:$0xff]
    %v1490 = vld [vmem:[%s9 + $0x40] sm:$0xff]
    %v1491 = vld [vmem:[%s9 + $0x48] sm:$0xff]
    %v1492 = vld [vmem:[%s9 + $0x50] sm:$0xff]
    %v1493 = vld [vmem:[%s9 + $0x58] sm:$0xff]
    %v1494 = vld [vmem:[%s9 + $0x60] sm:$0xff]
    %v1495 = vld [vmem:[%s9 + $0x68] sm:$0xff]
    %v1496 = vld [vmem:[%s9 + $0x70] sm:$0xff]
    %v1497 = vld [vmem:[%s9 + $0x78] sm:$0xff]
    %v1498 = vld [vmem:[%s9 + $0x80] sm:$0xff]
    %v1499 = vld [vmem:[%s9 + $0x88] sm:$0xff]
    %v1500 = vld [vmem:[%s9 + $0x90] sm:$0xff]
    %v1501 = vld [vmem:[%s9 + $0x98] sm:$0xff]
    %v1502 = vld [vmem:[%s9 + $0xa0] sm:$0xff]
    %v1503 = vld [vmem:[%s9 + $0xa8] sm:$0xff]
    %v1504 = vld [vmem:[%s9 + $0xb0] sm:$0xff]
    %v1505 = vld [vmem:[%s9 + $0xb8] sm:$0xff]
    %v1506 = vld [vmem:[%s9 + $0xc0] sm:$0xff]
    %v1507 = vld [vmem:[%s9 + $0xc8] sm:$0xff]
    %v1508 = vld [vmem:[%s9 + $0xd0] sm:$0xff]
    %v1509 = vld [vmem:[%s9 + $0xd8] sm:$0xff]
    %v1510 = vld [vmem:[%s9 + $0xe0] sm:$0xff]
    %v1511 = vld [vmem:[%s9 + $0xe8] sm:$0xff]
    %v1512 = vld [vmem:[%s9 + $0xf0] sm:$0xff]
    %v1513 = vld [vmem:[%s9 + $0xf8] sm:$0xff]
    %v1514 = vld [vmem:[%s10] sm:$0x3]
    %v1516 = vlaneseq
    %v1517 = vshrl.u32 %v1516, 7
    %v1518 = vsub.s32 0, %v1517
    %v1519 = vrot.slane %v1514, %v1518
    %v1520 = vlaneseq
    %v1521 = vshrl.u32 %v1520, 7
    %v1522 = vsub.s32 1, %v1521
    %v1523 = vrot.slane %v1514, %v1522
    %v1558 = vunpack.c.l.b16 %v1482
    %v1559 = vunpack.c.h.b16 %v1482
    %v1560 = vunpack.c.l.b16 %v1483
    %v1561 = vunpack.c.h.b16 %v1483
    %v1562 = vunpack.c.l.b16 %v1484
    %v1563 = vunpack.c.h.b16 %v1484
    %v1564 = vunpack.c.l.b16 %v1485
    %v1565 = vunpack.c.h.b16 %v1485
    %v1566 = vunpack.c.l.b16 %v1486
    %v1567 = vunpack.c.h.b16 %v1486
    %v1568 = vunpack.c.l.b16 %v1487
    %v1569 = vunpack.c.h.b16 %v1487
    %v1570 = vunpack.c.l.b16 %v1488
    %v1571 = vunpack.c.h.b16 %v1488
    %v1572 = vunpack.c.l.b16 %v1489
    %v1573 = vunpack.c.h.b16 %v1489
    %v1574 = vunpack.c.l.b16 %v1490
    %v1575 = vunpack.c.h.b16 %v1490
    %v1576 = vunpack.c.l.b16 %v1491
    %v1577 = vunpack.c.h.b16 %v1491
    %v1578 = vunpack.c.l.b16 %v1492
    %v1579 = vunpack.c.h.b16 %v1492
    %v1580 = vunpack.c.l.b16 %v1493
    %v1581 = vunpack.c.h.b16 %v1493
    %v1582 = vunpack.c.l.b16 %v1494
    %v1583 = vunpack.c.h.b16 %v1494
    %v1584 = vunpack.c.l.b16 %v1495
    %v1585 = vunpack.c.h.b16 %v1495
    %v1586 = vunpack.c.l.b16 %v1496
    %v1587 = vunpack.c.h.b16 %v1496
    %v1588 = vunpack.c.l.b16 %v1497
    %v1589 = vunpack.c.h.b16 %v1497
    %v1590 = vunpack.c.l.b16 %v1498
    %v1591 = vunpack.c.h.b16 %v1498
    %v1592 = vunpack.c.l.b16 %v1499
    %v1593 = vunpack.c.h.b16 %v1499
    %v1594 = vunpack.c.l.b16 %v1500
    %v1595 = vunpack.c.h.b16 %v1500
    %v1596 = vunpack.c.l.b16 %v1501
    %v1597 = vunpack.c.h.b16 %v1501
    %v1598 = vunpack.c.l.b16 %v1502
    %v1599 = vunpack.c.h.b16 %v1502
    %v1600 = vunpack.c.l.b16 %v1503
    %v1601 = vunpack.c.h.b16 %v1503
    %v1602 = vunpack.c.l.b16 %v1504
    %v1603 = vunpack.c.h.b16 %v1504
    %v1604 = vunpack.c.l.b16 %v1505
    %v1605 = vunpack.c.h.b16 %v1505
    %v1606 = vunpack.c.l.b16 %v1506
    %v1607 = vunpack.c.h.b16 %v1506
    %v1608 = vunpack.c.l.b16 %v1507
    %v1609 = vunpack.c.h.b16 %v1507
    %v1610 = vunpack.c.l.b16 %v1508
    %v1611 = vunpack.c.h.b16 %v1508
    %v1612 = vunpack.c.l.b16 %v1509
    %v1613 = vunpack.c.h.b16 %v1509
    %v1614 = vunpack.c.l.b16 %v1510
    %v1615 = vunpack.c.h.b16 %v1510
    %v1616 = vunpack.c.l.b16 %v1511
    %v1617 = vunpack.c.h.b16 %v1511
    %v1618 = vunpack.c.l.b16 %v1512
    %v1619 = vunpack.c.h.b16 %v1512
    %v1620 = vunpack.c.l.b16 %v1513
    %v1621 = vunpack.c.h.b16 %v1513
    %v1622 = vpack.c.b16 %v1560, %v1558
    %v1623 = vpack.c.b16 %v1561, %v1559
    %v1624 = vpack.c.b16 %v1564, %v1562
    %v1625 = vpack.c.b16 %v1565, %v1563
    %v1626 = vpack.c.b16 %v1568, %v1566
    %v1627 = vpack.c.b16 %v1569, %v1567
    %v1628 = vpack.c.b16 %v1572, %v1570
    %v1629 = vpack.c.b16 %v1573, %v1571
    %v1630 = vpack.c.b16 %v1576, %v1574
    %v1631 = vpack.c.b16 %v1577, %v1575
    %v1632 = vpack.c.b16 %v1580, %v1578
    %v1633 = vpack.c.b16 %v1581, %v1579
    %v1634 = vpack.c.b16 %v1584, %v1582
    %v1635 = vpack.c.b16 %v1585, %v1583
    %v1636 = vpack.c.b16 %v1588, %v1586
    %v1637 = vpack.c.b16 %v1589, %v1587
    %v1638 = vpack.c.b16 %v1592, %v1590
    %v1639 = vpack.c.b16 %v1593, %v1591
    %v1640 = vpack.c.b16 %v1596, %v1594
    %v1641 = vpack.c.b16 %v1597, %v1595
    %v1642 = vpack.c.b16 %v1600, %v1598
    %v1643 = vpack.c.b16 %v1601, %v1599
    %v1644 = vpack.c.b16 %v1604, %v1602
    %v1645 = vpack.c.b16 %v1605, %v1603
    %v1646 = vpack.c.b16 %v1608, %v1606
    %v1647 = vpack.c.b16 %v1609, %v1607
    %v1648 = vpack.c.b16 %v1612, %v1610
    %v1649 = vpack.c.b16 %v1613, %v1611
    %v1650 = vpack.c.b16 %v1616, %v1614
    %v1651 = vpack.c.b16 %v1617, %v1615
    %v1652 = vpack.c.b16 %v1620, %v1618
    %v1653 = vpack.c.b16 %v1621, %v1619
    %1686 = vmatprep.subr.bf16.mxu0 %v1623
    %1687 = vmatpush1.bf16.msra.mxu0 %v1622
    %1688 = vmatprep.subr.bf16.mxu0 %v1625
    %1689 = vmatpush1.bf16.msra.mxu0 %v1624
    %1690 = vmatprep.subr.bf16.mxu0 %v1627
    %1691 = vmatpush1.bf16.msra.mxu0 %v1626
    %1692 = vmatprep.subr.bf16.mxu0 %v1629
    %1693 = vmatpush1.bf16.msra.mxu0 %v1628
    %1694 = vmatprep.subr.bf16.mxu0 %v1631
    %1695 = vmatpush1.bf16.msra.mxu0 %v1630
    %1696 = vmatprep.subr.bf16.mxu0 %v1633
    %1697 = vmatpush1.bf16.msra.mxu0 %v1632
    %1698 = vmatprep.subr.bf16.mxu0 %v1635
    %1699 = vmatpush1.bf16.msra.mxu0 %v1634
    %1700 = vmatprep.subr.bf16.mxu0 %v1637
    %1701 = vmatpush1.bf16.msra.mxu0 %v1636
    %1702 = vmatprep.subr.bf16.mxu0 %v1639
    %1703 = vmatpush1.bf16.msra.mxu0 %v1638
    %1704 = vmatprep.subr.bf16.mxu0 %v1641
    %1705 = vmatpush1.bf16.msra.mxu0 %v1640
    %1706 = vmatprep.subr.bf16.mxu0 %v1643
    %1707 = vmatpush1.bf16.msra.mxu0 %v1642
    %1708 = vmatprep.subr.bf16.mxu0 %v1645
    %1709 = vmatpush1.bf16.msra.mxu0 %v1644
    %1710 = vmatprep.subr.bf16.mxu0 %v1647
    %1711 = vmatpush1.bf16.msra.mxu0 %v1646
    %1712 = vmatprep.subr.bf16.mxu0 %v1649
    %1713 = vmatpush1.bf16.msra.mxu0 %v1648
    %1714 = vmatprep.subr.bf16.mxu0 %v1651
    %1715 = vmatpush1.bf16.msra.mxu0 %v1650
    %1716 = vmatprep.subr.bf16.mxu0 %v1653
    %1717 = vmatpush1.bf16.msra.mxu0 %v1652
    %1718 = vmatprep.mubr.bf16.mxu0 %v1451
    %1719 = vmatmul.mubr.bf16.gmra.mrb[0].mxu0 %v1450
    %v1720 = vpop.f32.mrb[0].mxu0
    %v1721 = vadd.f32 %v1519, %v1720
    %v1722 = vpop.f32.mrb[0].mxu0
    %v1723 = vadd.f32 %v1523, %v1722
    %v1724 = vpop.f32.mrb[0].mxu0
    %v1725 = vadd.f32 %v1519, %v1724
    %v1726 = vpop.f32.mrb[0].mxu0
    %v1727 = vadd.f32 %v1523, %v1726
    %1728 = vmatprep.mubr.bf16.mxu0 %v1453
    %1729 = vmatmul.mubr.bf16.gmra.mrb[0].mxu0 %v1452
    %v1730 = vpop.f32.mrb[0].mxu0
    %v1731 = vadd.f32 %v1519, %v1730
    %v1732 = vpop.f32.mrb[0].mxu0
    %v1733 = vadd.f32 %v1523, %v1732
    %v1734 = vpop.f32.mrb[0].mxu0
    %v1735 = vadd.f32 %v1519, %v1734
    %v1736 = vpop.f32.mrb[0].mxu0
    %v1737 = vadd.f32 %v1523, %v1736
    %1738 = vmatprep.mubr.bf16.mxu0 %v1455
    %1739 = vmatmul.mubr.bf16.gmra.mrb[0].mxu0 %v1454
    %v1740 = vpop.f32.mrb[0].mxu0
    %v1741 = vadd.f32 %v1519, %v1740
    %v1742 = vpop.f32.mrb[0].mxu0
    %v1743 = vadd.f32 %v1523, %v1742
    %v1744 = vpop.f32.mrb[0].mxu0
    %v1745 = vadd.f32 %v1519, %v1744
    %v1746 = vpop.f32.mrb[0].mxu0
    %v1747 = vadd.f32 %v1523, %v1746
    %1748 = vmatprep.mubr.bf16.mxu0 %v1457
    %1749 = vmatmul.mubr.bf16.gmra.mrb[0].mxu0 %v1456
    %v1750 = vpop.f32.mrb[0].mxu0
    %v1751 = vadd.f32 %v1519, %v1750
    %v1752 = vpop.f32.mrb[0].mxu0
    %v1753 = vadd.f32 %v1523, %v1752
    %v1754 = vpop.f32.mrb[0].mxu0
    %v1755 = vadd.f32 %v1519, %v1754
    %v1756 = vpop.f32.mrb[0].mxu0
    %v1757 = vadd.f32 %v1523, %v1756
    %1758 = vmatprep.mubr.bf16.mxu0 %v1459
    %1759 = vmatmul.mubr.bf16.gmra.mrb[0].mxu0 %v1458
    %v1760 = vpop.f32.mrb[0].mxu0
    %v1761 = vadd.f32 %v1519, %v1760
    %v1762 = vpop.f32.mrb[0].mxu0
    %v1763 = vadd.f32 %v1523, %v1762
    %v1764 = vpop.f32.mrb[0].mxu0
    %v1765 = vadd.f32 %v1519, %v1764
    %v1766 = vpop.f32.mrb[0].mxu0
    %v1767 = vadd.f32 %v1523, %v1766
    %1768 = vmatprep.mubr.bf16.mxu0 %v1461
    %1769 = vmatmul.mubr.bf16.gmra.mrb[0].mxu0 %v1460
    %v1770 = vpop.f32.mrb[0].mxu0
    %v1771 = vadd.f32 %v1519, %v1770
    %v1772 = vpop.f32.mrb[0].mxu0
    %v1773 = vadd.f32 %v1523, %v1772
    %v1774 = vpop.f32.mrb[0].mxu0
    %v1775 = vadd.f32 %v1519, %v1774
    %v1776 = vpop.f32.mrb[0].mxu0
    %v1777 = vadd.f32 %v1523, %v1776
    %1778 = vmatprep.mubr.bf16.mxu0 %v1463
    %1779 = vmatmul.mubr.bf16.gmra.mrb[0].mxu0 %v1462
    %v1780 = vpop.f32.mrb[0].mxu0
    %v1781 = vadd.f32 %v1519, %v1780
    %v1782 = vpop.f32.mrb[0].mxu0
    %v1783 = vadd.f32 %v1523, %v1782
    %v1784 = vpop.f32.mrb[0].mxu0
    %v1785 = vadd.f32 %v1519, %v1784
    %v1786 = vpop.f32.mrb[0].mxu0
    %v1787 = vadd.f32 %v1523, %v1786
    %1788 = vmatprep.mubr.bf16.mxu0 %v1465
    %1789 = vmatmul.mubr.bf16.gmra.mrb[0].mxu0 %v1464
    %v1790 = vpop.f32.mrb[0].mxu0
    %v1791 = vadd.f32 %v1519, %v1790
    %v1792 = vpop.f32.mrb[0].mxu0
    %v1793 = vadd.f32 %v1523, %v1792
    %v1794 = vpop.f32.mrb[0].mxu0
    %v1795 = vadd.f32 %v1519, %v1794
    %v1796 = vpop.f32.mrb[0].mxu0
    %v1797 = vadd.f32 %v1523, %v1796
    %1798 = vmatprep.mubr.bf16.mxu0 %v1467
    %1799 = vmatmul.mubr.bf16.gmra.mrb[0].mxu0 %v1466
    %v1800 = vpop.f32.mrb[0].mxu0
    %v1801 = vadd.f32 %v1519, %v1800
    %v1802 = vpop.f32.mrb[0].mxu0
    %v1803 = vadd.f32 %v1523, %v1802
    %v1804 = vpop.f32.mrb[0].mxu0
    %v1805 = vadd.f32 %v1519, %v1804
    %v1806 = vpop.f32.mrb[0].mxu0
    %v1807 = vadd.f32 %v1523, %v1806
    %1808 = vmatprep.mubr.bf16.mxu0 %v1469
    %1809 = vmatmul.mubr.bf16.gmra.mrb[0].mxu0 %v1468
    %v1810 = vpop.f32.mrb[0].mxu0
    %v1811 = vadd.f32 %v1519, %v1810
    %v1812 = vpop.f32.mrb[0].mxu0
    %v1813 = vadd.f32 %v1523, %v1812
    %v1814 = vpop.f32.mrb[0].mxu0
    %v1815 = vadd.f32 %v1519, %v1814
    %v1816 = vpop.f32.mrb[0].mxu0
    %v1817 = vadd.f32 %v1523, %v1816
    %1818 = vmatprep.mubr.bf16.mxu0 %v1471
    %1819 = vmatmul.mubr.bf16.gmra.mrb[0].mxu0 %v1470
    %v1820 = vpop.f32.mrb[0].mxu0
    %v1821 = vadd.f32 %v1519, %v1820
    %v1822 = vpop.f32.mrb[0].mxu0
    %v1823 = vadd.f32 %v1523, %v1822
    %v1824 = vpop.f32.mrb[0].mxu0
    %v1825 = vadd.f32 %v1519, %v1824
    %v1826 = vpop.f32.mrb[0].mxu0
    %v1827 = vadd.f32 %v1523, %v1826
    %1828 = vmatprep.mubr.bf16.mxu0 %v1473
    %1829 = vmatmul.mubr.bf16.gmra.mrb[0].mxu0 %v1472
    %v1830 = vpop.f32.mrb[0].mxu0
    %v1831 = vadd.f32 %v1519, %v1830
    %v1832 = vpop.f32.mrb[0].mxu0
    %v1833 = vadd.f32 %v1523, %v1832
    %v1834 = vpop.f32.mrb[0].mxu0
    %v1835 = vadd.f32 %v1519, %v1834
    %v1836 = vpop.f32.mrb[0].mxu0
    %v1837 = vadd.f32 %v1523, %v1836
    %1838 = vmatprep.mubr.bf16.mxu0 %v1475
    %1839 = vmatmul.mubr.bf16.gmra.mrb[0].mxu0 %v1474
    %v1840 = vpop.f32.mrb[0].mxu0
    %v1841 = vadd.f32 %v1519, %v1840
    %v1842 = vpop.f32.mrb[0].mxu0
    %v1843 = vadd.f32 %v1523, %v1842
    %v1844 = vpop.f32.mrb[0].mxu0
    %v1845 = vadd.f32 %v1519, %v1844
    %v1846 = vpop.f32.mrb[0].mxu0
    %v1847 = vadd.f32 %v1523, %v1846
    %1848 = vmatprep.mubr.bf16.mxu0 %v1477
    %1849 = vmatmul.mubr.bf16.gmra.mrb[0].mxu0 %v1476
    %v1850 = vpop.f32.mrb[0].mxu0
    %v1851 = vadd.f32 %v1519, %v1850
    %v1852 = vpop.f32.mrb[0].mxu0
    %v1853 = vadd.f32 %v1523, %v1852
    %v1854 = vpop.f32.mrb[0].mxu0
    %v1855 = vadd.f32 %v1519, %v1854
    %v1856 = vpop.f32.mrb[0].mxu0
    %v1857 = vadd.f32 %v1523, %v1856
    %1858 = vmatprep.mubr.bf16.mxu0 %v1479
    %1859 = vmatmul.mubr.bf16.gmra.mrb[0].mxu0 %v1478
    %v1860 = vpop.f32.mrb[0].mxu0
    %v1861 = vadd.f32 %v1519, %v1860
    %v1862 = vpop.f32.mrb[0].mxu0
    %v1863 = vadd.f32 %v1523, %v1862
    %v1864 = vpop.f32.mrb[0].mxu0
    %v1865 = vadd.f32 %v1519, %v1864
    %v1866 = vpop.f32.mrb[0].mxu0
    %v1867 = vadd.f32 %v1523, %v1866
    %1868 = vmatprep.mubr.bf16.mxu0 %v1481
    %1869 = vmatmul.mubr.bf16.gmra.mrb[0].mxu0 %v1480
    %v1870 = vpop.f32.mrb[0].mxu0
    %v1871 = vadd.f32 %v1519, %v1870
    %v1872 = vpop.f32.mrb[0].mxu0
    %v1873 = vadd.f32 %v1523, %v1872
    %v1874 = vpop.f32.mrb[0].mxu0
    %v1875 = vadd.f32 %v1519, %v1874
    %v1876 = vpop.f32.mrb[0].mxu0
    %v1877 = vadd.f32 %v1523, %v1876
    %1878 = vdwg.mxu0
    %v1879 = vmax.f32 %v1721, 0.0
    %v1880 = vmax.f32 %v1723, 0.0
    %v1881 = vmax.f32 %v1725, 0.0
    %v1882 = vmax.f32 %v1727, 0.0
    %v1883 = vmax.f32 %v1731, 0.0
    %v1884 = vmax.f32 %v1733, 0.0
    %v1885 = vmax.f32 %v1735, 0.0
    %v1886 = vmax.f32 %v1737, 0.0
    %v1887 = vmax.f32 %v1741, 0.0
    %v1888 = vmax.f32 %v1743, 0.0
    %v1889 = vmax.f32 %v1745, 0.0
    %v1890 = vmax.f32 %v1747, 0.0
    %v1891 = vmax.f32 %v1751, 0.0
    %v1892 = vmax.f32 %v1753, 0.0
    %v1893 = vmax.f32 %v1755, 0.0
    %v1894 = vmax.f32 %v1757, 0.0
    %v1895 = vmax.f32 %v1761, 0.0
    %v1896 = vmax.f32 %v1763, 0.0
    %v1897 = vmax.f32 %v1765, 0.0
    %v1898 = vmax.f32 %v1767, 0.0
    %v1899 = vmax.f32 %v1771, 0.0
    %v1900 = vmax.f32 %v1773, 0.0
    %v1901 = vmax.f32 %v1775, 0.0
    %v1902 = vmax.f32 %v1777, 0.0
    %v1903 = vmax.f32 %v1781, 0.0
    %v1904 = vmax.f32 %v1783, 0.0
    %v1905 = vmax.f32 %v1785, 0.0
    %v1906 = vmax.f32 %v1787, 0.0
    %v1907 = vmax.f32 %v1791, 0.0
    %v1908 = vmax.f32 %v1793, 0.0
    %v1909 = vmax.f32 %v1795, 0.0
    %v1910 = vmax.f32 %v1797, 0.0
    %v1911 = vmax.f32 %v1801, 0.0
    %v1912 = vmax.f32 %v1803, 0.0
    %v1913 = vmax.f32 %v1805, 0.0
    %v1914 = vmax.f32 %v1807, 0.0
    %v1915 = vmax.f32 %v1811, 0.0
    %v1916 = vmax.f32 %v1813, 0.0
    %v1917 = vmax.f32 %v1815, 0.0
    %v1918 = vmax.f32 %v1817, 0.0
    %v1919 = vmax.f32 %v1821, 0.0
    %v1920 = vmax.f32 %v1823, 0.0
    %v1921 = vmax.f32 %v1825, 0.0
    %v1922 = vmax.f32 %v1827, 0.0
    %v1923 = vmax.f32 %v1831, 0.0
    %v1924 = vmax.f32 %v1833, 0.0
    %v1925 = vmax.f32 %v1835, 0.0
    %v1926 = vmax.f32 %v1837, 0.0
    %v1927 = vmax.f32 %v1841, 0.0
    %v1928 = vmax.f32 %v1843, 0.0
    %v1929 = vmax.f32 %v1845, 0.0
    %v1930 = vmax.f32 %v1847, 0.0
    %v1931 = vmax.f32 %v1851, 0.0
    %v1932 = vmax.f32 %v1853, 0.0
    %v1933 = vmax.f32 %v1855, 0.0
    %v1934 = vmax.f32 %v1857, 0.0
    %v1935 = vmax.f32 %v1861, 0.0
    %v1936 = vmax.f32 %v1863, 0.0
    %v1937 = vmax.f32 %v1865, 0.0
    %v1938 = vmax.f32 %v1867, 0.0
    %v1939 = vmax.f32 %v1871, 0.0
    %v1940 = vmax.f32 %v1873, 0.0
    %v1941 = vmax.f32 %v1875, 0.0
    %v1942 = vmax.f32 %v1877, 0.0
    %v1943 = vld [vmem:[%s11] sm:$0x3]
    %v1944 = vld [vmem:[%s12] sm:$0x3]
    %v1945 = vadd.f32 %v1879, %v1881
    %v1946 = vadd.f32 %v1945, %v1883
    %v1947 = vadd.f32 %v1946, %v1885
    %v1948 = vadd.f32 %v1947, %v1887
    %v1949 = vadd.f32 %v1948, %v1889
    %v1950 = vadd.f32 %v1949, %v1891
    %v1951 = vadd.f32 %v1950, %v1893
    %v1952 = vadd.f32 %v1951, %v1895
    %v1953 = vadd.f32 %v1952, %v1897
    %v1954 = vadd.f32 %v1953, %v1899
    %v1955 = vadd.f32 %v1954, %v1901
    %v1956 = vadd.f32 %v1955, %v1903
    %v1957 = vadd.f32 %v1956, %v1905
    %v1958 = vadd.f32 %v1957, %v1907
    %v1959 = vadd.f32 %v1958, %v1909
    %v1960 = vadd.f32 %v1959, %v1911
    %v1961 = vadd.f32 %v1960, %v1913
    %v1962 = vadd.f32 %v1961, %v1915
    %v1963 = vadd.f32 %v1962, %v1917
    %v1964 = vadd.f32 %v1963, %v1919
    %v1965 = vadd.f32 %v1964, %v1921
    %v1966 = vadd.f32 %v1965, %v1923
    %v1967 = vadd.f32 %v1966, %v1925
    %v1968 = vadd.f32 %v1967, %v1927
    %v1969 = vadd.f32 %v1968, %v1929
    %v1970 = vadd.f32 %v1969, %v1931
    %v1971 = vadd.f32 %v1970, %v1933
    %v1972 = vadd.f32 %v1971, %v1935
    %v1973 = vadd.f32 %v1972, %v1937
    %v1974 = vadd.f32 %v1973, %v1939
    %v1975 = vadd.f32 %v1974, %v1941
    %v1976 = vrot.slane %v1975, 4
    %v1977 = vadd.f32 %v1975, %v1976
    %v1978 = vrot.slane %v1977, 2
    %v1979 = vadd.f32 %v1977, %v1978
    %v1980 = vrot.slane %v1979, 1
    %v1981 = vadd.f32 %v1979, %v1980
    %v1982 = vadd.f32 %v1880, %v1882
    %v1983 = vadd.f32 %v1982, %v1884
    %v1984 = vadd.f32 %v1983, %v1886
    %v1985 = vadd.f32 %v1984, %v1888
    %v1986 = vadd.f32 %v1985, %v1890
    %v1987 = vadd.f32 %v1986, %v1892
    %v1988 = vadd.f32 %v1987, %v1894
    %v1989 = vadd.f32 %v1988, %v1896
    %v1990 = vadd.f32 %v1989, %v1898
    %v1991 = vadd.f32 %v1990, %v1900
    %v1992 = vadd.f32 %v1991, %v1902
    %v1993 = vadd.f32 %v1992, %v1904
    %v1994 = vadd.f32 %v1993, %v1906
    %v1995 = vadd.f32 %v1994, %v1908
    %v1996 = vadd.f32 %v1995, %v1910
    %v1997 = vadd.f32 %v1996, %v1912
    %v1998 = vadd.f32 %v1997, %v1914
    %v1999 = vadd.f32 %v1998, %v1916
    %v2000 = vadd.f32 %v1999, %v1918
    %v2001 = vadd.f32 %v2000, %v1920
    %v2002 = vadd.f32 %v2001, %v1922
    %v2003 = vadd.f32 %v2002, %v1924
    %v2004 = vadd.f32 %v2003, %v1926
    %v2005 = vadd.f32 %v2004, %v1928
    %v2006 = vadd.f32 %v2005, %v1930
    %v2007 = vadd.f32 %v2006, %v1932
    %v2008 = vadd.f32 %v2007, %v1934
    %v2009 = vadd.f32 %v2008, %v1936
    %v2010 = vadd.f32 %v2009, %v1938
    %v2011 = vadd.f32 %v2010, %v1940
    %v2012 = vadd.f32 %v2011, %v1942
    %v2013 = vrot.slane %v2012, 4
    %v2014 = vadd.f32 %v2012, %v2013
    %v2015 = vrot.slane %v2014, 2
    %v2016 = vadd.f32 %v2014, %v2015
    %v2017 = vrot.slane %v2016, 1
    %v2018 = vadd.f32 %v2016, %v2017
    %v2019 = vmul.f32 %v1879, %v1879
    %v2020 = vmul.f32 %v1880, %v1880
    %v2021 = vmul.f32 %v1881, %v1881
    %v2022 = vmul.f32 %v1882, %v1882
    %v2023 = vmul.f32 %v1883, %v1883
    %v2024 = vmul.f32 %v1884, %v1884
    %v2025 = vmul.f32 %v1885, %v1885
    %v2026 = vmul.f32 %v1886, %v1886
    %v2027 = vmul.f32 %v1887, %v1887
    %v2028 = vmul.f32 %v1888, %v1888
    %v2029 = vmul.f32 %v1889, %v1889
    %v2030 = vmul.f32 %v1890, %v1890
    %v2031 = vmul.f32 %v1891, %v1891
    %v2032 = vmul.f32 %v1892, %v1892
    %v2033 = vmul.f32 %v1893, %v1893
    %v2034 = vmul.f32 %v1894, %v1894
    %v2035 = vmul.f32 %v1895, %v1895
    %v2036 = vmul.f32 %v1896, %v1896
    %v2037 = vmul.f32 %v1897, %v1897
    %v2038 = vmul.f32 %v1898, %v1898
    %v2039 = vmul.f32 %v1899, %v1899
    %v2040 = vmul.f32 %v1900, %v1900
    %v2041 = vmul.f32 %v1901, %v1901
    %v2042 = vmul.f32 %v1902, %v1902
    %v2043 = vmul.f32 %v1903, %v1903
    %v2044 = vmul.f32 %v1904, %v1904
    %v2045 = vmul.f32 %v1905, %v1905
    %v2046 = vmul.f32 %v1906, %v1906
    %v2047 = vmul.f32 %v1907, %v1907
    %v2048 = vmul.f32 %v1908, %v1908
    %v2049 = vmul.f32 %v1909, %v1909
    %v2050 = vmul.f32 %v1910, %v1910
    %v2051 = vmul.f32 %v1911, %v1911
    %v2052 = vmul.f32 %v1912, %v1912
    %v2053 = vmul.f32 %v1913, %v1913
    %v2054 = vmul.f32 %v1914, %v1914
    %v2055 = vmul.f32 %v1915, %v1915
    %v2056 = vmul.f32 %v1916, %v1916
    %v2057 = vmul.f32 %v1917, %v1917
    %v2058 = vmul.f32 %v1918, %v1918
    %v2059 = vmul.f32 %v1919, %v1919
    %v2060 = vmul.f32 %v1920, %v1920
    %v2061 = vmul.f32 %v1921, %v1921
    %v2062 = vmul.f32 %v1922, %v1922
    %v2063 = vmul.f32 %v1923, %v1923
    %v2064 = vmul.f32 %v1924, %v1924
    %v2065 = vmul.f32 %v1925, %v1925
    %v2066 = vmul.f32 %v1926, %v1926
    %v2067 = vmul.f32 %v1927, %v1927
    %v2068 = vmul.f32 %v1928, %v1928
    %v2069 = vmul.f32 %v1929, %v1929
    %v2070 = vmul.f32 %v1930, %v1930
    %v2071 = vmul.f32 %v1931, %v1931
    %v2072 = vmul.f32 %v1932, %v1932
    %v2073 = vmul.f32 %v1933, %v1933
    %v2074 = vmul.f32 %v1934, %v1934
    %v2075 = vmul.f32 %v1935, %v1935
    %v2076 = vmul.f32 %v1936, %v1936
    %v2077 = vmul.f32 %v1937, %v1937
    %v2078 = vmul.f32 %v1938, %v1938
    %v2079 = vmul.f32 %v1939, %v1939
    %v2080 = vmul.f32 %v1940, %v1940
    %v2081 = vmul.f32 %v1941, %v1941
    %v2082 = vmul.f32 %v1942, %v1942
    %v2083 = vadd.f32 %v2019, %v2021
    %v2084 = vadd.f32 %v2083, %v2023
    %v2085 = vadd.f32 %v2084, %v2025
    %v2086 = vadd.f32 %v2085, %v2027
    %v2087 = vadd.f32 %v2086, %v2029
    %v2088 = vadd.f32 %v2087, %v2031
    %v2089 = vadd.f32 %v2088, %v2033
    %v2090 = vadd.f32 %v2089, %v2035
    %v2091 = vadd.f32 %v2090, %v2037
    %v2092 = vadd.f32 %v2091, %v2039
    %v2093 = vadd.f32 %v2092, %v2041
    %v2094 = vadd.f32 %v2093, %v2043
    %v2095 = vadd.f32 %v2094, %v2045
    %v2096 = vadd.f32 %v2095, %v2047
    %v2097 = vadd.f32 %v2096, %v2049
    %v2098 = vadd.f32 %v2097, %v2051
    %v2099 = vadd.f32 %v2098, %v2053
    %v2100 = vadd.f32 %v2099, %v2055
    %v2101 = vadd.f32 %v2100, %v2057
    %v2102 = vadd.f32 %v2101, %v2059
    %v2103 = vadd.f32 %v2102, %v2061
    %v2104 = vadd.f32 %v2103, %v2063
    %v2105 = vadd.f32 %v2104, %v2065
    %v2106 = vadd.f32 %v2105, %v2067
    %v2107 = vadd.f32 %v2106, %v2069
    %v2108 = vadd.f32 %v2107, %v2071
    %v2109 = vadd.f32 %v2108, %v2073
    %v2110 = vadd.f32 %v2109, %v2075
    %v2111 = vadd.f32 %v2110, %v2077
    %v2112 = vadd.f32 %v2111, %v2079
    %v2113 = vadd.f32 %v2112, %v2081
    %v2114 = vrot.slane %v2113, 4
    %v2115 = vadd.f32 %v2113, %v2114
    %v2116 = vrot.slane %v2115, 2
    %v2117 = vadd.f32 %v2115, %v2116
    %v2118 = vrot.slane %v2117, 1
    %v2119 = vadd.f32 %v2117, %v2118
    %v2120 = vadd.f32 %v2020, %v2022
    %v2121 = vadd.f32 %v2120, %v2024
    %v2122 = vadd.f32 %v2121, %v2026
    %v2123 = vadd.f32 %v2122, %v2028
    %v2124 = vadd.f32 %v2123, %v2030
    %v2125 = vadd.f32 %v2124, %v2032
    %v2126 = vadd.f32 %v2125, %v2034
    %v2127 = vadd.f32 %v2126, %v2036
    %v2128 = vadd.f32 %v2127, %v2038
    %v2129 = vadd.f32 %v2128, %v2040
    %v2130 = vadd.f32 %v2129, %v2042
    %v2131 = vadd.f32 %v2130, %v2044
    %v2132 = vadd.f32 %v2131, %v2046
    %v2133 = vadd.f32 %v2132, %v2048
    %v2134 = vadd.f32 %v2133, %v2050
    %v2135 = vadd.f32 %v2134, %v2052
    %v2136 = vadd.f32 %v2135, %v2054
    %v2137 = vadd.f32 %v2136, %v2056
    %v2138 = vadd.f32 %v2137, %v2058
    %v2139 = vadd.f32 %v2138, %v2060
    %v2140 = vadd.f32 %v2139, %v2062
    %v2141 = vadd.f32 %v2140, %v2064
    %v2142 = vadd.f32 %v2141, %v2066
    %v2143 = vadd.f32 %v2142, %v2068
    %v2144 = vadd.f32 %v2143, %v2070
    %v2145 = vadd.f32 %v2144, %v2072
    %v2146 = vadd.f32 %v2145, %v2074
    %v2147 = vadd.f32 %v2146, %v2076
    %v2148 = vadd.f32 %v2147, %v2078
    %v2149 = vadd.f32 %v2148, %v2080
    %v2150 = vadd.f32 %v2149, %v2082
    %v2151 = vrot.slane %v2150, 4
    %v2152 = vadd.f32 %v2150, %v2151
    %v2153 = vrot.slane %v2152, 2
    %v2154 = vadd.f32 %v2152, %v2153
    %v2155 = vrot.slane %v2154, 1
    %v2156 = vadd.f32 %v2154, %v2155
    %v2157 = vmul.f32 %v1981, 0.00390625
    %v2158 = vmul.f32 %v2018, 0.00390625
    %v2159 = vmul.f32 %v2119, 0.00390625
    %v2160 = vmul.f32 %v2156, 0.00390625
    %v2161 = vmul.f32 %v2157, %v2157
    %v2162 = vmul.f32 %v2158, %v2158
    %v2163 = vsub.f32 %v2159, %v2161
    %v2164 = vsub.f32 %v2160, %v2162
    %v2165 = vmax.f32 %v2163, 0.0
    %v2166 = vmax.f32 %v2164, 0.0
    %v2167 = vadd.f32 %v2165, 1e-05
    %v2168 = vadd.f32 %v2166, 1e-05
    %v2169 = vrsqrt.pop %v2167
    %v2170 = vrsqrt.pop %v2168
    %v2172 = vlaneseq
    %v2173 = vshrl.u32 %v2172, 7
    %v2174 = vsub.s32 0, %v2173
    %v2175 = vrot.slane %v1943, %v2174
    %v2176 = vlaneseq
    %v2177 = vshrl.u32 %v2176, 7
    %v2178 = vsub.s32 1, %v2177
    %v2179 = vrot.slane %v1943, %v2178
    %v2182 = vmul.f32 %v2169, %v2175
    %v2183 = vmul.f32 %v2170, %v2179
    %v2184 = vmul.f32 %v2157, %v2182
    %v2185 = vmul.f32 %v2158, %v2183
    %v2188 = vcombine.low %v2184, %v2185
    %v2190 = vunpack.c.l.s4 1966171168
    %v2191 = vunpack.c.0.s8 %v2190
    %v2192 = vlaneseq
    %v2193 = vshrl.u32 %v2192, 7
    %v2194 = vsub.s32 %v2191, %v2193
    %v2195 = vrot.slane %v2188, %v2194
    %v2197 = vunpack.c.l.s4 1966171168
    %v2198 = vunpack.c.0.s8 %v2197
    %v2199 = vlaneseq
    %v2200 = vshrl.u32 %v2199, 7
    %v2201 = vsub.s32 %v2198, %v2200
    %v2202 = vrot.slane %v2195, %v2201
    %v2204 = vsub.f32 %v1944, %v2202
    %v2205 = vlaneseq
    %v2206 = vshrl.u32 %v2205, 7
    %v2207 = vsub.s32 0, %v2206
    %v2208 = vrot.slane %v2182, %v2207
    %v2209 = vlaneseq
    %v2210 = vshrl.u32 %v2209, 7
    %v2211 = vsub.s32 0, %v2210
    %v2212 = vrot.slane %v2183, %v2211
    %v2213 = vmul.f32 %v1879, %v2208
    %v2214 = vmul.f32 %v1880, %v2212
    %v2215 = vmul.f32 %v1881, %v2208
    %v2216 = vmul.f32 %v1882, %v2212
    %v2217 = vmul.f32 %v1883, %v2208
    %v2218 = vmul.f32 %v1884, %v2212
    %v2219 = vmul.f32 %v1885, %v2208
    %v2220 = vmul.f32 %v1886, %v2212
    %v2221 = vmul.f32 %v1887, %v2208
    %v2222 = vmul.f32 %v1888, %v2212
    %v2223 = vmul.f32 %v1889, %v2208
    %v2224 = vmul.f32 %v1890, %v2212
    %v2225 = vmul.f32 %v1891, %v2208
    %v2226 = vmul.f32 %v1892, %v2212
    %v2227 = vmul.f32 %v1893, %v2208
    %v2228 = vmul.f32 %v1894, %v2212
    %v2229 = vmul.f32 %v1895, %v2208
    %v2230 = vmul.f32 %v1896, %v2212
    %v2231 = vmul.f32 %v1897, %v2208
    %v2232 = vmul.f32 %v1898, %v2212
    %v2233 = vmul.f32 %v1899, %v2208
    %v2234 = vmul.f32 %v1900, %v2212
    %v2235 = vmul.f32 %v1901, %v2208
    %v2236 = vmul.f32 %v1902, %v2212
    %v2237 = vmul.f32 %v1903, %v2208
    %v2238 = vmul.f32 %v1904, %v2212
    %v2239 = vmul.f32 %v1905, %v2208
    %v2240 = vmul.f32 %v1906, %v2212
    %v2241 = vmul.f32 %v1907, %v2208
    %v2242 = vmul.f32 %v1908, %v2212
    %v2243 = vmul.f32 %v1909, %v2208
    %v2244 = vmul.f32 %v1910, %v2212
    %v2245 = vmul.f32 %v1911, %v2208
    %v2246 = vmul.f32 %v1912, %v2212
    %v2247 = vmul.f32 %v1913, %v2208
    %v2248 = vmul.f32 %v1914, %v2212
    %v2249 = vmul.f32 %v1915, %v2208
    %v2250 = vmul.f32 %v1916, %v2212
    %v2251 = vmul.f32 %v1917, %v2208
    %v2252 = vmul.f32 %v1918, %v2212
    %v2253 = vmul.f32 %v1919, %v2208
    %v2254 = vmul.f32 %v1920, %v2212
    %v2255 = vmul.f32 %v1921, %v2208
    %v2256 = vmul.f32 %v1922, %v2212
    %v2257 = vmul.f32 %v1923, %v2208
    %v2258 = vmul.f32 %v1924, %v2212
    %v2259 = vmul.f32 %v1925, %v2208
    %v2260 = vmul.f32 %v1926, %v2212
    %v2261 = vmul.f32 %v1927, %v2208
    %v2262 = vmul.f32 %v1928, %v2212
    %v2263 = vmul.f32 %v1929, %v2208
    %v2264 = vmul.f32 %v1930, %v2212
    %v2265 = vmul.f32 %v1931, %v2208
    %v2266 = vmul.f32 %v1932, %v2212
    %v2267 = vmul.f32 %v1933, %v2208
    %v2268 = vmul.f32 %v1934, %v2212
    %v2269 = vmul.f32 %v1935, %v2208
    %v2270 = vmul.f32 %v1936, %v2212
    %v2271 = vmul.f32 %v1937, %v2208
    %v2272 = vmul.f32 %v1938, %v2212
    %v2273 = vmul.f32 %v1939, %v2208
    %v2274 = vmul.f32 %v1940, %v2212
    %v2275 = vmul.f32 %v1941, %v2208
    %v2276 = vmul.f32 %v1942, %v2212
    %v2278 = vlaneseq
    %v2279 = vshrl.u32 %v2278, 7
    %v2280 = vsub.s32 0, %v2279
    %v2281 = vrot.slane %v2204, %v2280
    %v2282 = vlaneseq
    %v2283 = vshrl.u32 %v2282, 7
    %v2284 = vsub.s32 1, %v2283
    %v2285 = vrot.slane %v2204, %v2284
    %v2288 = vadd.f32 %v2213, %v2281
    %v2289 = vadd.f32 %v2214, %v2285
    %v2290 = vadd.f32 %v2215, %v2281
    %v2291 = vadd.f32 %v2216, %v2285
    %v2292 = vadd.f32 %v2217, %v2281
    %v2293 = vadd.f32 %v2218, %v2285
    %v2294 = vadd.f32 %v2219, %v2281
    %v2295 = vadd.f32 %v2220, %v2285
    %v2296 = vadd.f32 %v2221, %v2281
    %v2297 = vadd.f32 %v2222, %v2285
    %v2298 = vadd.f32 %v2223, %v2281
    %v2299 = vadd.f32 %v2224, %v2285
    %v2300 = vadd.f32 %v2225, %v2281
    %v2301 = vadd.f32 %v2226, %v2285
    %v2302 = vadd.f32 %v2227, %v2281
    %v2303 = vadd.f32 %v2228, %v2285
    %v2304 = vadd.f32 %v2229, %v2281
    %v2305 = vadd.f32 %v2230, %v2285
    %v2306 = vadd.f32 %v2231, %v2281
    %v2307 = vadd.f32 %v2232, %v2285
    %v2308 = vadd.f32 %v2233, %v2281
    %v2309 = vadd.f32 %v2234, %v2285
    %v2310 = vadd.f32 %v2235, %v2281
    %v2311 = vadd.f32 %v2236, %v2285
    %v2312 = vadd.f32 %v2237, %v2281
    %v2313 = vadd.f32 %v2238, %v2285
    %v2314 = vadd.f32 %v2239, %v2281
    %v2315 = vadd.f32 %v2240, %v2285
    %v2316 = vadd.f32 %v2241, %v2281
    %v2317 = vadd.f32 %v2242, %v2285
    %v2318 = vadd.f32 %v2243, %v2281
    %v2319 = vadd.f32 %v2244, %v2285
    %v2320 = vadd.f32 %v2245, %v2281
    %v2321 = vadd.f32 %v2246, %v2285
    %v2322 = vadd.f32 %v2247, %v2281
    %v2323 = vadd.f32 %v2248, %v2285
    %v2324 = vadd.f32 %v2249, %v2281
    %v2325 = vadd.f32 %v2250, %v2285
    %v2326 = vadd.f32 %v2251, %v2281
    %v2327 = vadd.f32 %v2252, %v2285
    %v2328 = vadd.f32 %v2253, %v2281
    %v2329 = vadd.f32 %v2254, %v2285
    %v2330 = vadd.f32 %v2255, %v2281
    %v2331 = vadd.f32 %v2256, %v2285
    %v2332 = vadd.f32 %v2257, %v2281
    %v2333 = vadd.f32 %v2258, %v2285
    %v2334 = vadd.f32 %v2259, %v2281
    %v2335 = vadd.f32 %v2260, %v2285
    %v2336 = vadd.f32 %v2261, %v2281
    %v2337 = vadd.f32 %v2262, %v2285
    %v2338 = vadd.f32 %v2263, %v2281
    %v2339 = vadd.f32 %v2264, %v2285
    %v2340 = vadd.f32 %v2265, %v2281
    %v2341 = vadd.f32 %v2266, %v2285
    %v2342 = vadd.f32 %v2267, %v2281
    %v2343 = vadd.f32 %v2268, %v2285
    %v2344 = vadd.f32 %v2269, %v2281
    %v2345 = vadd.f32 %v2270, %v2285
    %v2346 = vadd.f32 %v2271, %v2281
    %v2347 = vadd.f32 %v2272, %v2285
    %v2348 = vadd.f32 %v2273, %v2281
    %v2349 = vadd.f32 %v2274, %v2285
    %v2350 = vadd.f32 %v2275, %v2281
    %v2351 = vadd.f32 %v2276, %v2285
    %v2352 = vpack.c.bf16 %v2290, %v2288
    %v2353 = vpack.c.bf16 %v2291, %v2289
    %v2354 = vpack.c.bf16 %v2294, %v2292
    %v2355 = vpack.c.bf16 %v2295, %v2293
    %v2356 = vpack.c.bf16 %v2298, %v2296
    %v2357 = vpack.c.bf16 %v2299, %v2297
    %v2358 = vpack.c.bf16 %v2302, %v2300
    %v2359 = vpack.c.bf16 %v2303, %v2301
    %v2360 = vpack.c.bf16 %v2306, %v2304
    %v2361 = vpack.c.bf16 %v2307, %v2305
    %v2362 = vpack.c.bf16 %v2310, %v2308
    %v2363 = vpack.c.bf16 %v2311, %v2309
    %v2364 = vpack.c.bf16 %v2314, %v2312
    %v2365 = vpack.c.bf16 %v2315, %v2313
    %v2366 = vpack.c.bf16 %v2318, %v2316
    %v2367 = vpack.c.bf16 %v2319, %v2317
    %v2368 = vpack.c.bf16 %v2322, %v2320
    %v2369 = vpack.c.bf16 %v2323, %v2321
    %v2370 = vpack.c.bf16 %v2326, %v2324
    %v2371 = vpack.c.bf16 %v2327, %v2325
    %v2372 = vpack.c.bf16 %v2330, %v2328
    %v2373 = vpack.c.bf16 %v2331, %v2329
    %v2374 = vpack.c.bf16 %v2334, %v2332
    %v2375 = vpack.c.bf16 %v2335, %v2333
    %v2376 = vpack.c.bf16 %v2338, %v2336
    %v2377 = vpack.c.bf16 %v2339, %v2337
    %v2378 = vpack.c.bf16 %v2342, %v2340
    %v2379 = vpack.c.bf16 %v2343, %v2341
    %v2380 = vpack.c.bf16 %v2346, %v2344
    %v2381 = vpack.c.bf16 %v2347, %v2345
    %v2382 = vpack.c.bf16 %v2350, %v2348
    %v2383 = vpack.c.bf16 %v2351, %v2349
    %v2384 = vld [vmem:[#allocation14] sm:$0xf]
    %v2385 = vld [vmem:[#allocation14 + $0x4] sm:$0xf]
    %v2386 = vld [vmem:[#allocation14 + $0x8] sm:$0xf]
    %v2387 = vld [vmem:[#allocation14 + $0xc] sm:$0xf]
    %v2388 = vld [vmem:[#allocation14 + $0x10] sm:$0xf]
    %v2389 = vld [vmem:[#allocation14 + $0x14] sm:$0xf]
    %v2390 = vld [vmem:[#allocation14 + $0x18] sm:$0xf]
    %v2391 = vld [vmem:[#allocation14 + $0x1c] sm:$0xf]
    %v2392 = vld [vmem:[#allocation14 + $0x20] sm:$0xf]
    %v2393 = vld [vmem:[#allocation14 + $0x24] sm:$0xf]
    %v2394 = vld [vmem:[#allocation14 + $0x28] sm:$0xf]
    %v2395 = vld [vmem:[#allocation14 + $0x2c] sm:$0xf]
    %v2396 = vld [vmem:[#allocation14 + $0x30] sm:$0xf]
    %v2397 = vld [vmem:[#allocation14 + $0x34] sm:$0xf]
    %v2398 = vld [vmem:[#allocation14 + $0x38] sm:$0xf]
    %v2399 = vld [vmem:[#allocation14 + $0x3c] sm:$0xf]
    %v2400 = vld [vmem:[#allocation14 + $0x40] sm:$0xf]
    %v2401 = vld [vmem:[#allocation14 + $0x44] sm:$0xf]
    %v2402 = vld [vmem:[#allocation14 + $0x48] sm:$0xf]
    %v2403 = vld [vmem:[#allocation14 + $0x4c] sm:$0xf]
    %v2404 = vld [vmem:[#allocation14 + $0x50] sm:$0xf]
    %v2405 = vld [vmem:[#allocation14 + $0x54] sm:$0xf]
    %v2406 = vld [vmem:[#allocation14 + $0x58] sm:$0xf]
    %v2407 = vld [vmem:[#allocation14 + $0x5c] sm:$0xf]
    %v2408 = vld [vmem:[#allocation14 + $0x60] sm:$0xf]
    %v2409 = vld [vmem:[#allocation14 + $0x64] sm:$0xf]
    %v2410 = vld [vmem:[#allocation14 + $0x68] sm:$0xf]
    %v2411 = vld [vmem:[#allocation14 + $0x6c] sm:$0xf]
    %v2412 = vld [vmem:[#allocation14 + $0x70] sm:$0xf]
    %v2413 = vld [vmem:[#allocation14 + $0x74] sm:$0xf]
    %v2414 = vld [vmem:[#allocation14 + $0x78] sm:$0xf]
    %v2415 = vld [vmem:[#allocation14 + $0x7c] sm:$0xf]
    %v2416 = vld [vmem:[%s14] sm:$0x1]
    %v2418 = vlaneseq
    %v2419 = vshrl.u32 %v2418, 7
    %v2420 = vsub.s32 0, %v2419
    %v2421 = vrot.slane %v2416, %v2420
    %v2455 = vunpack.c.l.b16 %v2384
    %v2456 = vunpack.c.l.b16 %v2385
    %v2457 = vunpack.c.l.b16 %v2386
    %v2458 = vunpack.c.l.b16 %v2387
    %v2459 = vunpack.c.l.b16 %v2388
    %v2460 = vunpack.c.l.b16 %v2389
    %v2461 = vunpack.c.l.b16 %v2390
    %v2462 = vunpack.c.l.b16 %v2391
    %v2463 = vunpack.c.l.b16 %v2392
    %v2464 = vunpack.c.l.b16 %v2393
    %v2465 = vunpack.c.l.b16 %v2394
    %v2466 = vunpack.c.l.b16 %v2395
    %v2467 = vunpack.c.l.b16 %v2396
    %v2468 = vunpack.c.l.b16 %v2397
    %v2469 = vunpack.c.l.b16 %v2398
    %v2470 = vunpack.c.l.b16 %v2399
    %v2471 = vunpack.c.l.b16 %v2400
    %v2472 = vunpack.c.l.b16 %v2401
    %v2473 = vunpack.c.l.b16 %v2402
    %v2474 = vunpack.c.l.b16 %v2403
    %v2475 = vunpack.c.l.b16 %v2404
    %v2476 = vunpack.c.l.b16 %v2405
    %v2477 = vunpack.c.l.b16 %v2406
    %v2478 = vunpack.c.l.b16 %v2407
    %v2479 = vunpack.c.l.b16 %v2408
    %v2480 = vunpack.c.l.b16 %v2409
    %v2481 = vunpack.c.l.b16 %v2410
    %v2482 = vunpack.c.l.b16 %v2411
    %v2483 = vunpack.c.l.b16 %v2412
    %v2484 = vunpack.c.l.b16 %v2413
    %v2485 = vunpack.c.l.b16 %v2414
    %v2486 = vunpack.c.l.b16 %v2415
    %v2487 = vpack.c.b16 %v2456, %v2455
    %v2488 = vpack.c.b16 %v2458, %v2457
    %v2489 = vpack.c.b16 %v2460, %v2459
    %v2490 = vpack.c.b16 %v2462, %v2461
    %v2491 = vpack.c.b16 %v2464, %v2463
    %v2492 = vpack.c.b16 %v2466, %v2465
    %v2493 = vpack.c.b16 %v2468, %v2467
    %v2494 = vpack.c.b16 %v2470, %v2469
    %v2495 = vpack.c.b16 %v2472, %v2471
    %v2496 = vpack.c.b16 %v2474, %v2473
    %v2497 = vpack.c.b16 %v2476, %v2475
    %v2498 = vpack.c.b16 %v2478, %v2477
    %v2499 = vpack.c.b16 %v2480, %v2479
    %v2500 = vpack.c.b16 %v2482, %v2481
    %v2501 = vpack.c.b16 %v2484, %v2483
    %v2502 = vpack.c.b16 %v2486, %v2485
    %2519 = vmatprep.subr.bf16.mxu0 0
    %2520 = vmatpush1.bf16.msra.mxu0 %v2487
    %2521 = vmatprep.subr.bf16.mxu0 0
    %2522 = vmatpush1.bf16.msra.mxu0 %v2488
    %2523 = vmatprep.subr.bf16.mxu0 0
    %2524 = vmatpush1.bf16.msra.mxu0 %v2489
    %2525 = vmatprep.subr.bf16.mxu0 0
    %2526 = vmatpush1.bf16.msra.mxu0 %v2490
    %2527 = vmatprep.subr.bf16.mxu0 0
    %2528 = vmatpush1.bf16.msra.mxu0 %v2491
    %2529 = vmatprep.subr.bf16.mxu0 0
    %2530 = vmatpush1.bf16.msra.mxu0 %v2492
    %2531 = vmatprep.subr.bf16.mxu0 0
    %2532 = vmatpush1.bf16.msra.mxu0 %v2493
    %2533 = vmatprep.subr.bf16.mxu0 0
    %2534 = vmatpush1.bf16.msra.mxu0 %v2494
    %2535 = vmatprep.subr.bf16.mxu0 0
    %2536 = vmatpush1.bf16.msra.mxu0 %v2495
    %2537 = vmatprep.subr.bf16.mxu0 0
    %2538 = vmatpush1.bf16.msra.mxu0 %v2496
    %2539 = vmatprep.subr.bf16.mxu0 0
    %2540 = vmatpush1.bf16.msra.mxu0 %v2497
    %2541 = vmatprep.subr.bf16.mxu0 0
    %2542 = vmatpush1.bf16.msra.mxu0 %v2498
    %2543 = vmatprep.subr.bf16.mxu0 0
    %2544 = vmatpush1.bf16.msra.mxu0 %v2499
    %2545 = vmatprep.subr.bf16.mxu0 0
    %2546 = vmatpush1.bf16.msra.mxu0 %v2500
    %2547 = vmatprep.subr.bf16.mxu0 0
    %2548 = vmatpush1.bf16.msra.mxu0 %v2501
    %2549 = vmatprep.subr.bf16.mxu0 0
    %2550 = vmatpush1.bf16.msra.mxu0 %v2502
    %2551 = vmatprep.mubr.bf16.mxu0 %v2353
    %2552 = vmatmul.mubr.bf16.gmra.mrb[0].mxu0 %v2352
    %v2553 = vpop.f32.mrb[0].mxu0
    %v2554 = vadd.f32 %v2421, %v2553
    %v2555 = vpop.f32.mrb[0].mxu0
    %v2556 = vpop.f32.mrb[0].mxu0
    %v2557 = vadd.f32 %v2421, %v2556
    %v2558 = vpop.f32.mrb[0].mxu0
    %2559 = vmatprep.mubr.bf16.mxu0 %v2355
    %2560 = vmatmul.mubr.bf16.gmra.mrb[0].mxu0 %v2354
    %v2561 = vpop.f32.mrb[0].mxu0
    %v2562 = vadd.f32 %v2421, %v2561
    %v2563 = vpop.f32.mrb[0].mxu0
    %v2564 = vpop.f32.mrb[0].mxu0
    %v2565 = vadd.f32 %v2421, %v2564
    %v2566 = vpop.f32.mrb[0].mxu0
    %2567 = vmatprep.mubr.bf16.mxu0 %v2357
    %2568 = vmatmul.mubr.bf16.gmra.mrb[0].mxu0 %v2356
    %v2569 = vpop.f32.mrb[0].mxu0
    %v2570 = vadd.f32 %v2421, %v2569
    %v2571 = vpop.f32.mrb[0].mxu0
    %v2572 = vpop.f32.mrb[0].mxu0
    %v2573 = vadd.f32 %v2421, %v2572
    %v2574 = vpop.f32.mrb[0].mxu0
    %2575 = vmatprep.mubr.bf16.mxu0 %v2359
    %2576 = vmatmul.mubr.bf16.gmra.mrb[0].mxu0 %v2358
    %v2577 = vpop.f32.mrb[0].mxu0
    %v2578 = vadd.f32 %v2421, %v2577
    %v2579 = vpop.f32.mrb[0].mxu0
    %v2580 = vpop.f32.mrb[0].mxu0
    %v2581 = vadd.f32 %v2421, %v2580
    %v2582 = vpop.f32.mrb[0].mxu0
    %2583 = vmatprep.mubr.bf16.mxu0 %v2361
    %2584 = vmatmul.mubr.bf16.gmra.mrb[0].mxu0 %v2360
    %v2585 = vpop.f32.mrb[0].mxu0
    %v2586 = vadd.f32 %v2421, %v2585
    %v2587 = vpop.f32.mrb[0].mxu0
    %v2588 = vpop.f32.mrb[0].mxu0
    %v2589 = vadd.f32 %v2421, %v2588
    %v2590 = vpop.f32.mrb[0].mxu0
    %2591 = vmatprep.mubr.bf16.mxu0 %v2363
    %2592 = vmatmul.mubr.bf16.gmra.mrb[0].mxu0 %v2362
    %v2593 = vpop.f32.mrb[0].mxu0
    %v2594 = vadd.f32 %v2421, %v2593
    %v2595 = vpop.f32.mrb[0].mxu0
    %v2596 = vpop.f32.mrb[0].mxu0
    %v2597 = vadd.f32 %v2421, %v2596
    %v2598 = vpop.f32.mrb[0].mxu0
    %2599 = vmatprep.mubr.bf16.mxu0 %v2365
    %2600 = vmatmul.mubr.bf16.gmra.mrb[0].mxu0 %v2364
    %v2601 = vpop.f32.mrb[0].mxu0
    %v2602 = vadd.f32 %v2421, %v2601
    %v2603 = vpop.f32.mrb[0].mxu0
    %v2604 = vpop.f32.mrb[0].mxu0
    %v2605 = vadd.f32 %v2421, %v2604
    %v2606 = vpop.f32.mrb[0].mxu0
    %2607 = vmatprep.mubr.bf16.mxu0 %v2367
    %2608 = vmatmul.mubr.bf16.gmra.mrb[0].mxu0 %v2366
    %v2609 = vpop.f32.mrb[0].mxu0
    %v2610 = vadd.f32 %v2421, %v2609
    %v2611 = vpop.f32.mrb[0].mxu0
    %v2612 = vpop.f32.mrb[0].mxu0
    %v2613 = vadd.f32 %v2421, %v2612
    %v2614 = vpop.f32.mrb[0].mxu0
    %2615 = vmatprep.mubr.bf16.mxu0 %v2369
    %2616 = vmatmul.mubr.bf16.gmra.mrb[0].mxu0 %v2368
    %v2617 = vpop.f32.mrb[0].mxu0
    %v2618 = vadd.f32 %v2421, %v2617
    %v2619 = vpop.f32.mrb[0].mxu0
    %v2620 = vpop.f32.mrb[0].mxu0
    %v2621 = vadd.f32 %v2421, %v2620
    %v2622 = vpop.f32.mrb[0].mxu0
    %2623 = vmatprep.mubr.bf16.mxu0 %v2371
    %2624 = vmatmul.mubr.bf16.gmra.mrb[0].mxu0 %v2370
    %v2625 = vpop.f32.mrb[0].mxu0
    %v2626 = vadd.f32 %v2421, %v2625
    %v2627 = vpop.f32.mrb[0].mxu0
    %v2628 = vpop.f32.mrb[0].mxu0
    %v2629 = vadd.f32 %v2421, %v2628
    %v2630 = vpop.f32.mrb[0].mxu0
    %2631 = vmatprep.mubr.bf16.mxu0 %v2373
    %2632 = vmatmul.mubr.bf16.gmra.mrb[0].mxu0 %v2372
    %v2633 = vpop.f32.mrb[0].mxu0
    %v2634 = vadd.f32 %v2421, %v2633
    %v2635 = vpop.f32.mrb[0].mxu0
    %v2636 = vpop.f32.mrb[0].mxu0
    %v2637 = vadd.f32 %v2421, %v2636
    %v2638 = vpop.f32.mrb[0].mxu0
    %2639 = vmatprep.mubr.bf16.mxu0 %v2375
    %2640 = vmatmul.mubr.bf16.gmra.mrb[0].mxu0 %v2374
    %v2641 = vpop.f32.mrb[0].mxu0
    %v2642 = vadd.f32 %v2421, %v2641
    %v2643 = vpop.f32.mrb[0].mxu0
    %v2644 = vpop.f32.mrb[0].mxu0
    %v2645 = vadd.f32 %v2421, %v2644
    %v2646 = vpop.f32.mrb[0].mxu0
    %2647 = vmatprep.mubr.bf16.mxu0 %v2377
    %2648 = vmatmul.mubr.bf16.gmra.mrb[0].mxu0 %v2376
    %v2649 = vpop.f32.mrb[0].mxu0
    %v2650 = vadd.f32 %v2421, %v2649
    %v2651 = vpop.f32.mrb[0].mxu0
    %v2652 = vpop.f32.mrb[0].mxu0
    %v2653 = vadd.f32 %v2421, %v2652
    %v2654 = vpop.f32.mrb[0].mxu0
    %2655 = vmatprep.mubr.bf16.mxu0 %v2379
    %2656 = vmatmul.mubr.bf16.gmra.mrb[0].mxu0 %v2378
    %v2657 = vpop.f32.mrb[0].mxu0
    %v2658 = vadd.f32 %v2421, %v2657
    %v2659 = vpop.f32.mrb[0].mxu0
    %v2660 = vpop.f32.mrb[0].mxu0
    %v2661 = vadd.f32 %v2421, %v2660
    %v2662 = vpop.f32.mrb[0].mxu0
    %2663 = vmatprep.mubr.bf16.mxu0 %v2381
    %2664 = vmatmul.mubr.bf16.gmra.mrb[0].mxu0 %v2380
    %v2665 = vpop.f32.mrb[0].mxu0
    %v2666 = vadd.f32 %v2421, %v2665
    %v2667 = vpop.f32.mrb[0].mxu0
    %v2668 = vpop.f32.mrb[0].mxu0
    %v2669 = vadd.f32 %v2421, %v2668
    %v2670 = vpop.f32.mrb[0].mxu0
    %2671 = vmatprep.mubr.bf16.mxu0 %v2383
    %2672 = vmatmul.mubr.bf16.gmra.mrb[0].mxu0 %v2382
    %v2673 = vpop.f32.mrb[0].mxu0
    %v2674 = vadd.f32 %v2421, %v2673
    %v2675 = vpop.f32.mrb[0].mxu0
    %v2676 = vpop.f32.mrb[0].mxu0
    %v2677 = vadd.f32 %v2421, %v2676
    %v2678 = vpop.f32.mrb[0].mxu0
    %2679 = vdwg.mxu0
    %v2680 = vmax.f32 %v2554, 0.0
    %v2681 = vmax.f32 %v2557, 0.0
    %v2682 = vmax.f32 %v2562, 0.0
    %v2683 = vmax.f32 %v2565, 0.0
    %v2684 = vmax.f32 %v2570, 0.0
    %v2685 = vmax.f32 %v2573, 0.0
    %v2686 = vmax.f32 %v2578, 0.0
    %v2687 = vmax.f32 %v2581, 0.0
    %v2688 = vmax.f32 %v2586, 0.0
    %v2689 = vmax.f32 %v2589, 0.0
    %v2690 = vmax.f32 %v2594, 0.0
    %v2691 = vmax.f32 %v2597, 0.0
    %v2692 = vmax.f32 %v2602, 0.0
    %v2693 = vmax.f32 %v2605, 0.0
    %v2694 = vmax.f32 %v2610, 0.0
    %v2695 = vmax.f32 %v2613, 0.0
    %v2696 = vmax.f32 %v2618, 0.0
    %v2697 = vmax.f32 %v2621, 0.0
    %v2698 = vmax.f32 %v2626, 0.0
    %v2699 = vmax.f32 %v2629, 0.0
    %v2700 = vmax.f32 %v2634, 0.0
    %v2701 = vmax.f32 %v2637, 0.0
    %v2702 = vmax.f32 %v2642, 0.0
    %v2703 = vmax.f32 %v2645, 0.0
    %v2704 = vmax.f32 %v2650, 0.0
    %v2705 = vmax.f32 %v2653, 0.0
    %v2706 = vmax.f32 %v2658, 0.0
    %v2707 = vmax.f32 %v2661, 0.0
    %v2708 = vmax.f32 %v2666, 0.0
    %v2709 = vmax.f32 %v2669, 0.0
    %v2710 = vmax.f32 %v2674, 0.0
    %v2711 = vmax.f32 %v2677, 0.0
    %v2712 = vld [vmem:[%s15] sm:$0x1]
    %v2713 = vld [vmem:[%s16] sm:$0x1]
    %v2714 = vadd.f32 %v2680, %v2681
    %v2715 = vadd.f32 %v2714, %v2682
    %v2716 = vadd.f32 %v2715, %v2683
    %v2717 = vadd.f32 %v2716, %v2684
    %v2718 = vadd.f32 %v2717, %v2685
    %v2719 = vadd.f32 %v2718, %v2686
    %v2720 = vadd.f32 %v2719, %v2687
    %v2721 = vadd.f32 %v2720, %v2688
    %v2722 = vadd.f32 %v2721, %v2689
    %v2723 = vadd.f32 %v2722, %v2690
    %v2724 = vadd.f32 %v2723, %v2691
    %v2725 = vadd.f32 %v2724, %v2692
    %v2726 = vadd.f32 %v2725, %v2693
    %v2727 = vadd.f32 %v2726, %v2694
    %v2728 = vadd.f32 %v2727, %v2695
    %v2729 = vadd.f32 %v2728, %v2696
    %v2730 = vadd.f32 %v2729, %v2697
    %v2731 = vadd.f32 %v2730, %v2698
    %v2732 = vadd.f32 %v2731, %v2699
    %v2733 = vadd.f32 %v2732, %v2700
    %v2734 = vadd.f32 %v2733, %v2701
    %v2735 = vadd.f32 %v2734, %v2702
    %v2736 = vadd.f32 %v2735, %v2703
    %v2737 = vadd.f32 %v2736, %v2704
    %v2738 = vadd.f32 %v2737, %v2705
    %v2739 = vadd.f32 %v2738, %v2706
    %v2740 = vadd.f32 %v2739, %v2707
    %v2741 = vadd.f32 %v2740, %v2708
    %v2742 = vadd.f32 %v2741, %v2709
    %v2743 = vadd.f32 %v2742, %v2710
    %v2744 = vadd.f32 %v2743, %v2711
    %v2745 = vrot.slane %v2744, 4
    %v2746 = vadd.f32 %v2744, %v2745
    %v2747 = vrot.slane %v2746, 2
    %v2748 = vadd.f32 %v2746, %v2747
    %v2749 = vrot.slane %v2748, 1
    %v2750 = vadd.f32 %v2748, %v2749
    %v2751 = vmul.f32 %v2680, %v2680
    %v2752 = vmul.f32 %v2681, %v2681
    %v2753 = vmul.f32 %v2682, %v2682
    %v2754 = vmul.f32 %v2683, %v2683
    %v2755 = vmul.f32 %v2684, %v2684
    %v2756 = vmul.f32 %v2685, %v2685
    %v2757 = vmul.f32 %v2686, %v2686
    %v2758 = vmul.f32 %v2687, %v2687
    %v2759 = vmul.f32 %v2688, %v2688
    %v2760 = vmul.f32 %v2689, %v2689
    %v2761 = vmul.f32 %v2690, %v2690
    %v2762 = vmul.f32 %v2691, %v2691
    %v2763 = vmul.f32 %v2692, %v2692
    %v2764 = vmul.f32 %v2693, %v2693
    %v2765 = vmul.f32 %v2694, %v2694
    %v2766 = vmul.f32 %v2695, %v2695
    %v2767 = vmul.f32 %v2696, %v2696
    %v2768 = vmul.f32 %v2697, %v2697
    %v2769 = vmul.f32 %v2698, %v2698
    %v2770 = vmul.f32 %v2699, %v2699
    %v2771 = vmul.f32 %v2700, %v2700
    %v2772 = vmul.f32 %v2701, %v2701
    %v2773 = vmul.f32 %v2702, %v2702
    %v2774 = vmul.f32 %v2703, %v2703
    %v2775 = vmul.f32 %v2704, %v2704
    %v2776 = vmul.f32 %v2705, %v2705
    %v2777 = vmul.f32 %v2706, %v2706
    %v2778 = vmul.f32 %v2707, %v2707
    %v2779 = vmul.f32 %v2708, %v2708
    %v2780 = vmul.f32 %v2709, %v2709
    %v2781 = vmul.f32 %v2710, %v2710
    %v2782 = vmul.f32 %v2711, %v2711
    %v2783 = vadd.f32 %v2751, %v2752
    %v2784 = vadd.f32 %v2783, %v2753
    %v2785 = vadd.f32 %v2784, %v2754
    %v2786 = vadd.f32 %v2785, %v2755
    %v2787 = vadd.f32 %v2786, %v2756
    %v2788 = vadd.f32 %v2787, %v2757
    %v2789 = vadd.f32 %v2788, %v2758
    %v2790 = vadd.f32 %v2789, %v2759
    %v2791 = vadd.f32 %v2790, %v2760
    %v2792 = vadd.f32 %v2791, %v2761
    %v2793 = vadd.f32 %v2792, %v2762
    %v2794 = vadd.f32 %v2793, %v2763
    %v2795 = vadd.f32 %v2794, %v2764
    %v2796 = vadd.f32 %v2795, %v2765
    %v2797 = vadd.f32 %v2796, %v2766
    %v2798 = vadd.f32 %v2797, %v2767
    %v2799 = vadd.f32 %v2798, %v2768
    %v2800 = vadd.f32 %v2799, %v2769
    %v2801 = vadd.f32 %v2800, %v2770
    %v2802 = vadd.f32 %v2801, %v2771
    %v2803 = vadd.f32 %v2802, %v2772
    %v2804 = vadd.f32 %v2803, %v2773
    %v2805 = vadd.f32 %v2804, %v2774
    %v2806 = vadd.f32 %v2805, %v2775
    %v2807 = vadd.f32 %v2806, %v2776
    %v2808 = vadd.f32 %v2807, %v2777
    %v2809 = vadd.f32 %v2808, %v2778
    %v2810 = vadd.f32 %v2809, %v2779
    %v2811 = vadd.f32 %v2810, %v2780
    %v2812 = vadd.f32 %v2811, %v2781
    %v2813 = vadd.f32 %v2812, %v2782
    %v2814 = vrot.slane %v2813, 4
    %v2815 = vadd.f32 %v2813, %v2814
    %v2816 = vrot.slane %v2815, 2
    %v2817 = vadd.f32 %v2815, %v2816
    %v2818 = vrot.slane %v2817, 1
    %v2819 = vadd.f32 %v2817, %v2818
    %v2820 = vmul.f32 %v2750, 0.00390625
    %v2821 = vmul.f32 %v2819, 0.00390625
    %v2822 = vmul.f32 %v2820, %v2820
    %v2823 = vsub.f32 %v2821, %v2822
    %v2824 = vmax.f32 %v2823, 0.0
    %v2825 = vadd.f32 %v2824, 1e-05
    %v2826 = vrsqrt.pop %v2825
    %v2827 = vmul.f32 %v2826, %v2712
    %v2828 = vmul.f32 %v2820, %v2827
    %v2829 = vsub.f32 %v2713, %v2828
    %v2830 = vlaneseq
    %v2831 = vshrl.u32 %v2830, 7
    %v2832 = vsub.s32 0, %v2831
    %v2833 = vrot.slane %v2827, %v2832
    %v2834 = vmul.f32 %v2680, %v2833
    %v2835 = vmul.f32 %v2681, %v2833
    %v2836 = vmul.f32 %v2682, %v2833
    %v2837 = vmul.f32 %v2683, %v2833
    %v2838 = vmul.f32 %v2684, %v2833
    %v2839 = vmul.f32 %v2685, %v2833
    %v2840 = vmul.f32 %v2686, %v2833
    %v2841 = vmul.f32 %v2687, %v2833
    %v2842 = vmul.f32 %v2688, %v2833
    %v2843 = vmul.f32 %v2689, %v2833
    %v2844 = vmul.f32 %v2690, %v2833
    %v2845 = vmul.f32 %v2691, %v2833
    %v2846 = vmul.f32 %v2692, %v2833
    %v2847 = vmul.f32 %v2693, %v2833
    %v2848 = vmul.f32 %v2694, %v2833
    %v2849 = vmul.f32 %v2695, %v2833
    %v2850 = vmul.f32 %v2696, %v2833
    %v2851 = vmul.f32 %v2697, %v2833
    %v2852 = vmul.f32 %v2698, %v2833
    %v2853 = vmul.f32 %v2699, %v2833
    %v2854 = vmul.f32 %v2700, %v2833
    %v2855 = vmul.f32 %v2701, %v2833
    %v2856 = vmul.f32 %v2702, %v2833
    %v2857 = vmul.f32 %v2703, %v2833
    %v2858 = vmul.f32 %v2704, %v2833
    %v2859 = vmul.f32 %v2705, %v2833
    %v2860 = vmul.f32 %v2706, %v2833
    %v2861 = vmul.f32 %v2707, %v2833
    %v2862 = vmul.f32 %v2708, %v2833
    %v2863 = vmul.f32 %v2709, %v2833
    %v2864 = vmul.f32 %v2710, %v2833
    %v2865 = vmul.f32 %v2711, %v2833
    %v2867 = vlaneseq
    %v2868 = vshrl.u32 %v2867, 7
    %v2869 = vsub.s32 0, %v2868
    %v2870 = vrot.slane %v2829, %v2869
    %v2872 = vadd.f32 %v2834, %v2870
    %v2873 = vadd.f32 %v2835, %v2870
    %v2874 = vadd.f32 %v2836, %v2870
    %v2875 = vadd.f32 %v2837, %v2870
    %v2876 = vadd.f32 %v2838, %v2870
    %v2877 = vadd.f32 %v2839, %v2870
    %v2878 = vadd.f32 %v2840, %v2870
    %v2879 = vadd.f32 %v2841, %v2870
    %v2880 = vadd.f32 %v2842, %v2870
    %v2881 = vadd.f32 %v2843, %v2870
    %v2882 = vadd.f32 %v2844, %v2870
    %v2883 = vadd.f32 %v2845, %v2870
    %v2884 = vadd.f32 %v2846, %v2870
    %v2885 = vadd.f32 %v2847, %v2870
    %v2886 = vadd.f32 %v2848, %v2870
    %v2887 = vadd.f32 %v2849, %v2870
    %v2888 = vadd.f32 %v2850, %v2870
    %v2889 = vadd.f32 %v2851, %v2870
    %v2890 = vadd.f32 %v2852, %v2870
    %v2891 = vadd.f32 %v2853, %v2870
    %v2892 = vadd.f32 %v2854, %v2870
    %v2893 = vadd.f32 %v2855, %v2870
    %v2894 = vadd.f32 %v2856, %v2870
    %v2895 = vadd.f32 %v2857, %v2870
    %v2896 = vadd.f32 %v2858, %v2870
    %v2897 = vadd.f32 %v2859, %v2870
    %v2898 = vadd.f32 %v2860, %v2870
    %v2899 = vadd.f32 %v2861, %v2870
    %v2900 = vadd.f32 %v2862, %v2870
    %v2901 = vadd.f32 %v2863, %v2870
    %v2902 = vadd.f32 %v2864, %v2870
    %v2903 = vadd.f32 %v2865, %v2870
    %v2904 = vpack.c.bf16 %v2873, %v2872
    %v2905 = vpack.c.bf16 %v2875, %v2874
    %v2906 = vpack.c.bf16 %v2877, %v2876
    %v2907 = vpack.c.bf16 %v2879, %v2878
    %v2908 = vpack.c.bf16 %v2881, %v2880
    %v2909 = vpack.c.bf16 %v2883, %v2882
    %v2910 = vpack.c.bf16 %v2885, %v2884
    %v2911 = vpack.c.bf16 %v2887, %v2886
    %v2912 = vpack.c.bf16 %v2889, %v2888
    %v2913 = vpack.c.bf16 %v2891, %v2890
    %v2914 = vpack.c.bf16 %v2893, %v2892
    %v2915 = vpack.c.bf16 %v2895, %v2894
    %v2916 = vpack.c.bf16 %v2897, %v2896
    %v2917 = vpack.c.bf16 %v2899, %v2898
    %v2918 = vpack.c.bf16 %v2901, %v2900
    %v2919 = vpack.c.bf16 %v2903, %v2902
    %v2920 = vld [vmem:[%s17] sm:$0xf]
    %v2921 = vld [vmem:[%s17 + $0x4] sm:$0xf]
    %v2922 = vld [vmem:[%s17 + $0x8] sm:$0xf]
    %v2923 = vld [vmem:[%s17 + $0xc] sm:$0xf]
    %v2924 = vld [vmem:[%s17 + $0x10] sm:$0xf]
    %v2925 = vld [vmem:[%s17 + $0x14] sm:$0xf]
    %v2926 = vld [vmem:[%s17 + $0x18] sm:$0xf]
    %v2927 = vld [vmem:[%s17 + $0x1c] sm:$0xf]
    %v2928 = vld [vmem:[%s17 + $0x20] sm:$0xf]
    %v2929 = vld [vmem:[%s17 + $0x24] sm:$0xf]
    %v2930 = vld [vmem:[%s17 + $0x28] sm:$0xf]
    %v2931 = vld [vmem:[%s17 + $0x2c] sm:$0xf]
    %v2932 = vld [vmem:[%s17 + $0x30] sm:$0xf]
    %v2933 = vld [vmem:[%s17 + $0x34] sm:$0xf]
    %v2934 = vld [vmem:[%s17 + $0x38] sm:$0xf]
    %v2935 = vld [vmem:[%s17 + $0x3c] sm:$0xf]
    %v2936 = vld [vmem:[%s18] sm:$0x1]
    %v2938 = vlaneseq
    %v2939 = vshrl.u32 %v2938, 7
    %v2940 = vsub.s32 0, %v2939
    %v2941 = vrot.slane %v2936, %v2940
    %v2959 = vunpack.c.l.b16 %v2920
    %v2960 = vunpack.c.l.b16 %v2921
    %v2961 = vunpack.c.l.b16 %v2922
    %v2962 = vunpack.c.l.b16 %v2923
    %v2963 = vunpack.c.l.b16 %v2924
    %v2964 = vunpack.c.l.b16 %v2925
    %v2965 = vunpack.c.l.b16 %v2926
    %v2966 = vunpack.c.l.b16 %v2927
    %v2967 = vunpack.c.l.b16 %v2928
    %v2968 = vunpack.c.l.b16 %v2929
    %v2969 = vunpack.c.l.b16 %v2930
    %v2970 = vunpack.c.l.b16 %v2931
    %v2971 = vunpack.c.l.b16 %v2932
    %v2972 = vunpack.c.l.b16 %v2933
    %v2973 = vunpack.c.l.b16 %v2934
    %v2974 = vunpack.c.l.b16 %v2935
    %v2975 = vpack.c.b16 %v2960, %v2959
    %v2976 = vpack.c.b16 %v2962, %v2961
    %v2977 = vpack.c.b16 %v2964, %v2963
    %v2978 = vpack.c.b16 %v2966, %v2965
    %v2979 = vpack.c.b16 %v2968, %v2967
    %v2980 = vpack.c.b16 %v2970, %v2969
    %v2981 = vpack.c.b16 %v2972, %v2971
    %v2982 = vpack.c.b16 %v2974, %v2973
    %2991 = vmatprep.subr.bf16.mxu0 0
    %2992 = vmatpush1.bf16.msra.mxu0 %v2975
    %2993 = vmatprep.subr.bf16.mxu0 0
    %2994 = vmatpush1.bf16.msra.mxu0 %v2976
    %2995 = vmatprep.subr.bf16.mxu0 0
    %2996 = vmatpush1.bf16.msra.mxu0 %v2977
    %2997 = vmatprep.subr.bf16.mxu0 0
    %2998 = vmatpush1.bf16.msra.mxu0 %v2978
    %2999 = vmatprep.subr.bf16.mxu0 0
    %3000 = vmatpush1.bf16.msra.mxu0 %v2979
    %3001 = vmatprep.subr.bf16.mxu0 0
    %3002 = vmatpush1.bf16.msra.mxu0 %v2980
    %3003 = vmatprep.subr.bf16.mxu0 0
    %3004 = vmatpush1.bf16.msra.mxu0 %v2981
    %3005 = vmatprep.subr.bf16.mxu0 0
    %3006 = vmatpush1.bf16.msra.mxu0 %v2982
    %3007 = vmatprep.subr.bf16.mxu0 0
    %3008 = vmatpush1.bf16.msra.mxu0 0
    %3009 = vmatprep.subr.bf16.mxu0 0
    %3010 = vmatpush1.bf16.msra.mxu0 0
    %3011 = vmatprep.subr.bf16.mxu0 0
    %3012 = vmatpush1.bf16.msra.mxu0 0
    %3013 = vmatprep.subr.bf16.mxu0 0
    %3014 = vmatpush1.bf16.msra.mxu0 0
    %3015 = vmatprep.subr.bf16.mxu0 0
    %3016 = vmatpush1.bf16.msra.mxu0 0
    %3017 = vmatprep.subr.bf16.mxu0 0
    %3018 = vmatpush1.bf16.msra.mxu0 0
    %3019 = vmatprep.subr.bf16.mxu0 0
    %3020 = vmatpush1.bf16.msra.mxu0 0
    %3021 = vmatprep.subr.bf16.mxu0 0
    %3022 = vmatpush1.bf16.msra.mxu0 0
    %3023 = vmatprep.mubr.bf16.mxu0 0
    %3024 = vmatmul.mubr.bf16.gmra.mrb[0].mxu0 %v2904
    %v3025 = vpop.f32.mrb[0].mxu0
    %v3026 = vadd.f32 %v2941, %v3025
    %v3027 = vpop.f32.mrb[0].mxu0
    %v3028 = vpop.f32.mrb[0].mxu0
    %v3029 = vadd.f32 %v2941, %v3028
    %v3030 = vpop.f32.mrb[0].mxu0
    %3031 = vmatprep.mubr.bf16.mxu0 0
    %3032 = vmatmul.mubr.bf16.gmra.mrb[0].mxu0 %v2905
    %v3033 = vpop.f32.mrb[0].mxu0
    %v3034 = vadd.f32 %v2941, %v3033
    %v3035 = vpop.f32.mrb[0].mxu0
    %v3036 = vpop.f32.mrb[0].mxu0
    %v3037 = vadd.f32 %v2941, %v3036
    %v3038 = vpop.f32.mrb[0].mxu0
    %3039 = vmatprep.mubr.bf16.mxu0 0
    %3040 = vmatmul.mubr.bf16.gmra.mrb[0].mxu0 %v2906
    %v3041 = vpop.f32.mrb[0].mxu0
    %v3042 = vadd.f32 %v2941, %v3041
    %v3043 = vpop.f32.mrb[0].mxu0
    %v3044 = vpop.f32.mrb[0].mxu0
    %v3045 = vadd.f32 %v2941, %v3044
    %v3046 = vpop.f32.mrb[0].mxu0
    %3047 = vmatprep.mubr.bf16.mxu0 0
    %3048 = vmatmul.mubr.bf16.gmra.mrb[0].mxu0 %v2907
    %v3049 = vpop.f32.mrb[0].mxu0
    %v3050 = vadd.f32 %v2941, %v3049
    %v3051 = vpop.f32.mrb[0].mxu0
    %v3052 = vpop.f32.mrb[0].mxu0
    %v3053 = vadd.f32 %v2941, %v3052
    %v3054 = vpop.f32.mrb[0].mxu0
    %3055 = vmatprep.mubr.bf16.mxu0 0
    %3056 = vmatmul.mubr.bf16.gmra.mrb[0].mxu0 %v2908
    %v3057 = vpop.f32.mrb[0].mxu0
    %v3058 = vadd.f32 %v2941, %v3057
    %v3059 = vpop.f32.mrb[0].mxu0
    %v3060 = vpop.f32.mrb[0].mxu0
    %v3061 = vadd.f32 %v2941, %v3060
    %v3062 = vpop.f32.mrb[0].mxu0
    %3063 = vmatprep.mubr.bf16.mxu0 0
    %3064 = vmatmul.mubr.bf16.gmra.mrb[0].mxu0 %v2909
    %v3065 = vpop.f32.mrb[0].mxu0
    %v3066 = vadd.f32 %v2941, %v3065
    %v3067 = vpop.f32.mrb[0].mxu0
    %v3068 = vpop.f32.mrb[0].mxu0
    %v3069 = vadd.f32 %v2941, %v3068
    %v3070 = vpop.f32.mrb[0].mxu0
    %3071 = vmatprep.mubr.bf16.mxu0 0
    %3072 = vmatmul.mubr.bf16.gmra.mrb[0].mxu0 %v2910
    %v3073 = vpop.f32.mrb[0].mxu0
    %v3074 = vadd.f32 %v2941, %v3073
    %v3075 = vpop.f32.mrb[0].mxu0
    %v3076 = vpop.f32.mrb[0].mxu0
    %v3077 = vadd.f32 %v2941, %v3076
    %v3078 = vpop.f32.mrb[0].mxu0
    %3079 = vmatprep.mubr.bf16.mxu0 0
    %3080 = vmatmul.mubr.bf16.gmra.mrb[0].mxu0 %v2911
    %v3081 = vpop.f32.mrb[0].mxu0
    %v3082 = vadd.f32 %v2941, %v3081
    %v3083 = vpop.f32.mrb[0].mxu0
    %v3084 = vpop.f32.mrb[0].mxu0
    %v3085 = vadd.f32 %v2941, %v3084
    %v3086 = vpop.f32.mrb[0].mxu0
    %3087 = vmatprep.mubr.bf16.mxu0 0
    %3088 = vmatmul.mubr.bf16.gmra.mrb[0].mxu0 %v2912
    %v3089 = vpop.f32.mrb[0].mxu0
    %v3090 = vadd.f32 %v2941, %v3089
    %v3091 = vpop.f32.mrb[0].mxu0
    %v3092 = vpop.f32.mrb[0].mxu0
    %v3093 = vadd.f32 %v2941, %v3092
    %v3094 = vpop.f32.mrb[0].mxu0
    %3095 = vmatprep.mubr.bf16.mxu0 0
    %3096 = vmatmul.mubr.bf16.gmra.mrb[0].mxu0 %v2913
    %v3097 = vpop.f32.mrb[0].mxu0
    %v3098 = vadd.f32 %v2941, %v3097
    %v3099 = vpop.f32.mrb[0].mxu0
    %v3100 = vpop.f32.mrb[0].mxu0
    %v3101 = vadd.f32 %v2941, %v3100
    %v3102 = vpop.f32.mrb[0].mxu0
    %3103 = vmatprep.mubr.bf16.mxu0 0
    %3104 = vmatmul.mubr.bf16.gmra.mrb[0].mxu0 %v2914
    %v3105 = vpop.f32.mrb[0].mxu0
    %v3106 = vadd.f32 %v2941, %v3105
    %v3107 = vpop.f32.mrb[0].mxu0
    %v3108 = vpop.f32.mrb[0].mxu0
    %v3109 = vadd.f32 %v2941, %v3108
    %v3110 = vpop.f32.mrb[0].mxu0
    %3111 = vmatprep.mubr.bf16.mxu0 0
    %3112 = vmatmul.mubr.bf16.gmra.mrb[0].mxu0 %v2915
    %v3113 = vpop.f32.mrb[0].mxu0
    %v3114 = vadd.f32 %v2941, %v3113
    %v3115 = vpop.f32.mrb[0].mxu0
    %v3116 = vpop.f32.mrb[0].mxu0
    %v3117 = vadd.f32 %v2941, %v3116
    %v3118 = vpop.f32.mrb[0].mxu0
    %3119 = vmatprep.mubr.bf16.mxu0 0
    %3120 = vmatmul.mubr.bf16.gmra.mrb[0].mxu0 %v2916
    %v3121 = vpop.f32.mrb[0].mxu0
    %v3122 = vadd.f32 %v2941, %v3121
    %v3123 = vpop.f32.mrb[0].mxu0
    %v3124 = vpop.f32.mrb[0].mxu0
    %v3125 = vadd.f32 %v2941, %v3124
    %v3126 = vpop.f32.mrb[0].mxu0
    %3127 = vmatprep.mubr.bf16.mxu0 0
    %3128 = vmatmul.mubr.bf16.gmra.mrb[0].mxu0 %v2917
    %v3129 = vpop.f32.mrb[0].mxu0
    %v3130 = vadd.f32 %v2941, %v3129
    %v3131 = vpop.f32.mrb[0].mxu0
    %v3132 = vpop.f32.mrb[0].mxu0
    %v3133 = vadd.f32 %v2941, %v3132
    %v3134 = vpop.f32.mrb[0].mxu0
    %3135 = vmatprep.mubr.bf16.mxu0 0
    %3136 = vmatmul.mubr.bf16.gmra.mrb[0].mxu0 %v2918
    %v3137 = vpop.f32.mrb[0].mxu0
    %v3138 = vadd.f32 %v2941, %v3137
    %v3139 = vpop.f32.mrb[0].mxu0
    %v3140 = vpop.f32.mrb[0].mxu0
    %v3141 = vadd.f32 %v2941, %v3140
    %v3142 = vpop.f32.mrb[0].mxu0
    %3143 = vmatprep.mubr.bf16.mxu0 0
    %3144 = vmatmul.mubr.bf16.gmra.mrb[0].mxu0 %v2919
    %v3145 = vpop.f32.mrb[0].mxu0
    %v3146 = vadd.f32 %v2941, %v3145
    %v3147 = vpop.f32.mrb[0].mxu0
    %v3148 = vpop.f32.mrb[0].mxu0
    %v3149 = vadd.f32 %v2941, %v3148
    %v3150 = vpop.f32.mrb[0].mxu0
    %3151 = vdwg.mxu0
    %3152 = vst [vmem:[#allocation16] sm:$0xff] %v3026
    %3153 = vst [vmem:[#allocation16 + $0x8] sm:$0xff] %v3029
    %3154 = vst [vmem:[#allocation16 + $0x10] sm:$0xff] %v3034
    %3155 = vst [vmem:[#allocation16 + $0x18] sm:$0xff] %v3037
    %3156 = vst [vmem:[#allocation16 + $0x20] sm:$0xff] %v3042
    %3157 = vst [vmem:[#allocation16 + $0x28] sm:$0xff] %v3045
    %3158 = vst [vmem:[#allocation16 + $0x30] sm:$0xff] %v3050
    %3159 = vst [vmem:[#allocation16 + $0x38] sm:$0xff] %v3053
    %3160 = vst [vmem:[#allocation16 + $0x40] sm:$0xff] %v3058
    %3161 = vst [vmem:[#allocation16 + $0x48] sm:$0xff] %v3061
    %3162 = vst [vmem:[#allocation16 + $0x50] sm:$0xff] %v3066
    %3163 = vst [vmem:[#allocation16 + $0x58] sm:$0xff] %v3069
    %3164 = vst [vmem:[#allocation16 + $0x60] sm:$0xff] %v3074
    %3165 = vst [vmem:[#allocation16 + $0x68] sm:$0xff] %v3077
    %3166 = vst [vmem:[#allocation16 + $0x70] sm:$0xff] %v3082
    %3167 = vst [vmem:[#allocation16 + $0x78] sm:$0xff] %v3085
    %3168 = vst [vmem:[#allocation16 + $0x80] sm:$0xff] %v3090
    %3169 = vst [vmem:[#allocation16 + $0x88] sm:$0xff] %v3093
    %3170 = vst [vmem:[#allocation16 + $0x90] sm:$0xff] %v3098
    %3171 = vst [vmem:[#allocation16 + $0x98] sm:$0xff] %v3101
    %3172 = vst [vmem:[#allocation16 + $0xa0] sm:$0xff] %v3106
    %3173 = vst [vmem:[#allocation16 + $0xa8] sm:$0xff] %v3109
    %3174 = vst [vmem:[#allocation16 + $0xb0] sm:$0xff] %v3114
    %3175 = vst [vmem:[#allocation16 + $0xb8] sm:$0xff] %v3117
    %3176 = vst [vmem:[#allocation16 + $0xc0] sm:$0xff] %v3122
    %3177 = vst [vmem:[#allocation16 + $0xc8] sm:$0xff] %v3125
    %3178 = vst [vmem:[#allocation16 + $0xd0] sm:$0xff] %v3130
    %3179 = vst [vmem:[#allocation16 + $0xd8] sm:$0xff] %v3133
    %3180 = vst [vmem:[#allocation16 + $0xe0] sm:$0xff] %v3138
    %3181 = vst [vmem:[#allocation16 + $0xe8] sm:$0xff] %v3141
    %3182 = vst [vmem:[#allocation16 + $0xf0] sm:$0xff] %v3146
    %3183 = vst [vmem:[#allocation16 + $0xf8] sm:$0xff] %v3149
    // Predicated region
    $region110: #{tpu_custom_call.1} parent=1 // pred_check
      _
    $region111: #{tpu_custom_call.1} parent=1 // pred_check_branch
      %3185 = sbr.rel (0) target = $region113
    $region112: #{tpu_custom_call.1} parent=1 // pred_region
      %s3187 = ssub.s32 4096, 4096
      %3188 = vsyncadd [#allocation4], %s3187
      %s3189 = sshll.u32 [#allocation16], 4
      %s3190 = int_to_ptr.vmem [resolvable:$true] %s3189
      %3195 = dma.vmem_to_hbm [thread:$0]  %s3190, 4096, %s19, [#allocation4], 128, 128, 8
    $region113: #{tpu_custom_call.1} parent=1 // pred_fallthru
      _
    // Predicated region
    $region114: #{tpu_custom_call.1} parent=1 // pred_check
      _
    $region115: #{tpu_custom_call.1} parent=1 // pred_check_branch
      %3197 = sbr.rel (0) target = $region117
    $region116: #{tpu_custom_call.1} parent=1 // pred_region
      %3198 = dma.done [#allocation4], 4096
    $region117: #{tpu_custom_call.1} parent=1 // pred_fallthru
      _
    %3199 = vsyncpa [#allocation3], 1
    %3200 = vsyncpa [#allocation6], 1
    %3201 = vsyncpa [#allocation9], 1
    %3202 = vsyncpa [#allocation12], 1
    %3203 = vsyncpa [#allocation15], 1
    %3204 = vsyncpa [#allocation4], 1

</llo_original>
